<compile_context>
chip_gen: v6e
topology: v6e:2x2x1
jax: 0.10.0
libtpu: 0.0.40
codegen_flags: <defaults>
</compile_context>

<pallas_src>
import jax
import jax.numpy as jnp
from jax.experimental import pallas as pl
from jax.experimental.pallas import tpu as pltpu

# ------------------------- scaled-down model dims ---------------------------
BZ = 2                                  # perf note: bz >= 8 (ideally >=128)
F_C, F_H, F_W = 2, 16, 16               # CNN-branch input, NCHW
KH = KW = 3
C_OUT = 8
H_OUT, W_OUT = F_H - KH + 1, F_W - KW + 1       # 14, 14
NPIX = H_OUT * W_OUT                            # 196
K_IM2COL = KH * KW * F_C                        # 18
FEAT_DIM = C_OUT * NPIX                         # 1568 (channel-major flatten)
BC_DIM = 2                                      # branch2 in_features
X_H, X_W, X_C = 16, 16, 2                       # trunk grid; module: 195x610x2
TRUNK_IN = X_H * X_W * X_C                      # 512
HIDDEN = 128                                    # module: 512
OUT_ROWS = 12                                   # module: 162
OUT_DIM = OUT_ROWS * HIDDEN                     # 1536

# Tile sizes.  TN: v5e/v6e can use 4096-8192 at real dims (128 MiB VMEM);
# v7x should stay around 2048-4096 (64 MiB VMEM).  512 is safe everywhere
# and above the ~512-wide threshold where per-step overhead stops mattering.
TK = 256            # trunk reduction tile
TN = 512            # output-linear N tile
assert TRUNK_IN % TK == 0 and TK % 8 == 0 and (TK % 128 == 0 or TK == TRUNK_IN)
assert OUT_DIM % TN == 0 and TN % 128 == 0


# ------------------------------ Pallas kernels ------------------------------
def head_kernel(patches_ref, wc_ref, cb_ref, w1r_ref, b1_ref,
                fbc_ref, w2_ref, b2_ref,
                xk_ref, wtk_ref, bt_ref,
                act_ref, ytr_acc):
    """act = [ (conv-branch1 linear) * (branch2 linear) | trunk linear ].

    Grid axis 0 tiles the trunk reduction dimension (K).  The tiny branch1 /
    branch2 work runs once under pl.when(k == 0); the trunk matmul accumulates
    into a VMEM scratch and is finalized on the last K step.
    """
    k = pl.program_id(0)
    nk = pl.num_programs(0)
    h = ytr_acc.shape[1]                       # HIDDEN

    @pl.when(k == 0)
    def _init():
        ytr_acc[...] = jnp.zeros_like(ytr_acc)

        # ---- branch2: f_bc @ W2 + b2 ----
        y_br2 = jnp.dot(fbc_ref[...], w2_ref[...],
                        preferred_element_type=jnp.float32) + b2_ref[...]

        # ---- branch1 (fused conv + ReLU + flatten + linear), per batch ----
        for b in range(patches_ref.shape[0]):          # static unroll
            # conv as matmul: (C_OUT, K_IM2COL) @ (K_IM2COL, NPIX)
            rt = jnp.dot(wc_ref[...], patches_ref[b],
                         preferred_element_type=jnp.float32) + cb_ref[...]
            rt = jnp.maximum(rt, 0.0)                  # (C_OUT, NPIX)
            # flatten+linear: sum_c rt[c, :] @ W1r[c]  (avoids in-kernel reshape)
            y1 = b1_ref[...]                           # (1, HIDDEN)
            for c in range(w1r_ref.shape[0]):          # static unroll (8)
                y1 = y1 + jnp.dot(rt[c:c + 1, :], w1r_ref[c],
                                  preferred_element_type=jnp.float32)
            act_ref[b:b + 1, :h] = y1 * y_br2[b:b + 1, :]

    # ---- trunk: K-tiled accumulate (bf16 weight stream, f32 math) ----
    ytr_acc[...] += jnp.dot(xk_ref[...], wtk_ref[...].astype(jnp.float32),
                            preferred_element_type=jnp.float32)

    @pl.when(k == nk - 1)
    def _finalize():
        act_ref[:, h:] = ytr_acc[...] + bt_ref[...]


def out_kernel(act_ref, wo_ref, bo_ref, o_ref):
    """One N-tile of: out = [y_br | y_tr] @ Wo + bo (single fused dot)."""
    o_ref[...] = (jnp.dot(act_ref[...], wo_ref[...].astype(jnp.float32),
                          preferred_element_type=jnp.float32)
                  + bo_ref[...])


# ------------------------------ JAX wrapper ---------------------------------
def opnn_forward(params, f, f_bc, x):
    bz = f.shape[0]
    f32 = jnp.float32

    # --- im2col (pure layout plumbing, plain XLA) -> (B, K_IM2COL, NPIX) ---
    f_nhwc = jnp.transpose(f, (0, 2, 3, 1)).astype(f32)
    patches = jnp.stack(
        [f_nhwc[:, kh:kh + H_OUT, kw:kw + W_OUT, :]
         for kh in range(KH) for kw in range(KW)], axis=3)       # (B,Ho,Wo,KHKW,Cin)
    patches = patches.reshape(bz, NPIX, K_IM2COL)
    patches_t = jnp.transpose(patches, (0, 2, 1))                # (B, K_IM2COL, NPIX)

    # --- weight prep (transposes / reshapes are free wrapper-side) ---
    wc_t = params["conv_w"].transpose(0, 2, 3, 1).reshape(C_OUT, K_IM2COL)
    cb = params["conv_b"].reshape(C_OUT, 1)
    w1r = params["br1_w"].T.reshape(C_OUT, NPIX, HIDDEN)         # channel-major flatten
    b1 = params["br1_b"].reshape(1, HIDDEN)
    w2 = params["br2_w"].T                                       # (2, HIDDEN)
    b2 = params["br2_b"].reshape(1, HIDDEN)
    x_flat = x.reshape(bz, -1).astype(f32)
    wt = params["tr_w"].T.astype(jnp.bfloat16)                   # (TRUNK_IN, HIDDEN)
    bt = params["tr_b"].reshape(1, HIDDEN)
    wo = params["out_w"].T.astype(jnp.bfloat16)                  # (2*HIDDEN, OUT_DIM)
    bo = params["out_b"].reshape(1, OUT_DIM)

    # --- kernel 1: fused head (branch1 * branch2 | K-tiled trunk) ---
    nk = TRUNK_IN // TK
    act = pl.pallas_call(
        head_kernel,
        out_shape=jax.ShapeDtypeStruct((bz, 2 * HIDDEN), f32),
        grid_spec=pltpu.PrefetchScalarGridSpec(
            num_scalar_prefetch=0,
            grid=(nk,),
            in_specs=[
                pl.BlockSpec((bz, K_IM2COL, NPIX), lambda k: (0, 0, 0)),
                pl.BlockSpec((C_OUT, K_IM2COL), lambda k: (0, 0)),
                pl.BlockSpec((C_OUT, 1), lambda k: (0, 0)),
                pl.BlockSpec((C_OUT, NPIX, HIDDEN), lambda k: (0, 0, 0)),
                pl.BlockSpec((1, HIDDEN), lambda k: (0, 0)),
                pl.BlockSpec((bz, BC_DIM), lambda k: (0, 0)),
                pl.BlockSpec((BC_DIM, HIDDEN), lambda k: (0, 0)),
                pl.BlockSpec((1, HIDDEN), lambda k: (0, 0)),
                pl.BlockSpec((bz, TK), lambda k: (0, k)),        # x_flat K-tile
                pl.BlockSpec((TK, HIDDEN), lambda k: (k, 0)),    # wt K-tile (bf16)
                pl.BlockSpec((1, HIDDEN), lambda k: (0, 0)),
            ],
            out_specs=pl.BlockSpec((bz, 2 * HIDDEN), lambda k: (0, 0)),
            scratch_shapes=[pltpu.VMEM((bz, HIDDEN), f32)],
        ),
        compiler_params=pltpu.CompilerParams(
            dimension_semantics=("arbitrary",)),
    )(patches_t, wc_t, cb, w1r, b1, f_bc.astype(f32), w2, b2, x_flat, wt, bt)

    # --- kernel 2: output linear, N-tiled weight streaming ---
    nt = OUT_DIM // TN
    cost = pl.CostEstimate(
        flops=2 * bz * (2 * HIDDEN) * OUT_DIM,
        transcendentals=0,
        bytes_accessed=(2 * HIDDEN * OUT_DIM * 2      # wo (bf16)
                        + OUT_DIM * 4                 # bo
                        + bz * 2 * HIDDEN * 4         # act
                        + bz * OUT_DIM * 4))          # out
    y = pl.pallas_call(
        out_kernel,
        out_shape=jax.ShapeDtypeStruct((bz, OUT_DIM), f32),
        grid_spec=pltpu.PrefetchScalarGridSpec(
            num_scalar_prefetch=0,
            grid=(nt,),
            in_specs=[
                pl.BlockSpec((bz, 2 * HIDDEN), lambda j: (0, 0)),   # act (resident)
                pl.BlockSpec((2 * HIDDEN, TN), lambda j: (0, j)),   # wo tile (bf16)
                pl.BlockSpec((1, TN), lambda j: (0, j)),            # bias tile
            ],
            out_specs=pl.BlockSpec((bz, TN), lambda j: (0, j)),
        ),
        compiler_params=pltpu.CompilerParams(
            dimension_semantics=("parallel",),        # tiles independent -> v7x 2-TC
            vmem_limit_bytes=48 * 1024 * 1024),       # headroom for larger TN
        cost_estimate=cost,
    )(act, wo, bo)

    return y.reshape(bz, OUT_ROWS, HIDDEN)


# --------------------------- pure-jnp reference ------------------------------
def ref_forward(params, f, f_bc, x):
    f32 = jnp.float32
    f_nhwc = jnp.transpose(f, (0, 2, 3, 1)).astype(f32)
    patches = jnp.stack(
        [f_nhwc[:, kh:kh + H_OUT, kw:kw + W_OUT, :]
         for kh in range(KH) for kw in range(KW)], axis=3)
    pat = patches.reshape(f.shape[0], NPIX, K_IM2COL)
    wc = params["conv_w"].transpose(0, 2, 3, 1).reshape(C_OUT, K_IM2COL)
    r = jnp.maximum(jnp.einsum("bpk,ck->bcp", pat, wc)
                    + params["conv_b"][None, :, None], 0.0)
    feat = r.reshape(f.shape[0], FEAT_DIM)
    y_br1 = feat @ params["br1_w"].T + params["br1_b"]
    y_br2 = f_bc.astype(f32) @ params["br2_w"].T + params["br2_b"]
    y_br = y_br1 * y_br2
    x_flat = x.reshape(f.shape[0], -1).astype(f32)
    wt = params["tr_w"].T.astype(jnp.bfloat16).astype(f32)   # same bf16 rounding
    y_tr = x_flat @ wt + params["tr_b"]
    yo = jnp.concatenate([y_br, y_tr], axis=1)
    wo = params["out_w"].T.astype(jnp.bfloat16).astype(f32)
    y = yo @ wo + params["out_b"]
    return y.reshape(f.shape[0], OUT_ROWS, HIDDEN)


# --------------------------- deterministic params ---------------------------
def init_params(key):
    ks = jax.random.split(key, 10)

    def unif(k, shape, fan_in):
        bound = 1.0 / jnp.sqrt(jnp.float32(fan_in))
        return jax.random.uniform(k, shape, jnp.float32, -bound, bound)

    return {
        "conv_w": unif(ks[0], (C_OUT, F_C, KH, KW), F_C * KH * KW),   # OIHW
        "conv_b": unif(ks[1], (C_OUT,), F_C * KH * KW),
        "br1_w":  unif(ks[2], (HIDDEN, FEAT_DIM), FEAT_DIM),          # (out, in)
        "br1_b":  unif(ks[3], (HIDDEN,), FEAT_DIM),
        "br2_w":  unif(ks[4], (HIDDEN, BC_DIM), BC_DIM),
        "br2_b":  unif(ks[5], (HIDDEN,), BC_DIM),
        "tr_w":   unif(ks[6], (HIDDEN, TRUNK_IN), TRUNK_IN),
        "tr_b":   unif(ks[7], (HIDDEN,), TRUNK_IN),
        "out_w":  unif(ks[8], (OUT_DIM, 2 * HIDDEN), 2 * HIDDEN),
        "out_b":  unif(ks[9], (OUT_DIM,), 2 * HIDDEN),
    }


if __name__ == "__main__":
    key = jax.random.PRNGKey(0)
    kp, kf, kbc, kx = jax.random.split(key, 4)
    params = init_params(kp)
    f = jax.random.normal(kf, (BZ, F_C, F_H, F_W), jnp.float32)     # NCHW
    f_bc = jax.random.normal(kbc, (BZ, BC_DIM), jnp.float32)
    x = jax.random.normal(kx, (BZ, X_H, X_W, X_C), jnp.float32)

    y = jax.jit(opnn_forward)(params, f, f_bc, x)
    jax.block_until_ready(y)
    assert y.shape == (BZ, OUT_ROWS, HIDDEN), y.shape
    assert bool(jnp.all(jnp.isfinite(y)))

    y_ref = ref_forward(params, f, f_bc, x)
    assert bool(jnp.allclose(y, y_ref, rtol=1e-2, atol=1e-2)), \
        float(jnp.max(jnp.abs(y - y_ref)))
    print("KERNEL_OK")
</pallas_src>

<mosaic_0001>
module attributes {stable_mosaic.version = 11 : i64} {
  func.func @head_kernel(%arg0: i32, %arg1: memref<2x18x196xf32, #tpu.memory_space<vmem>>, %arg2: memref<8x18xf32, #tpu.memory_space<vmem>>, %arg3: memref<8x1xf32, #tpu.memory_space<vmem>>, %arg4: memref<8x196x128xf32, #tpu.memory_space<vmem>>, %arg5: memref<1x128xf32, #tpu.memory_space<vmem>>, %arg6: memref<2x2xf32, #tpu.memory_space<vmem>>, %arg7: memref<2x128xf32, #tpu.memory_space<vmem>>, %arg8: memref<1x128xf32, #tpu.memory_space<vmem>>, %arg9: memref<2x256xf32, #tpu.memory_space<vmem>>, %arg10: memref<256x128xbf16, #tpu.memory_space<vmem>>, %arg11: memref<1x128xf32, #tpu.memory_space<vmem>>, %arg12: memref<2x256xf32, #tpu.memory_space<vmem>>, %arg13: memref<2x128xf32, #tpu.memory_space<vmem>>) attributes {dimension_semantics = [#tpu.dimension_semantics<arbitrary>], iteration_bounds = array<i64: 2>, scalar_prefetch = 0 : i64, scratch_operands = 1 : i64, tpu.core_type = #tpu.core_type<tc>, window_params = [{pipeline_mode = #tpu.pipeline_mode<synchronous>, transform_indices = @transform_0, window_bounds = array<i64: 2, 18, 196>}, {pipeline_mode = #tpu.pipeline_mode<synchronous>, transform_indices = @transform_1, window_bounds = array<i64: 8, 18>}, {pipeline_mode = #tpu.pipeline_mode<synchronous>, transform_indices = @transform_2, window_bounds = array<i64: 8, 1>}, {pipeline_mode = #tpu.pipeline_mode<synchronous>, transform_indices = @transform_3, window_bounds = array<i64: 8, 196, 128>}, {pipeline_mode = #tpu.pipeline_mode<synchronous>, transform_indices = @transform_4, window_bounds = array<i64: 1, 128>}, {pipeline_mode = #tpu.pipeline_mode<synchronous>, transform_indices = @transform_5, window_bounds = array<i64: 2, 2>}, {pipeline_mode = #tpu.pipeline_mode<synchronous>, transform_indices = @transform_6, window_bounds = array<i64: 2, 128>}, {pipeline_mode = #tpu.pipeline_mode<synchronous>, transform_indices = @transform_7, window_bounds = array<i64: 1, 128>}, {transform_indices = @transform_8, window_bounds = array<i64: 2, 256>}, {transform_indices = @transform_9, window_bounds = array<i64: 256, 128>}, {pipeline_mode = #tpu.pipeline_mode<synchronous>, transform_indices = @transform_10, window_bounds = array<i64: 1, 128>}, {pipeline_mode = #tpu.pipeline_mode<synchronous>, transform_indices = @transform_11, window_bounds = array<i64: 2, 256>}]} {
    %c0_i32 = arith.constant 0 : i32
    %0 = arith.cmpi eq, %arg0, %c0_i32 : i32
    %1 = arith.extui %0 : i1 to i32
    %c0_i32_0 = arith.constant 0 : i32
    %2 = arith.cmpi ne, %1, %c0_i32_0 : i32
    scf.if %2 {
      %cst_9 = arith.constant 0.000000e+00 : f32
      %13 = vector.broadcast %cst_9 : f32 to vector<2x128xf32>
      %c0_10 = arith.constant 0 : index
      %c0_11 = arith.constant 0 : index
      %14 = vector.load %arg13[%c0_10, %c0_11] : memref<2x128xf32, #tpu.memory_space<vmem>>, vector<2x128xf32>
      tpu.vector_store %arg13[%c0_10, %c0_11], %13 {strides = array<i32>} : memref<2x128xf32, #tpu.memory_space<vmem>>, vector<2x128xf32>,
      %c0_12 = arith.constant 0 : index
      %c0_13 = arith.constant 0 : index
      %15 = vector.load %arg6[%c0_12, %c0_13] : memref<2x2xf32, #tpu.memory_space<vmem>>, vector<2x2xf32>
      %c0_14 = arith.constant 0 : index
      %c0_15 = arith.constant 0 : index
      %16 = vector.load %arg7[%c0_14, %c0_15] : memref<2x128xf32, #tpu.memory_space<vmem>>, vector<2x128xf32>
      %cst_16 = arith.constant dense<0.000000e+00> : vector<2x128xf32>
      %17 = tpu.matmul %15, %16, %cst_16 {dimension_numbers = #tpu.dot_dimension_numbers<[1], [0], [0], [1], [0, 0, 1, 1], [], []>} : vector<2x2xf32>, vector<2x128xf32>, vector<2x128xf32> -> vector<2x128xf32>
      %c0_17 = arith.constant 0 : index
      %c0_18 = arith.constant 0 : index
      %18 = vector.load %arg8[%c0_17, %c0_18] : memref<1x128xf32, #tpu.memory_space<vmem>>, vector<1x128xf32>
      %19 = vector.broadcast %18 : vector<1x128xf32> to vector<2x128xf32>
      %20 = arith.addf %17, %19 : vector<2x128xf32>
      %c0_19 = arith.constant 0 : index
      %c0_20 = arith.constant 0 : index
      %21 = vector.load %arg2[%c0_19, %c0_20] : memref<8x18xf32, #tpu.memory_space<vmem>>, vector<8x18xf32>
      %c0_21 = arith.constant 0 : index
      %c0_22 = arith.constant 0 : index
      %c0_23 = arith.constant 0 : index
      %22 = vector.load %arg1[%c0_21, %c0_22, %c0_23] : memref<2x18x196xf32, #tpu.memory_space<vmem>>, vector<1x18x196xf32>
      %23 = vector.shape_cast %22 : vector<1x18x196xf32> to vector<18x196xf32>
      %cst_24 = arith.constant dense<0.000000e+00> : vector<8x196xf32>
      %24 = tpu.matmul %21, %23, %cst_24 {dimension_numbers = #tpu.dot_dimension_numbers<[1], [0], [0], [1], [0, 0, 1, 1], [], []>} : vector<8x18xf32>, vector<18x196xf32>, vector<8x196xf32> -> vector<8x196xf32>
      %c0_25 = arith.constant 0 : index
      %c0_26 = arith.constant 0 : index
      %25 = vector.load %arg3[%c0_25, %c0_26] : memref<8x1xf32, #tpu.memory_space<vmem>>, vector<8x1xf32>
      %26 = vector.broadcast %25 : vector<8x1xf32> to vector<8x196xf32>
      %27 = arith.addf %24, %26 : vector<8x196xf32>
      %cst_27 = arith.constant 0.000000e+00 : f32
      %28 = vector.broadcast %cst_27 : f32 to vector<8x196xf32>
      %29 = arith.maximumf %27, %28 : vector<8x196xf32>
      %c0_28 = arith.constant 0 : index
      %c0_29 = arith.constant 0 : index
      %30 = vector.load %arg5[%c0_28, %c0_29] : memref<1x128xf32, #tpu.memory_space<vmem>>, vector<1x128xf32>
      %31 = vector.extract_strided_slice %29 {offsets = [0, 0], sizes = [1, 196], strides = [1, 1]} : vector<8x196xf32> to vector<1x196xf32>
      %c0_30 = arith.constant 0 : index
      %c0_31 = arith.constant 0 : index
      %c0_32 = arith.constant 0 : index
      %32 = vector.load %arg4[%c0_30, %c0_31, %c0_32] : memref<8x196x128xf32, #tpu.memory_space<vmem>>, vector<1x196x128xf32>
      %33 = vector.shape_cast %32 : vector<1x196x128xf32> to vector<196x128xf32>
      %cst_33 = arith.constant dense<0.000000e+00> : vector<1x128xf32>
      %34 = tpu.matmul %31, %33, %cst_33 {dimension_numbers = #tpu.dot_dimension_numbers<[1], [0], [0], [1], [0, 0, 1, 1], [], []>} : vector<1x196xf32>, vector<196x128xf32>, vector<1x128xf32> -> vector<1x128xf32>
      %35 = arith.addf %30, %34 : vector<1x128xf32>
      %36 = vector.extract_strided_slice %29 {offsets = [1, 0], sizes = [1, 196], strides = [1, 1]} : vector<8x196xf32> to vector<1x196xf32>
      %c1 = arith.constant 1 : index
      %c0_34 = arith.constant 0 : index
      %c0_35 = arith.constant 0 : index
      %37 = vector.load %arg4[%c1, %c0_34, %c0_35] : memref<8x196x128xf32, #tpu.memory_space<vmem>>, vector<1x196x128xf32>
      %38 = vector.shape_cast %37 : vector<1x196x128xf32> to vector<196x128xf32>
      %cst_36 = arith.constant dense<0.000000e+00> : vector<1x128xf32>
      %39 = tpu.matmul %36, %38, %cst_36 {dimension_numbers = #tpu.dot_dimension_numbers<[1], [0], [0], [1], [0, 0, 1, 1], [], []>} : vector<1x196xf32>, vector<196x128xf32>, vector<1x128xf32> -> vector<1x128xf32>
      %40 = arith.addf %35, %39 : vector<1x128xf32>
      %41 = vector.extract_strided_slice %29 {offsets = [2, 0], sizes = [1, 196], strides = [1, 1]} : vector<8x196xf32> to vector<1x196xf32>
      %c2 = arith.constant 2 : index
      %c0_37 = arith.constant 0 : index
      %c0_38 = arith.constant 0 : index
      %42 = vector.load %arg4[%c2, %c0_37, %c0_38] : memref<8x196x128xf32, #tpu.memory_space<vmem>>, vector<1x196x128xf32>
      %43 = vector.shape_cast %42 : vector<1x196x128xf32> to vector<196x128xf32>
      %cst_39 = arith.constant dense<0.000000e+00> : vector<1x128xf32>
      %44 = tpu.matmul %41, %43, %cst_39 {dimension_numbers = #tpu.dot_dimension_numbers<[1], [0], [0], [1], [0, 0, 1, 1], [], []>} : vector<1x196xf32>, vector<196x128xf32>, vector<1x128xf32> -> vector<1x128xf32>
      %45 = arith.addf %40, %44 : vector<1x128xf32>
      %46 = vector.extract_strided_slice %29 {offsets = [3, 0], sizes = [1, 196], strides = [1, 1]} : vector<8x196xf32> to vector<1x196xf32>
      %c3 = arith.constant 3 : index
      %c0_40 = arith.constant 0 : index
      %c0_41 = arith.constant 0 : index
      %47 = vector.load %arg4[%c3, %c0_40, %c0_41] : memref<8x196x128xf32, #tpu.memory_space<vmem>>, vector<1x196x128xf32>
      %48 = vector.shape_cast %47 : vector<1x196x128xf32> to vector<196x128xf32>
      %cst_42 = arith.constant dense<0.000000e+00> : vector<1x128xf32>
      %49 = tpu.matmul %46, %48, %cst_42 {dimension_numbers = #tpu.dot_dimension_numbers<[1], [0], [0], [1], [0, 0, 1, 1], [], []>} : vector<1x196xf32>, vector<196x128xf32>, vector<1x128xf32> -> vector<1x128xf32>
      %50 = arith.addf %45, %49 : vector<1x128xf32>
      %51 = vector.extract_strided_slice %29 {offsets = [4, 0], sizes = [1, 196], strides = [1, 1]} : vector<8x196xf32> to vector<1x196xf32>
      %c4 = arith.constant 4 : index
      %c0_43 = arith.constant 0 : index
      %c0_44 = arith.constant 0 : index
      %52 = vector.load %arg4[%c4, %c0_43, %c0_44] : memref<8x196x128xf32, #tpu.memory_space<vmem>>, vector<1x196x128xf32>
      %53 = vector.shape_cast %52 : vector<1x196x128xf32> to vector<196x128xf32>
      %cst_45 = arith.constant dense<0.000000e+00> : vector<1x128xf32>
      %54 = tpu.matmul %51, %53, %cst_45 {dimension_numbers = #tpu.dot_dimension_numbers<[1], [0], [0], [1], [0, 0, 1, 1], [], []>} : vector<1x196xf32>, vector<196x128xf32>, vector<1x128xf32> -> vector<1x128xf32>
      %55 = arith.addf %50, %54 : vector<1x128xf32>
      %56 = vector.extract_strided_slice %29 {offsets = [5, 0], sizes = [1, 196], strides = [1, 1]} : vector<8x196xf32> to vector<1x196xf32>
      %c5 = arith.constant 5 : index
      %c0_46 = arith.constant 0 : index
      %c0_47 = arith.constant 0 : index
      %57 = vector.load %arg4[%c5, %c0_46, %c0_47] : memref<8x196x128xf32, #tpu.memory_space<vmem>>, vector<1x196x128xf32>
      %58 = vector.shape_cast %57 : vector<1x196x128xf32> to vector<196x128xf32>
      %cst_48 = arith.constant dense<0.000000e+00> : vector<1x128xf32>
      %59 = tpu.matmul %56, %58, %cst_48 {dimension_numbers = #tpu.dot_dimension_numbers<[1], [0], [0], [1], [0, 0, 1, 1], [], []>} : vector<1x196xf32>, vector<196x128xf32>, vector<1x128xf32> -> vector<1x128xf32>
      %60 = arith.addf %55, %59 : vector<1x128xf32>
      %61 = vector.extract_strided_slice %29 {offsets = [6, 0], sizes = [1, 196], strides = [1, 1]} : vector<8x196xf32> to vector<1x196xf32>
      %c6 = arith.constant 6 : index
      %c0_49 = arith.constant 0 : index
      %c0_50 = arith.constant 0 : index
      %62 = vector.load %arg4[%c6, %c0_49, %c0_50] : memref<8x196x128xf32, #tpu.memory_space<vmem>>, vector<1x196x128xf32>
      %63 = vector.shape_cast %62 : vector<1x196x128xf32> to vector<196x128xf32>
      %cst_51 = arith.constant dense<0.000000e+00> : vector<1x128xf32>
      %64 = tpu.matmul %61, %63, %cst_51 {dimension_numbers = #tpu.dot_dimension_numbers<[1], [0], [0], [1], [0, 0, 1, 1], [], []>} : vector<1x196xf32>, vector<196x128xf32>, vector<1x128xf32> -> vector<1x128xf32>
      %65 = arith.addf %60, %64 : vector<1x128xf32>
      %66 = vector.extract_strided_slice %29 {offsets = [7, 0], sizes = [1, 196], strides = [1, 1]} : vector<8x196xf32> to vector<1x196xf32>
      %c7 = arith.constant 7 : index
      %c0_52 = arith.constant 0 : index
      %c0_53 = arith.constant 0 : index
      %67 = vector.load %arg4[%c7, %c0_52, %c0_53] : memref<8x196x128xf32, #tpu.memory_space<vmem>>, vector<1x196x128xf32>
      %68 = vector.shape_cast %67 : vector<1x196x128xf32> to vector<196x128xf32>
      %cst_54 = arith.constant dense<0.000000e+00> : vector<1x128xf32>
      %69 = tpu.matmul %66, %68, %cst_54 {dimension_numbers = #tpu.dot_dimension_numbers<[1], [0], [0], [1], [0, 0, 1, 1], [], []>} : vector<1x196xf32>, vector<196x128xf32>, vector<1x128xf32> -> vector<1x128xf32>
      %70 = arith.addf %65, %69 : vector<1x128xf32>
      %71 = vector.extract_strided_slice %20 {offsets = [0, 0], sizes = [1, 128], strides = [1, 1]} : vector<2x128xf32> to vector<1x128xf32>
      %72 = arith.mulf %70, %71 : vector<1x128xf32>
      %c0_55 = arith.constant 0 : index
      %c0_56 = arith.constant 0 : index
      %73 = vector.load %arg12[%c0_55, %c0_56] : memref<2x256xf32, #tpu.memory_space<vmem>>, vector<1x128xf32>
      tpu.vector_store %arg12[%c0_55, %c0_56], %72 {strides = array<i32>} : memref<2x256xf32, #tpu.memory_space<vmem>>, vector<1x128xf32>,
      %c0_57 = arith.constant 0 : index
      %c0_58 = arith.constant 0 : index
      %74 = vector.load %arg2[%c0_57, %c0_58] : memref<8x18xf32, #tpu.memory_space<vmem>>, vector<8x18xf32>
      %c1_59 = arith.constant 1 : index
      %c0_60 = arith.constant 0 : index
      %c0_61 = arith.constant 0 : index
      %75 = vector.load %arg1[%c1_59, %c0_60, %c0_61] : memref<2x18x196xf32, #tpu.memory_space<vmem>>, vector<1x18x196xf32>
      %76 = vector.shape_cast %75 : vector<1x18x196xf32> to vector<18x196xf32>
      %cst_62 = arith.constant dense<0.000000e+00> : vector<8x196xf32>
      %77 = tpu.matmul %74, %76, %cst_62 {dimension_numbers = #tpu.dot_dimension_numbers<[1], [0], [0], [1], [0, 0, 1, 1], [], []>} : vector<8x18xf32>, vector<18x196xf32>, vector<8x196xf32> -> vector<8x196xf32>
      %c0_63 = arith.constant 0 : index
      %c0_64 = arith.constant 0 : index
      %78 = vector.load %arg3[%c0_63, %c0_64] : memref<8x1xf32, #tpu.memory_space<vmem>>, vector<8x1xf32>
      %79 = vector.broadcast %78 : vector<8x1xf32> to vector<8x196xf32>
      %80 = arith.addf %77, %79 : vector<8x196xf32>
      %cst_65 = arith.constant 0.000000e+00 : f32
      %81 = vector.broadcast %cst_65 : f32 to vector<8x196xf32>
      %82 = arith.maximumf %80, %81 : vector<8x196xf32>
      %c0_66 = arith.constant 0 : index
      %c0_67 = arith.constant 0 : index
      %83 = vector.load %arg5[%c0_66, %c0_67] : memref<1x128xf32, #tpu.memory_space<vmem>>, vector<1x128xf32>
      %84 = vector.extract_strided_slice %82 {offsets = [0, 0], sizes = [1, 196], strides = [1, 1]} : vector<8x196xf32> to vector<1x196xf32>
      %c0_68 = arith.constant 0 : index
      %c0_69 = arith.constant 0 : index
      %c0_70 = arith.constant 0 : index
      %85 = vector.load %arg4[%c0_68, %c0_69, %c0_70] : memref<8x196x128xf32, #tpu.memory_space<vmem>>, vector<1x196x128xf32>
      %86 = vector.shape_cast %85 : vector<1x196x128xf32> to vector<196x128xf32>
      %cst_71 = arith.constant dense<0.000000e+00> : vector<1x128xf32>
      %87 = tpu.matmul %84, %86, %cst_71 {dimension_numbers = #tpu.dot_dimension_numbers<[1], [0], [0], [1], [0, 0, 1, 1], [], []>} : vector<1x196xf32>, vector<196x128xf32>, vector<1x128xf32> -> vector<1x128xf32>
      %88 = arith.addf %83, %87 : vector<1x128xf32>
      %89 = vector.extract_strided_slice %82 {offsets = [1, 0], sizes = [1, 196], strides = [1, 1]} : vector<8x196xf32> to vector<1x196xf32>
      %c1_72 = arith.constant 1 : index
      %c0_73 = arith.constant 0 : index
      %c0_74 = arith.constant 0 : index
      %90 = vector.load %arg4[%c1_72, %c0_73, %c0_74] : memref<8x196x128xf32, #tpu.memory_space<vmem>>, vector<1x196x128xf32>
      %91 = vector.shape_cast %90 : vector<1x196x128xf32> to vector<196x128xf32>
      %cst_75 = arith.constant dense<0.000000e+00> : vector<1x128xf32>
      %92 = tpu.matmul %89, %91, %cst_75 {dimension_numbers = #tpu.dot_dimension_numbers<[1], [0], [0], [1], [0, 0, 1, 1], [], []>} : vector<1x196xf32>, vector<196x128xf32>, vector<1x128xf32> -> vector<1x128xf32>
      %93 = arith.addf %88, %92 : vector<1x128xf32>
      %94 = vector.extract_strided_slice %82 {offsets = [2, 0], sizes = [1, 196], strides = [1, 1]} : vector<8x196xf32> to vector<1x196xf32>
      %c2_76 = arith.constant 2 : index
      %c0_77 = arith.constant 0 : index
      %c0_78 = arith.constant 0 : index
      %95 = vector.load %arg4[%c2_76, %c0_77, %c0_78] : memref<8x196x128xf32, #tpu.memory_space<vmem>>, vector<1x196x128xf32>
      %96 = vector.shape_cast %95 : vector<1x196x128xf32> to vector<196x128xf32>
      %cst_79 = arith.constant dense<0.000000e+00> : vector<1x128xf32>
      %97 = tpu.matmul %94, %96, %cst_79 {dimension_numbers = #tpu.dot_dimension_numbers<[1], [0], [0], [1], [0, 0, 1, 1], [], []>} : vector<1x196xf32>, vector<196x128xf32>, vector<1x128xf32> -> vector<1x128xf32>
      %98 = arith.addf %93, %97 : vector<1x128xf32>
      %99 = vector.extract_strided_slice %82 {offsets = [3, 0], sizes = [1, 196], strides = [1, 1]} : vector<8x196xf32> to vector<1x196xf32>
      %c3_80 = arith.constant 3 : index
      %c0_81 = arith.constant 0 : index
      %c0_82 = arith.constant 0 : index
      %100 = vector.load %arg4[%c3_80, %c0_81, %c0_82] : memref<8x196x128xf32, #tpu.memory_space<vmem>>, vector<1x196x128xf32>
      %101 = vector.shape_cast %100 : vector<1x196x128xf32> to vector<196x128xf32>
      %cst_83 = arith.constant dense<0.000000e+00> : vector<1x128xf32>
      %102 = tpu.matmul %99, %101, %cst_83 {dimension_numbers = #tpu.dot_dimension_numbers<[1], [0], [0], [1], [0, 0, 1, 1], [], []>} : vector<1x196xf32>, vector<196x128xf32>, vector<1x128xf32> -> vector<1x128xf32>
      %103 = arith.addf %98, %102 : vector<1x128xf32>
      %104 = vector.extract_strided_slice %82 {offsets = [4, 0], sizes = [1, 196], strides = [1, 1]} : vector<8x196xf32> to vector<1x196xf32>
      %c4_84 = arith.constant 4 : index
      %c0_85 = arith.constant 0 : index
      %c0_86 = arith.constant 0 : index
      %105 = vector.load %arg4[%c4_84, %c0_85, %c0_86] : memref<8x196x128xf32, #tpu.memory_space<vmem>>, vector<1x196x128xf32>
      %106 = vector.shape_cast %105 : vector<1x196x128xf32> to vector<196x128xf32>
      %cst_87 = arith.constant dense<0.000000e+00> : vector<1x128xf32>
      %107 = tpu.matmul %104, %106, %cst_87 {dimension_numbers = #tpu.dot_dimension_numbers<[1], [0], [0], [1], [0, 0, 1, 1], [], []>} : vector<1x196xf32>, vector<196x128xf32>, vector<1x128xf32> -> vector<1x128xf32>
      %108 = arith.addf %103, %107 : vector<1x128xf32>
      %109 = vector.extract_strided_slice %82 {offsets = [5, 0], sizes = [1, 196], strides = [1, 1]} : vector<8x196xf32> to vector<1x196xf32>
      %c5_88 = arith.constant 5 : index
      %c0_89 = arith.constant 0 : index
      %c0_90 = arith.constant 0 : index
      %110 = vector.load %arg4[%c5_88, %c0_89, %c0_90] : memref<8x196x128xf32, #tpu.memory_space<vmem>>, vector<1x196x128xf32>
      %111 = vector.shape_cast %110 : vector<1x196x128xf32> to vector<196x128xf32>
      %cst_91 = arith.constant dense<0.000000e+00> : vector<1x128xf32>
      %112 = tpu.matmul %109, %111, %cst_91 {dimension_numbers = #tpu.dot_dimension_numbers<[1], [0], [0], [1], [0, 0, 1, 1], [], []>} : vector<1x196xf32>, vector<196x128xf32>, vector<1x128xf32> -> vector<1x128xf32>
      %113 = arith.addf %108, %112 : vector<1x128xf32>
      %114 = vector.extract_strided_slice %82 {offsets = [6, 0], sizes = [1, 196], strides = [1, 1]} : vector<8x196xf32> to vector<1x196xf32>
      %c6_92 = arith.constant 6 : index
      %c0_93 = arith.constant 0 : index
      %c0_94 = arith.constant 0 : index
      %115 = vector.load %arg4[%c6_92, %c0_93, %c0_94] : memref<8x196x128xf32, #tpu.memory_space<vmem>>, vector<1x196x128xf32>
      %116 = vector.shape_cast %115 : vector<1x196x128xf32> to vector<196x128xf32>
      %cst_95 = arith.constant dense<0.000000e+00> : vector<1x128xf32>
      %117 = tpu.matmul %114, %116, %cst_95 {dimension_numbers = #tpu.dot_dimension_numbers<[1], [0], [0], [1], [0, 0, 1, 1], [], []>} : vector<1x196xf32>, vector<196x128xf32>, vector<1x128xf32> -> vector<1x128xf32>
      %118 = arith.addf %113, %117 : vector<1x128xf32>
      %119 = vector.extract_strided_slice %82 {offsets = [7, 0], sizes = [1, 196], strides = [1, 1]} : vector<8x196xf32> to vector<1x196xf32>
      %c7_96 = arith.constant 7 : index
      %c0_97 = arith.constant 0 : index
      %c0_98 = arith.constant 0 : index
      %120 = vector.load %arg4[%c7_96, %c0_97, %c0_98] : memref<8x196x128xf32, #tpu.memory_space<vmem>>, vector<1x196x128xf32>
      %121 = vector.shape_cast %120 : vector<1x196x128xf32> to vector<196x128xf32>
      %cst_99 = arith.constant dense<0.000000e+00> : vector<1x128xf32>
      %122 = tpu.matmul %119, %121, %cst_99 {dimension_numbers = #tpu.dot_dimension_numbers<[1], [0], [0], [1], [0, 0, 1, 1], [], []>} : vector<1x196xf32>, vector<196x128xf32>, vector<1x128xf32> -> vector<1x128xf32>
      %123 = arith.addf %118, %122 : vector<1x128xf32>
      %124 = vector.extract_strided_slice %20 {offsets = [1, 0], sizes = [1, 128], strides = [1, 1]} : vector<2x128xf32> to vector<1x128xf32>
      %125 = arith.mulf %123, %124 : vector<1x128xf32>
      %c1_100 = arith.constant 1 : index
      %c0_101 = arith.constant 0 : index
      %126 = vector.load %arg12[%c1_100, %c0_101] : memref<2x256xf32, #tpu.memory_space<vmem>>, vector<1x128xf32>
      tpu.vector_store %arg12[%c1_100, %c0_101], %125 {strides = array<i32>} : memref<2x256xf32, #tpu.memory_space<vmem>>, vector<1x128xf32>,
    } else {
    }
    %c0 = arith.constant 0 : index
    %c0_1 = arith.constant 0 : index
    %3 = vector.load %arg13[%c0, %c0_1] : memref<2x128xf32, #tpu.memory_space<vmem>>, vector<2x128xf32>
    %c0_2 = arith.constant 0 : index
    %c0_3 = arith.constant 0 : index
    %4 = vector.load %arg9[%c0_2, %c0_3] : memref<2x256xf32, #tpu.memory_space<vmem>>, vector<2x256xf32>
    %c0_4 = arith.constant 0 : index
    %c0_5 = arith.constant 0 : index
    %5 = vector.load %arg10[%c0_4, %c0_5] : memref<256x128xbf16, #tpu.memory_space<vmem>>, vector<256x128xbf16>
    %6 = arith.extf %5 : vector<256x128xbf16> to vector<256x128xf32>
    %cst = arith.constant dense<0.000000e+00> : vector<2x128xf32>
    %7 = tpu.matmul %4, %6, %cst {dimension_numbers = #tpu.dot_dimension_numbers<[1], [0], [0], [1], [0, 0, 1, 1], [], []>} : vector<2x256xf32>, vector<256x128xf32>, vector<2x128xf32> -> vector<2x128xf32>
    %8 = arith.addf %3, %7 : vector<2x128xf32>
    %c0_6 = arith.constant 0 : index
    %c0_7 = arith.constant 0 : index
    %9 = vector.load %arg13[%c0_6, %c0_7] : memref<2x128xf32, #tpu.memory_space<vmem>>, vector<2x128xf32>
    tpu.vector_store %arg13[%c0_6, %c0_7], %8 {strides = array<i32>} : memref<2x128xf32, #tpu.memory_space<vmem>>, vector<2x128xf32>,
    %c1_i32 = arith.constant 1 : i32
    %10 = arith.cmpi eq, %arg0, %c1_i32 : i32
    %11 = arith.extui %10 : i1 to i32
    %c0_i32_8 = arith.constant 0 : i32
    %12 = arith.cmpi ne, %11, %c0_i32_8 : i32
    scf.if %12 {
      %c0_9 = arith.constant 0 : index
      %c0_10 = arith.constant 0 : index
      %13 = vector.load %arg13[%c0_9, %c0_10] : memref<2x128xf32, #tpu.memory_space<vmem>>, vector<2x128xf32>
      %c0_11 = arith.constant 0 : index
      %c0_12 = arith.constant 0 : index
      %14 = vector.load %arg11[%c0_11, %c0_12] : memref<1x128xf32, #tpu.memory_space<vmem>>, vector<1x128xf32>
      %15 = vector.broadcast %14 : vector<1x128xf32> to vector<2x128xf32>
      %16 = arith.addf %13, %15 : vector<2x128xf32>
      %c0_13 = arith.constant 0 : index
      %c128 = arith.constant 128 : index
      %17 = vector.load %arg12[%c0_13, %c128] : memref<2x256xf32, #tpu.memory_space<vmem>>, vector<2x128xf32>
      tpu.vector_store %arg12[%c0_13, %c128], %16 {strides = array<i32>} : memref<2x256xf32, #tpu.memory_space<vmem>>, vector<2x128xf32>,
    } else {
    }
    return
  }
  func.func @transform_0(%arg0: i32) -> (i32, i32, i32) {
    %c0_i32 = arith.constant 0 : i32
    %c0_i32_0 = arith.constant 0 : i32
    %c0_i32_1 = arith.constant 0 : i32
    %c0_i32_2 = arith.constant 0 : i32
    return %c0_i32, %c0_i32_0, %c0_i32_1 : i32, i32, i32
  }
  func.func @transform_1(%arg0: i32) -> (i32, i32) {
    %c0_i32 = arith.constant 0 : i32
    %c0_i32_0 = arith.constant 0 : i32
    %c0_i32_1 = arith.constant 0 : i32
    return %c0_i32, %c0_i32_0 : i32, i32
  }
  func.func @transform_2(%arg0: i32) -> (i32, i32) {
    %c0_i32 = arith.constant 0 : i32
    %c0_i32_0 = arith.constant 0 : i32
    %c0_i32_1 = arith.constant 0 : i32
    return %c0_i32, %c0_i32_0 : i32, i32
  }
  func.func @transform_3(%arg0: i32) -> (i32, i32, i32) {
    %c0_i32 = arith.constant 0 : i32
    %c0_i32_0 = arith.constant 0 : i32
    %c0_i32_1 = arith.constant 0 : i32
    %c0_i32_2 = arith.constant 0 : i32
    return %c0_i32, %c0_i32_0, %c0_i32_1 : i32, i32, i32
  }
  func.func @transform_4(%arg0: i32) -> (i32, i32) {
    %c0_i32 = arith.constant 0 : i32
    %c0_i32_0 = arith.constant 0 : i32
    %c0_i32_1 = arith.constant 0 : i32
    return %c0_i32, %c0_i32_0 : i32, i32
  }
  func.func @transform_5(%arg0: i32) -> (i32, i32) {
    %c0_i32 = arith.constant 0 : i32
    %c0_i32_0 = arith.constant 0 : i32
    %c0_i32_1 = arith.constant 0 : i32
    return %c0_i32, %c0_i32_0 : i32, i32
  }
  func.func @transform_6(%arg0: i32) -> (i32, i32) {
    %c0_i32 = arith.constant 0 : i32
    %c0_i32_0 = arith.constant 0 : i32
    %c0_i32_1 = arith.constant 0 : i32
    return %c0_i32, %c0_i32_0 : i32, i32
  }
  func.func @transform_7(%arg0: i32) -> (i32, i32) {
    %c0_i32 = arith.constant 0 : i32
    %c0_i32_0 = arith.constant 0 : i32
    %c0_i32_1 = arith.constant 0 : i32
    return %c0_i32, %c0_i32_0 : i32, i32
  }
  func.func @transform_8(%arg0: i32) -> (i32, i32) {
    %c0_i32 = arith.constant 0 : i32
    %c0_i32_0 = arith.constant 0 : i32
    return %c0_i32, %arg0 : i32, i32
  }
  func.func @transform_9(%arg0: i32) -> (i32, i32) {
    %c0_i32 = arith.constant 0 : i32
    %c0_i32_0 = arith.constant 0 : i32
    return %arg0, %c0_i32 : i32, i32
  }
  func.func @transform_10(%arg0: i32) -> (i32, i32) {
    %c0_i32 = arith.constant 0 : i32
    %c0_i32_0 = arith.constant 0 : i32
    %c0_i32_1 = arith.constant 0 : i32
    return %c0_i32, %c0_i32_0 : i32, i32
  }
  func.func @transform_11(%arg0: i32) -> (i32, i32) {
    %c0_i32 = arith.constant 0 : i32
    %c0_i32_0 = arith.constant 0 : i32
    %c0_i32_1 = arith.constant 0 : i32
    return %c0_i32, %c0_i32_0 : i32, i32
  }
}

module attributes {stable_mosaic.version = 11 : i64} {
  func.func @out_kernel(%arg0: i32, %arg1: memref<2x256xf32, #tpu.memory_space<vmem>>, %arg2: memref<256x512xbf16, #tpu.memory_space<vmem>>, %arg3: memref<1x512xf32, #tpu.memory_space<vmem>>, %arg4: memref<2x512xf32, #tpu.memory_space<vmem>>) attributes {dimension_semantics = [#tpu.dimension_semantics<parallel>], iteration_bounds = array<i64: 3>, scalar_prefetch = 0 : i64, scratch_operands = 0 : i64, tpu.core_type = #tpu.core_type<tc>, window_params = [{pipeline_mode = #tpu.pipeline_mode<synchronous>, transform_indices = @transform_0, window_bounds = array<i64: 2, 256>}, {transform_indices = @transform_1, window_bounds = array<i64: 256, 512>}, {transform_indices = @transform_2, window_bounds = array<i64: 1, 512>}, {transform_indices = @transform_3, window_bounds = array<i64: 2, 512>}]} {
    %c0 = arith.constant 0 : index
    %c0_0 = arith.constant 0 : index
    %0 = vector.load %arg1[%c0, %c0_0] : memref<2x256xf32, #tpu.memory_space<vmem>>, vector<2x256xf32>
    %c0_1 = arith.constant 0 : index
    %c0_2 = arith.constant 0 : index
    %1 = vector.load %arg2[%c0_1, %c0_2] : memref<256x512xbf16, #tpu.memory_space<vmem>>, vector<256x512xbf16>
    %2 = arith.extf %1 : vector<256x512xbf16> to vector<256x512xf32>
    %cst = arith.constant dense<0.000000e+00> : vector<2x512xf32>
    %3 = tpu.matmul %0, %2, %cst {dimension_numbers = #tpu.dot_dimension_numbers<[1], [0], [0], [1], [0, 0, 1, 1], [], []>} : vector<2x256xf32>, vector<256x512xf32>, vector<2x512xf32> -> vector<2x512xf32>
    %c0_3 = arith.constant 0 : index
    %c0_4 = arith.constant 0 : index
    %4 = vector.load %arg3[%c0_3, %c0_4] : memref<1x512xf32, #tpu.memory_space<vmem>>, vector<1x512xf32>
    %5 = vector.broadcast %4 : vector<1x512xf32> to vector<2x512xf32>
    %6 = arith.addf %3, %5 : vector<2x512xf32>
    %c0_5 = arith.constant 0 : index
    %c0_6 = arith.constant 0 : index
    %7 = vector.load %arg4[%c0_5, %c0_6] : memref<2x512xf32, #tpu.memory_space<vmem>>, vector<2x512xf32>
    tpu.vector_store %arg4[%c0_5, %c0_6], %6 {strides = array<i32>} : memref<2x512xf32, #tpu.memory_space<vmem>>, vector<2x512xf32>,
    return
  }
  func.func @transform_0(%arg0: i32) -> (i32, i32) {
    %c0_i32 = arith.constant 0 : i32
    %c0_i32_0 = arith.constant 0 : i32
    %c0_i32_1 = arith.constant 0 : i32
    return %c0_i32, %c0_i32_0 : i32, i32
  }
  func.func @transform_1(%arg0: i32) -> (i32, i32) {
    %c0_i32 = arith.constant 0 : i32
    %c0_i32_0 = arith.constant 0 : i32
    return %c0_i32, %arg0 : i32, i32
  }
  func.func @transform_2(%arg0: i32) -> (i32, i32) {
    %c0_i32 = arith.constant 0 : i32
    %c0_i32_0 = arith.constant 0 : i32
    return %c0_i32, %arg0 : i32, i32
  }
  func.func @transform_3(%arg0: i32) -> (i32, i32) {
    %c0_i32 = arith.constant 0 : i32
    %c0_i32_0 = arith.constant 0 : i32
    return %c0_i32, %arg0 : i32, i32
  }
}

</mosaic_0001>

<llo_original>
// kernel: opnn_forward.3
$region0: #{opnn_forward.3}
  #allocation0 [shape = 'u32[]', space=smem, size = 0x4, offset = 0x4, fixed_abs, tag = 'smem constant byte address 0x4 - core index']
  #allocation1 [shape = 'u32[144,128]{1,0:T(1,128)}', space=vmem, size = 0x12000, scoped, tag = 'internal scratch']
  %s0 = inlined_call_operand.vmem [shape: f32[2,256], index: 0, kind: input, shape index: {}]
  %s1 = inlined_call_operand.vmem [shape: bf16[256,1536], index: 1, kind: input, shape index: {}]
  %s2 = inlined_call_operand.vmem [shape: f32[1,1536], index: 2, kind: input, shape index: {}]
  %s3 = inlined_call_operand.hbm [shape: f32[2,1536], index: 3, kind: output, shape index: {}]
  %s4 = sld [smem:[#allocation0]]
  $region68: #{opnn_forward.3} parent=0
    _
  %s6 = ssub.s32 1, %s4
  %s7 = scalar_select 0, %s6, %s4
  $region1: #{opnn_forward.3} parent=0
    #allocation2 [shape = 'u8[524288]{0}', space=vmem, size = 0x80000, scoped, tag = 'input window, operand 1']
    #allocation3 [shape = 'u8[8192]{0}', space=vmem, size = 0x2000, scoped, tag = 'output window, operand 0']
    #allocation4 [shape = 's32[2]{0}', space=sflag, size = 0x8, scoped, tag = 'scoped memory for opnn_forward.3']
    %8 = vsyncpa [#allocation4], 0
    %s9 = scalar_lea.sflag [#allocation4], 1
    %10 = vsyncpa %s9, 0
    loop: start=0, step=1, limit=5
    $region2: #{opnn_forward.3} parent=1 // loop_pre_header
      _
    $region3: #{opnn_forward.3} parent=1 // loop_header
      %s12 = sphi 0, %s16
      %p13 = scmp.ge.s32.totalorder %s12, 5
      %s20 = sphi 0, %s20
      %s22 = sphi 0, %s20
      %s23 = sphi 0, %s22
      %s37 = sphi 0, %s23
      %s43 = sphi 0, %s45
      %s46 = sphi 0, %s43
      %s47 = sphi 0, %s46
      %s63 = sphi 0, %s47
      %s69 = sphi 0, %s71
      %s72 = sphi 0, %s69
      %s73 = sphi 0, %s72
      %s89 = sphi 0, %s73
      %s95 = sphi 0, %s97
      %s98 = sphi 0, %s95
      %s99 = sphi 0, %s98
      %s115 = sphi 0, %s99
    $region4: #{opnn_forward.3} parent=1 // loop_header_branch
      %15 = sbr.rel (%p13) target = $region8
    $region5: #{opnn_forward.3} parent=1 // loop_body
      %s17 = ssub.s32 %s12, 1
      %s18 = ssub.s32 %s12, 2
      %s19 = sadd.s32 %s12, 1
      %s21 = sadd.s32 %s20, 1
      %p24 = scmp.eq.s32.totalorder %s12, 2
      %p25 = scmp.ne.s32.totalorder %s20, %s22
      %p26 = scmp.eq.s32.totalorder %s12, 0
      %p27 = por %p25, %p26
      %p28 = scmp.ne.s32.totalorder %s20, %s22
      %p29 = scmp.eq.s32.totalorder %s17, 2
      %p30 = por %p28, %p29
      %p31 = scmp.ne.s32.totalorder %s22, %s23
      %p32 = scmp.eq.s32.totalorder %s17, 0
      %p33 = por %p31, %p32
      %p34 = scmp.ne.s32.totalorder %s22, %s23
      %p35 = scmp.eq.s32.totalorder %s18, 2
      %p36 = por %p34, %p35
      %p38 = scmp.ne.s32.totalorder %s23, %s37
      %p39 = scmp.eq.s32.totalorder %s18, 0
      %p40 = por %p38, %p39
      %s41 = ssub.s32 %s12, %s19
      %p42 = scmp.eq.s32.totalorder %s41, 0
      %s44 = sadd.s32 %s43, 1
      %s45 = scalar_select %p42, %s43, %s44
      %p48 = pneg %p42
      %p49 = scmp.eq.s32.totalorder %s12, 2
      %p50 = por %p48, %p49
      %p51 = scmp.ne.s32.totalorder %s43, %s46
      %p52 = scmp.eq.s32.totalorder %s12, 0
      %p53 = por %p51, %p52
      %p54 = scmp.ne.s32.totalorder %s43, %s46
      %p55 = scmp.eq.s32.totalorder %s17, 2
      %p56 = por %p54, %p55
      %p57 = scmp.ne.s32.totalorder %s46, %s47
      %p58 = scmp.eq.s32.totalorder %s17, 0
      %p59 = por %p57, %p58
      %p60 = scmp.ne.s32.totalorder %s46, %s47
      %p61 = scmp.eq.s32.totalorder %s18, 2
      %p62 = por %p60, %p61
      %p64 = scmp.ne.s32.totalorder %s47, %s63
      %p65 = scmp.eq.s32.totalorder %s18, 0
      %p66 = por %p64, %p65
      %s67 = ssub.s32 %s12, %s19
      %p68 = scmp.eq.s32.totalorder %s67, 0
      %s70 = sadd.s32 %s69, 1
      %s71 = scalar_select %p68, %s69, %s70
      %p74 = pneg %p68
      %p75 = scmp.eq.s32.totalorder %s12, 2
      %p76 = por %p74, %p75
      %p77 = scmp.ne.s32.totalorder %s69, %s72
      %p78 = scmp.eq.s32.totalorder %s12, 0
      %p79 = por %p77, %p78
      %p80 = scmp.ne.s32.totalorder %s69, %s72
      %p81 = scmp.eq.s32.totalorder %s17, 2
      %p82 = por %p80, %p81
      %p83 = scmp.ne.s32.totalorder %s72, %s73
      %p84 = scmp.eq.s32.totalorder %s17, 0
      %p85 = por %p83, %p84
      %p86 = scmp.ne.s32.totalorder %s72, %s73
      %p87 = scmp.eq.s32.totalorder %s18, 2
      %p88 = por %p86, %p87
      %p90 = scmp.ne.s32.totalorder %s73, %s89
      %p91 = scmp.eq.s32.totalorder %s18, 0
      %p92 = por %p90, %p91
      %s93 = ssub.s32 %s12, %s19
      %p94 = scmp.eq.s32.totalorder %s93, 0
      %s96 = sadd.s32 %s95, 1
      %s97 = scalar_select %p94, %s95, %s96
      %p100 = pneg %p94
      %p101 = scmp.eq.s32.totalorder %s12, 2
      %p102 = por %p100, %p101
      %p103 = scmp.ne.s32.totalorder %s95, %s98
      %p104 = scmp.eq.s32.totalorder %s12, 0
      %p105 = por %p103, %p104
      %p106 = scmp.ne.s32.totalorder %s95, %s98
      %p107 = scmp.eq.s32.totalorder %s17, 2
      %p108 = por %p106, %p107
      %p109 = scmp.ne.s32.totalorder %s98, %s99
      %p110 = scmp.eq.s32.totalorder %s17, 0
      %p111 = por %p109, %p110
      %p112 = scmp.ne.s32.totalorder %s98, %s99
      %p113 = scmp.eq.s32.totalorder %s18, 2
      %p114 = por %p112, %p113
      %p116 = scmp.ne.s32.totalorder %s99, %s115
      %p117 = scmp.eq.s32.totalorder %s18, 0
      %p118 = por %p116, %p117
      %p119 = scmp.le.s32.totalorder 1, %s12
      %p120 = scmp.lt.s32.totalorder %s12, 4
      %p121 = pnand %p119, %p120
      %p122 = pneg %p121
      // Predicated region
      $region9: #{opnn_forward.3} parent=5 // pred_check
        _
      $region10: #{opnn_forward.3} parent=5 // pred_check_branch
        %124 = sbr.rel (%p121) target = $region12
      $region11: #{opnn_forward.3} parent=5 // pred_region
        %s125 = ssub.s32 %s12, 1
        // Predicated region
        $region13: #{opnn_forward.3} parent=11 // pred_check
          %p126 = pneg %p33
        $region14: #{opnn_forward.3} parent=11 // pred_check_branch
          %128 = sbr.rel (%p126) target = $region16
        $region15: #{opnn_forward.3} parent=11 // pred_region
          _
        $region16: #{opnn_forward.3} parent=11 // pred_fallthru
          _
      $region12: #{opnn_forward.3} parent=5 // pred_fallthru
        _
      %p129 = scmp.lt.s32.totalorder %s12, 3
      // Predicated region
      $region17: #{opnn_forward.3} parent=5 // pred_check
        %p130 = pneg %p129
      $region18: #{opnn_forward.3} parent=5 // pred_check_branch
        %132 = sbr.rel (%p130) target = $region20
      $region19: #{opnn_forward.3} parent=5 // pred_region
        // Predicated region
        $region21: #{opnn_forward.3} parent=19 // pred_check
          %p133 = pneg %p53
        $region22: #{opnn_forward.3} parent=19 // pred_check_branch
          %135 = sbr.rel (%p133) target = $region24
        $region23: #{opnn_forward.3} parent=19 // pred_region
          %s136 = sand.u32 %s43, 1
          %s137 = sand.u32 %s43, 1
          %s138 = smul.addr %s137, 512
          %s139 = scalar_lea.vmem [#allocation2], %s138
          %s140 = smul.u32 4, %s12
          %s141 = smul.addr %s140, 4
          %s142 = scalar_lea.vmem %s1, %s141
          // Predicated region
          $region25: #{opnn_forward.3} parent=23 // pred_check
            _
          $region26: #{opnn_forward.3} parent=23 // pred_check_branch
            %144 = sbr.rel (0) target = $region28
          $region27: #{opnn_forward.3} parent=23 // pred_region
            // Predicated region
            $region29: #{opnn_forward.3} parent=27 // pred_check
              _
            $region30: #{opnn_forward.3} parent=27 // pred_check_branch
              %146 = sbr.rel (0) target = $region32
            $region31: #{opnn_forward.3} parent=27 // pred_region
              loop: start=0, step=1, limit=1
              $region33: #{opnn_forward.3} parent=31 // loop_pre_header
                _
              $region34: #{opnn_forward.3} parent=31 // loop_header
                %s148 = sphi 0, %s152
                %p149 = scmp.ge.s32.totalorder %s148, 1
                %s153 = sphi %s142, %s142
                %s154 = sphi %s139, %s139
              $region35: #{opnn_forward.3} parent=31 // loop_header_branch
                %151 = sbr.rel (%p149) target = $region39
              $region36: #{opnn_forward.3} parent=31 // loop_body
                %v155 = vld [vmem:[%s153] sm:$0xff]
                %156 = vst [vmem:[%s154] sm:$0xff] %v155
                %v157 = vld [vmem:[%s153 + $0x8] sm:$0xff]
                %158 = vst [vmem:[%s154 + $0x8] sm:$0xff] %v157
                %v159 = vld [vmem:[%s153 + $0x30] sm:$0xff]
                %160 = vst [vmem:[%s154 + $0x10] sm:$0xff] %v159
                %v161 = vld [vmem:[%s153 + $0x38] sm:$0xff]
                %162 = vst [vmem:[%s154 + $0x18] sm:$0xff] %v161
                %v163 = vld [vmem:[%s153 + $0x60] sm:$0xff]
                %164 = vst [vmem:[%s154 + $0x20] sm:$0xff] %v163
                %v165 = vld [vmem:[%s153 + $0x68] sm:$0xff]
                %166 = vst [vmem:[%s154 + $0x28] sm:$0xff] %v165
                %v167 = vld [vmem:[%s153 + $0x90] sm:$0xff]
                %168 = vst [vmem:[%s154 + $0x30] sm:$0xff] %v167
                %v169 = vld [vmem:[%s153 + $0x98] sm:$0xff]
                %170 = vst [vmem:[%s154 + $0x38] sm:$0xff] %v169
                %v171 = vld [vmem:[%s153 + $0xc0] sm:$0xff]
                %172 = vst [vmem:[%s154 + $0x40] sm:$0xff] %v171
                %v173 = vld [vmem:[%s153 + $0xc8] sm:$0xff]
                %174 = vst [vmem:[%s154 + $0x48] sm:$0xff] %v173
                %v175 = vld [vmem:[%s153 + $0xf0] sm:$0xff]
                %176 = vst [vmem:[%s154 + $0x50] sm:$0xff] %v175
                %v177 = vld [vmem:[%s153 + $0xf8] sm:$0xff]
                %178 = vst [vmem:[%s154 + $0x58] sm:$0xff] %v177
                %v179 = vld [vmem:[%s153 + $0x120] sm:$0xff]
                %180 = vst [vmem:[%s154 + $0x60] sm:$0xff] %v179
                %v181 = vld [vmem:[%s153 + $0x128] sm:$0xff]
                %182 = vst [vmem:[%s154 + $0x68] sm:$0xff] %v181
                %v183 = vld [vmem:[%s153 + $0x150] sm:$0xff]
                %184 = vst [vmem:[%s154 + $0x70] sm:$0xff] %v183
                %v185 = vld [vmem:[%s153 + $0x158] sm:$0xff]
                %186 = vst [vmem:[%s154 + $0x78] sm:$0xff] %v185
                %v187 = vld [vmem:[%s153 + $0x180] sm:$0xff]
                %188 = vst [vmem:[%s154 + $0x80] sm:$0xff] %v187
                %v189 = vld [vmem:[%s153 + $0x188] sm:$0xff]
                %190 = vst [vmem:[%s154 + $0x88] sm:$0xff] %v189
                %v191 = vld [vmem:[%s153 + $0x1b0] sm:$0xff]
                %192 = vst [vmem:[%s154 + $0x90] sm:$0xff] %v191
                %v193 = vld [vmem:[%s153 + $0x1b8] sm:$0xff]
                %194 = vst [vmem:[%s154 + $0x98] sm:$0xff] %v193
                %v195 = vld [vmem:[%s153 + $0x1e0] sm:$0xff]
                %196 = vst [vmem:[%s154 + $0xa0] sm:$0xff] %v195
                %v197 = vld [vmem:[%s153 + $0x1e8] sm:$0xff]
                %198 = vst [vmem:[%s154 + $0xa8] sm:$0xff] %v197
                %v199 = vld [vmem:[%s153 + $0x210] sm:$0xff]
                %200 = vst [vmem:[%s154 + $0xb0] sm:$0xff] %v199
                %v201 = vld [vmem:[%s153 + $0x218] sm:$0xff]
                %202 = vst [vmem:[%s154 + $0xb8] sm:$0xff] %v201
                %v203 = vld [vmem:[%s153 + $0x240] sm:$0xff]
                %204 = vst [vmem:[%s154 + $0xc0] sm:$0xff] %v203
                %v205 = vld [vmem:[%s153 + $0x248] sm:$0xff]
                %206 = vst [vmem:[%s154 + $0xc8] sm:$0xff] %v205
                %v207 = vld [vmem:[%s153 + $0x270] sm:$0xff]
                %208 = vst [vmem:[%s154 + $0xd0] sm:$0xff] %v207
                %v209 = vld [vmem:[%s153 + $0x278] sm:$0xff]
                %210 = vst [vmem:[%s154 + $0xd8] sm:$0xff] %v209
                %v211 = vld [vmem:[%s153 + $0x2a0] sm:$0xff]
                %212 = vst [vmem:[%s154 + $0xe0] sm:$0xff] %v211
                %v213 = vld [vmem:[%s153 + $0x2a8] sm:$0xff]
                %214 = vst [vmem:[%s154 + $0xe8] sm:$0xff] %v213
                %v215 = vld [vmem:[%s153 + $0x2d0] sm:$0xff]
                %216 = vst [vmem:[%s154 + $0xf0] sm:$0xff] %v215
                %v217 = vld [vmem:[%s153 + $0x2d8] sm:$0xff]
                %218 = vst [vmem:[%s154 + $0xf8] sm:$0xff] %v217
                %v219 = vld [vmem:[%s153 + $0x300] sm:$0xff]
                %220 = vst [vmem:[%s154 + $0x100] sm:$0xff] %v219
                %v221 = vld [vmem:[%s153 + $0x308] sm:$0xff]
                %222 = vst [vmem:[%s154 + $0x108] sm:$0xff] %v221
                %v223 = vld [vmem:[%s153 + $0x330] sm:$0xff]
                %224 = vst [vmem:[%s154 + $0x110] sm:$0xff] %v223
                %v225 = vld [vmem:[%s153 + $0x338] sm:$0xff]
                %226 = vst [vmem:[%s154 + $0x118] sm:$0xff] %v225
                %v227 = vld [vmem:[%s153 + $0x360] sm:$0xff]
                %228 = vst [vmem:[%s154 + $0x120] sm:$0xff] %v227
                %v229 = vld [vmem:[%s153 + $0x368] sm:$0xff]
                %230 = vst [vmem:[%s154 + $0x128] sm:$0xff] %v229
                %v231 = vld [vmem:[%s153 + $0x390] sm:$0xff]
                %232 = vst [vmem:[%s154 + $0x130] sm:$0xff] %v231
                %v233 = vld [vmem:[%s153 + $0x398] sm:$0xff]
                %234 = vst [vmem:[%s154 + $0x138] sm:$0xff] %v233
                %v235 = vld [vmem:[%s153 + $0x3c0] sm:$0xff]
                %236 = vst [vmem:[%s154 + $0x140] sm:$0xff] %v235
                %v237 = vld [vmem:[%s153 + $0x3c8] sm:$0xff]
                %238 = vst [vmem:[%s154 + $0x148] sm:$0xff] %v237
                %v239 = vld [vmem:[%s153 + $0x3f0] sm:$0xff]
                %240 = vst [vmem:[%s154 + $0x150] sm:$0xff] %v239
                %v241 = vld [vmem:[%s153 + $0x3f8] sm:$0xff]
                %242 = vst [vmem:[%s154 + $0x158] sm:$0xff] %v241
                %v243 = vld [vmem:[%s153 + $0x420] sm:$0xff]
                %244 = vst [vmem:[%s154 + $0x160] sm:$0xff] %v243
                %v245 = vld [vmem:[%s153 + $0x428] sm:$0xff]
                %246 = vst [vmem:[%s154 + $0x168] sm:$0xff] %v245
                %v247 = vld [vmem:[%s153 + $0x450] sm:$0xff]
                %248 = vst [vmem:[%s154 + $0x170] sm:$0xff] %v247
                %v249 = vld [vmem:[%s153 + $0x458] sm:$0xff]
                %250 = vst [vmem:[%s154 + $0x178] sm:$0xff] %v249
                %v251 = vld [vmem:[%s153 + $0x480] sm:$0xff]
                %252 = vst [vmem:[%s154 + $0x180] sm:$0xff] %v251
                %v253 = vld [vmem:[%s153 + $0x488] sm:$0xff]
                %254 = vst [vmem:[%s154 + $0x188] sm:$0xff] %v253
                %v255 = vld [vmem:[%s153 + $0x4b0] sm:$0xff]
                %256 = vst [vmem:[%s154 + $0x190] sm:$0xff] %v255
                %v257 = vld [vmem:[%s153 + $0x4b8] sm:$0xff]
                %258 = vst [vmem:[%s154 + $0x198] sm:$0xff] %v257
                %v259 = vld [vmem:[%s153 + $0x4e0] sm:$0xff]
                %260 = vst [vmem:[%s154 + $0x1a0] sm:$0xff] %v259
                %v261 = vld [vmem:[%s153 + $0x4e8] sm:$0xff]
                %262 = vst [vmem:[%s154 + $0x1a8] sm:$0xff] %v261
                %v263 = vld [vmem:[%s153 + $0x510] sm:$0xff]
                %264 = vst [vmem:[%s154 + $0x1b0] sm:$0xff] %v263
                %v265 = vld [vmem:[%s153 + $0x518] sm:$0xff]
                %266 = vst [vmem:[%s154 + $0x1b8] sm:$0xff] %v265
                %v267 = vld [vmem:[%s153 + $0x540] sm:$0xff]
                %268 = vst [vmem:[%s154 + $0x1c0] sm:$0xff] %v267
                %v269 = vld [vmem:[%s153 + $0x548] sm:$0xff]
                %270 = vst [vmem:[%s154 + $0x1c8] sm:$0xff] %v269
                %v271 = vld [vmem:[%s153 + $0x570] sm:$0xff]
                %272 = vst [vmem:[%s154 + $0x1d0] sm:$0xff] %v271
                %v273 = vld [vmem:[%s153 + $0x578] sm:$0xff]
                %274 = vst [vmem:[%s154 + $0x1d8] sm:$0xff] %v273
                %v275 = vld [vmem:[%s153 + $0x5a0] sm:$0xff]
                %276 = vst [vmem:[%s154 + $0x1e0] sm:$0xff] %v275
                %v277 = vld [vmem:[%s153 + $0x5a8] sm:$0xff]
                %278 = vst [vmem:[%s154 + $0x1e8] sm:$0xff] %v277
                %v279 = vld [vmem:[%s153 + $0x5d0] sm:$0xff]
                %280 = vst [vmem:[%s154 + $0x1f0] sm:$0xff] %v279
                %v281 = vld [vmem:[%s153 + $0x5d8] sm:$0xff]
                %282 = vst [vmem:[%s154 + $0x1f8] sm:$0xff] %v281
              $region37: #{opnn_forward.3} parent=31 // loop_footer
                %s152 = sadd.s32 1, %s148
              $region38: #{opnn_forward.3} parent=31 // loop_footer_branch
                %147 = sbr.rel target = $region34
              $region39: #{opnn_forward.3} parent=31 // loop_exit
                _
            $region32: #{opnn_forward.3} parent=27 // pred_fallthru
              _
            // Predicated region
            $region40: #{opnn_forward.3} parent=27 // pred_check
              _
            $region41: #{opnn_forward.3} parent=27 // pred_check_branch
              %284 = sbr.rel target = $region43
            $region42: #{opnn_forward.3} parent=27 // pred_region
              _
            $region43: #{opnn_forward.3} parent=27 // pred_fallthru
              _
          $region28: #{opnn_forward.3} parent=23 // pred_fallthru
            _
          %285 = vnop
        $region24: #{opnn_forward.3} parent=19 // pred_fallthru
          _
        // Predicated region
        $region44: #{opnn_forward.3} parent=19 // pred_check
          %p286 = pneg %p79
        $region45: #{opnn_forward.3} parent=19 // pred_check_branch
          %288 = sbr.rel (%p286) target = $region47
        $region46: #{opnn_forward.3} parent=19 // pred_region
          %s289 = smul.u32 4, %s12
          %p290 = scmp.lt.s32.totalorder %s289, 11
          %s291 = scalar_select %p290, %s289, 11
          %s292 = scalar_lea.vmem %s2, %s291
          %s293 = smul.u32 4, %s12
        $region47: #{opnn_forward.3} parent=19 // pred_fallthru
          _
      $region20: #{opnn_forward.3} parent=5 // pred_fallthru
        _
      %p294 = scmp.le.s32.totalorder 1, %s12
      %p295 = scmp.lt.s32.totalorder %s12, 4
      %p296 = pnand %p294, %p295
      %p297 = pneg %p296
      // Predicated region
      $region48: #{opnn_forward.3} parent=5 // pred_check
        _
      $region49: #{opnn_forward.3} parent=5 // pred_check_branch
        %299 = sbr.rel (%p296) target = $region51
      $region50: #{opnn_forward.3} parent=5 // pred_region
        %s300 = ssub.s32 %s12, 1
        %s301 = sand.u32 %s46, 1
        %s302 = sand.u32 %s46, 1
        %s303 = smul.addr %s302, 512
        %s304 = scalar_lea.vmem [#allocation2], %s303
        // Predicated region
        $region52: #{opnn_forward.3} parent=50 // pred_check
          %p305 = pneg %p59
        $region53: #{opnn_forward.3} parent=50 // pred_check_branch
          %307 = sbr.rel (%p305) target = $region55
        $region54: #{opnn_forward.3} parent=50 // pred_region
          _
        $region55: #{opnn_forward.3} parent=50 // pred_fallthru
          _
        %p308 = pneg %p33
        %p309 = pneg %p30
        %s310 = sand.u32 %s46, 1
        %s311 = sand.u32 %s46, 1
        %s312 = smul.addr %s311, 512
        %s313 = scalar_lea.vmem [#allocation2], %s312
        %p314 = pneg %p59
        %p315 = pneg %p56
        %s316 = smul.u32 4, %s17
        %p317 = scmp.lt.s32.totalorder %s316, 11
        %s318 = scalar_select %p317, %s316, 11
        %s319 = scalar_lea.vmem %s2, %s318
        %p320 = pneg %p85
        %p321 = pneg %p82
        %p322 = pneg %p111
        %p323 = pneg %p108
        %s324 = sand.u32 %s98, 1
        %s325 = scalar_lea.sflag [#allocation4], %s324
        %s326 = sand.u32 %s98, 1
        %s327 = smul.addr %s326, 8
        %s328 = scalar_lea.vmem [#allocation3], %s327
        %s329 = smul.u32 4, %s17
        %s330 = smul.u32 4, %s17
        %p331 = scmp.lt.s32.totalorder %s330, 11
        %s332 = scalar_select %p331, %s330, 11
        %s333 = scalar_lea.vmem %s2, %s332
        %s334 = smul.u32 4, %s17
        %s335 = smul.u32 4, %s17
        %v336 = vld [vmem:[%s0] sm:$0xf]
        %v337 = vld [vmem:[%s304] sm:$0xff]
        %v338 = vld [vmem:[%s304 + $0x8] sm:$0xff]
        %v339 = vld [vmem:[%s304 + $0x10] sm:$0xff]
        %v340 = vld [vmem:[%s304 + $0x18] sm:$0xff]
        %v341 = vld [vmem:[%s304 + $0x20] sm:$0xff]
        %v342 = vld [vmem:[%s304 + $0x28] sm:$0xff]
        %v343 = vld [vmem:[%s304 + $0x30] sm:$0xff]
        %v344 = vld [vmem:[%s304 + $0x38] sm:$0xff]
        %v345 = vld [vmem:[%s304 + $0x40] sm:$0xff]
        %v346 = vld [vmem:[%s304 + $0x48] sm:$0xff]
        %v347 = vld [vmem:[%s304 + $0x50] sm:$0xff]
        %v348 = vld [vmem:[%s304 + $0x58] sm:$0xff]
        %v349 = vld [vmem:[%s304 + $0x60] sm:$0xff]
        %v350 = vld [vmem:[%s304 + $0x68] sm:$0xff]
        %v351 = vld [vmem:[%s304 + $0x70] sm:$0xff]
        %v352 = vld [vmem:[%s304 + $0x78] sm:$0xff]
        %v353 = vld [vmem:[%s304 + $0x80] sm:$0xff]
        %v354 = vld [vmem:[%s304 + $0x88] sm:$0xff]
        %v355 = vld [vmem:[%s304 + $0x90] sm:$0xff]
        %v356 = vld [vmem:[%s304 + $0x98] sm:$0xff]
        %v357 = vld [vmem:[%s304 + $0xa0] sm:$0xff]
        %v358 = vld [vmem:[%s304 + $0xa8] sm:$0xff]
        %v359 = vld [vmem:[%s304 + $0xb0] sm:$0xff]
        %v360 = vld [vmem:[%s304 + $0xb8] sm:$0xff]
        %v361 = vld [vmem:[%s304 + $0xc0] sm:$0xff]
        %v362 = vld [vmem:[%s304 + $0xc8] sm:$0xff]
        %v363 = vld [vmem:[%s304 + $0xd0] sm:$0xff]
        %v364 = vld [vmem:[%s304 + $0xd8] sm:$0xff]
        %v365 = vld [vmem:[%s304 + $0xe0] sm:$0xff]
        %v366 = vld [vmem:[%s304 + $0xe8] sm:$0xff]
        %v367 = vld [vmem:[%s304 + $0xf0] sm:$0xff]
        %v368 = vld [vmem:[%s304 + $0xf8] sm:$0xff]
        %v369 = vld [vmem:[%s304 + $0x100] sm:$0xff]
        %v370 = vld [vmem:[%s304 + $0x108] sm:$0xff]
        %v371 = vld [vmem:[%s304 + $0x110] sm:$0xff]
        %v372 = vld [vmem:[%s304 + $0x118] sm:$0xff]
        %v373 = vld [vmem:[%s304 + $0x120] sm:$0xff]
        %v374 = vld [vmem:[%s304 + $0x128] sm:$0xff]
        %v375 = vld [vmem:[%s304 + $0x130] sm:$0xff]
        %v376 = vld [vmem:[%s304 + $0x138] sm:$0xff]
        %v377 = vld [vmem:[%s304 + $0x140] sm:$0xff]
        %v378 = vld [vmem:[%s304 + $0x148] sm:$0xff]
        %v379 = vld [vmem:[%s304 + $0x150] sm:$0xff]
        %v380 = vld [vmem:[%s304 + $0x158] sm:$0xff]
        %v381 = vld [vmem:[%s304 + $0x160] sm:$0xff]
        %v382 = vld [vmem:[%s304 + $0x168] sm:$0xff]
        %v383 = vld [vmem:[%s304 + $0x170] sm:$0xff]
        %v384 = vld [vmem:[%s304 + $0x178] sm:$0xff]
        %v385 = vld [vmem:[%s304 + $0x180] sm:$0xff]
        %v386 = vld [vmem:[%s304 + $0x188] sm:$0xff]
        %v387 = vld [vmem:[%s304 + $0x190] sm:$0xff]
        %v388 = vld [vmem:[%s304 + $0x198] sm:$0xff]
        %v389 = vld [vmem:[%s304 + $0x1a0] sm:$0xff]
        %v390 = vld [vmem:[%s304 + $0x1a8] sm:$0xff]
        %v391 = vld [vmem:[%s304 + $0x1b0] sm:$0xff]
        %v392 = vld [vmem:[%s304 + $0x1b8] sm:$0xff]
        %v393 = vld [vmem:[%s304 + $0x1c0] sm:$0xff]
        %v394 = vld [vmem:[%s304 + $0x1c8] sm:$0xff]
        %v395 = vld [vmem:[%s304 + $0x1d0] sm:$0xff]
        %v396 = vld [vmem:[%s304 + $0x1d8] sm:$0xff]
        %v397 = vld [vmem:[%s304 + $0x1e0] sm:$0xff]
        %v398 = vld [vmem:[%s304 + $0x1e8] sm:$0xff]
        %v399 = vld [vmem:[%s304 + $0x1f0] sm:$0xff]
        %v400 = vld [vmem:[%s304 + $0x1f8] sm:$0xff]
        %v401 = vunpack.c.l.bf16 %v337
        %v402 = vunpack.c.h.bf16 %v337
        %v403 = vunpack.c.l.bf16 %v338
        %v404 = vunpack.c.h.bf16 %v338
        %v405 = vunpack.c.l.bf16 %v339
        %v406 = vunpack.c.h.bf16 %v339
        %v407 = vunpack.c.l.bf16 %v340
        %v408 = vunpack.c.h.bf16 %v340
        %v409 = vunpack.c.l.bf16 %v341
        %v410 = vunpack.c.h.bf16 %v341
        %v411 = vunpack.c.l.bf16 %v342
        %v412 = vunpack.c.h.bf16 %v342
        %v413 = vunpack.c.l.bf16 %v343
        %v414 = vunpack.c.h.bf16 %v343
        %v415 = vunpack.c.l.bf16 %v344
        %v416 = vunpack.c.h.bf16 %v344
        %v417 = vunpack.c.l.bf16 %v345
        %v418 = vunpack.c.h.bf16 %v345
        %v419 = vunpack.c.l.bf16 %v346
        %v420 = vunpack.c.h.bf16 %v346
        %v421 = vunpack.c.l.bf16 %v347
        %v422 = vunpack.c.h.bf16 %v347
        %v423 = vunpack.c.l.bf16 %v348
        %v424 = vunpack.c.h.bf16 %v348
        %v425 = vunpack.c.l.bf16 %v349
        %v426 = vunpack.c.h.bf16 %v349
        %v427 = vunpack.c.l.bf16 %v350
        %v428 = vunpack.c.h.bf16 %v350
        %v429 = vunpack.c.l.bf16 %v351
        %v430 = vunpack.c.h.bf16 %v351
        %v431 = vunpack.c.l.bf16 %v352
        %v432 = vunpack.c.h.bf16 %v352
        %v433 = vunpack.c.l.bf16 %v353
        %v434 = vunpack.c.h.bf16 %v353
        %v435 = vunpack.c.l.bf16 %v354
        %v436 = vunpack.c.h.bf16 %v354
        %v437 = vunpack.c.l.bf16 %v355
        %v438 = vunpack.c.h.bf16 %v355
        %v439 = vunpack.c.l.bf16 %v356
        %v440 = vunpack.c.h.bf16 %v356
        %v441 = vunpack.c.l.bf16 %v357
        %v442 = vunpack.c.h.bf16 %v357
        %v443 = vunpack.c.l.bf16 %v358
        %v444 = vunpack.c.h.bf16 %v358
        %v445 = vunpack.c.l.bf16 %v359
        %v446 = vunpack.c.h.bf16 %v359
        %v447 = vunpack.c.l.bf16 %v360
        %v448 = vunpack.c.h.bf16 %v360
        %v449 = vunpack.c.l.bf16 %v361
        %v450 = vunpack.c.h.bf16 %v361
        %v451 = vunpack.c.l.bf16 %v362
        %v452 = vunpack.c.h.bf16 %v362
        %v453 = vunpack.c.l.bf16 %v363
        %v454 = vunpack.c.h.bf16 %v363
        %v455 = vunpack.c.l.bf16 %v364
        %v456 = vunpack.c.h.bf16 %v364
        %v457 = vunpack.c.l.bf16 %v365
        %v458 = vunpack.c.h.bf16 %v365
        %v459 = vunpack.c.l.bf16 %v366
        %v460 = vunpack.c.h.bf16 %v366
        %v461 = vunpack.c.l.bf16 %v367
        %v462 = vunpack.c.h.bf16 %v367
        %v463 = vunpack.c.l.bf16 %v368
        %v464 = vunpack.c.h.bf16 %v368
        %v465 = vunpack.c.l.bf16 %v369
        %v466 = vunpack.c.h.bf16 %v369
        %v467 = vunpack.c.l.bf16 %v370
        %v468 = vunpack.c.h.bf16 %v370
        %v469 = vunpack.c.l.bf16 %v371
        %v470 = vunpack.c.h.bf16 %v371
        %v471 = vunpack.c.l.bf16 %v372
        %v472 = vunpack.c.h.bf16 %v372
        %v473 = vunpack.c.l.bf16 %v373
        %v474 = vunpack.c.h.bf16 %v373
        %v475 = vunpack.c.l.bf16 %v374
        %v476 = vunpack.c.h.bf16 %v374
        %v477 = vunpack.c.l.bf16 %v375
        %v478 = vunpack.c.h.bf16 %v375
        %v479 = vunpack.c.l.bf16 %v376
        %v480 = vunpack.c.h.bf16 %v376
        %v481 = vunpack.c.l.bf16 %v377
        %v482 = vunpack.c.h.bf16 %v377
        %v483 = vunpack.c.l.bf16 %v378
        %v484 = vunpack.c.h.bf16 %v378
        %v485 = vunpack.c.l.bf16 %v379
        %v486 = vunpack.c.h.bf16 %v379
        %v487 = vunpack.c.l.bf16 %v380
        %v488 = vunpack.c.h.bf16 %v380
        %v489 = vunpack.c.l.bf16 %v381
        %v490 = vunpack.c.h.bf16 %v381
        %v491 = vunpack.c.l.bf16 %v382
        %v492 = vunpack.c.h.bf16 %v382
        %v493 = vunpack.c.l.bf16 %v383
        %v494 = vunpack.c.h.bf16 %v383
        %v495 = vunpack.c.l.bf16 %v384
        %v496 = vunpack.c.h.bf16 %v384
        %v497 = vunpack.c.l.bf16 %v385
        %v498 = vunpack.c.h.bf16 %v385
        %v499 = vunpack.c.l.bf16 %v386
        %v500 = vunpack.c.h.bf16 %v386
        %v501 = vunpack.c.l.bf16 %v387
        %v502 = vunpack.c.h.bf16 %v387
        %v503 = vunpack.c.l.bf16 %v388
        %v504 = vunpack.c.h.bf16 %v388
        %v505 = vunpack.c.l.bf16 %v389
        %v506 = vunpack.c.h.bf16 %v389
        %v507 = vunpack.c.l.bf16 %v390
        %v508 = vunpack.c.h.bf16 %v390
        %v509 = vunpack.c.l.bf16 %v391
        %v510 = vunpack.c.h.bf16 %v391
        %v511 = vunpack.c.l.bf16 %v392
        %v512 = vunpack.c.h.bf16 %v392
        %v513 = vunpack.c.l.bf16 %v393
        %v514 = vunpack.c.h.bf16 %v393
        %v515 = vunpack.c.l.bf16 %v394
        %v516 = vunpack.c.h.bf16 %v394
        %v517 = vunpack.c.l.bf16 %v395
        %v518 = vunpack.c.h.bf16 %v395
        %v519 = vunpack.c.l.bf16 %v396
        %v520 = vunpack.c.h.bf16 %v396
        %v521 = vunpack.c.l.bf16 %v397
        %v522 = vunpack.c.h.bf16 %v397
        %v523 = vunpack.c.l.bf16 %v398
        %v524 = vunpack.c.h.bf16 %v398
        %v525 = vunpack.c.l.bf16 %v399
        %v526 = vunpack.c.h.bf16 %v399
        %v527 = vunpack.c.l.bf16 %v400
        %v528 = vunpack.c.h.bf16 %v400
        %v529 = vld [vmem:[%s333] sm:$0xf]
        %v531 = vlaneseq
        %v532 = vshrl.u32 %v531, 7
        %v533 = vsub.s32 0, %v532
        %v534 = vrot.slane %v529, %v533
        %v535 = vlaneseq
        %v536 = vshrl.u32 %v535, 7
        %v537 = vsub.s32 1, %v536
        %v538 = vrot.slane %v529, %v537
        %v539 = vlaneseq
        %v540 = vshrl.u32 %v539, 7
        %v541 = vsub.s32 2, %v540
        %v542 = vrot.slane %v529, %v541
        %v543 = vlaneseq
        %v544 = vshrl.u32 %v543, 7
        %v545 = vsub.s32 3, %v544
        %v546 = vrot.slane %v529, %v545
        %v553 = vunpack.c.l.s4 1983009808
        %v554 = vunpack.c.0.s8 %v553
        %v555 = vlaneseq
        %v556 = vshrl.u32 %v555, 7
        %v557 = vsub.s32 %v554, %v556
        %v558 = vrot.slane %v336, %v557
        %v559 = vcombine.high %v558, %v558
        %562 = vmatprep.subr.mxu0 %v462
        %563 = vmatpush1.msra.mxu0 %v461
        %564 = vmatprep.subr.mxu0 %v458
        %565 = vmatpush1.msra.mxu0 %v457
        %566 = vmatprep.subr.mxu0 %v454
        %567 = vmatpush1.msra.mxu0 %v453
        %568 = vmatprep.subr.mxu0 %v450
        %569 = vmatpush1.msra.mxu0 %v449
        %570 = vmatprep.subr.mxu0 %v446
        %571 = vmatpush1.msra.mxu0 %v445
        %572 = vmatprep.subr.mxu0 %v442
        %573 = vmatpush1.msra.mxu0 %v441
        %574 = vmatprep.subr.mxu0 %v438
        %575 = vmatpush1.msra.mxu0 %v437
        %576 = vmatprep.subr.mxu0 %v434
        %577 = vmatpush1.msra.mxu0 %v433
        %578 = vmatprep.subr.mxu0 %v430
        %579 = vmatpush1.msra.mxu0 %v429
        %580 = vmatprep.subr.mxu0 %v426
        %581 = vmatpush1.msra.mxu0 %v425
        %582 = vmatprep.subr.mxu0 %v422
        %583 = vmatpush1.msra.mxu0 %v421
        %584 = vmatprep.subr.mxu0 %v418
        %585 = vmatpush1.msra.mxu0 %v417
        %586 = vmatprep.subr.mxu0 %v414
        %587 = vmatpush1.msra.mxu0 %v413
        %588 = vmatprep.subr.mxu0 %v410
        %589 = vmatpush1.msra.mxu0 %v409
        %590 = vmatprep.subr.mxu0 %v406
        %591 = vmatpush1.msra.mxu0 %v405
        %592 = vmatprep.subr.mxu0 %v402
        %593 = vmatpush1.msra.mxu0 %v401
        %594 = vmatprep.subr.mxu0 %v526
        %595 = vmatpush2.msra.mxu0 %v525
        %596 = vmatprep.subr.mxu0 %v522
        %597 = vmatpush2.msra.mxu0 %v521
        %598 = vmatprep.subr.mxu0 %v518
        %599 = vmatpush2.msra.mxu0 %v517
        %600 = vmatprep.subr.mxu0 %v514
        %601 = vmatpush2.msra.mxu0 %v513
        %602 = vmatprep.subr.mxu0 %v510
        %603 = vmatpush2.msra.mxu0 %v509
        %604 = vmatprep.subr.mxu0 %v506
        %605 = vmatpush2.msra.mxu0 %v505
        %606 = vmatprep.subr.mxu0 %v502
        %607 = vmatpush2.msra.mxu0 %v501
        %608 = vmatprep.subr.mxu0 %v498
        %609 = vmatpush2.msra.mxu0 %v497
        %610 = vmatprep.subr.mxu0 %v494
        %611 = vmatpush2.msra.mxu0 %v493
        %612 = vmatprep.subr.mxu0 %v490
        %613 = vmatpush2.msra.mxu0 %v489
        %614 = vmatprep.subr.mxu0 %v486
        %615 = vmatpush2.msra.mxu0 %v485
        %616 = vmatprep.subr.mxu0 %v482
        %617 = vmatpush2.msra.mxu0 %v481
        %618 = vmatprep.subr.mxu0 %v478
        %619 = vmatpush2.msra.mxu0 %v477
        %620 = vmatprep.subr.mxu0 %v474
        %621 = vmatpush2.msra.mxu0 %v473
        %622 = vmatprep.subr.mxu0 %v470
        %623 = vmatpush2.msra.mxu0 %v469
        %624 = vmatprep.subr.mxu0 %v466
        %625 = vmatpush2.msra.mxu0 %v465
        %626 = vmatprep.mubr.f32.mxu0 %v559
        %627 = vmatmul.mubr.f32.gmra.mxu0 %v558
        %v628 = vpop.f32.mrf.mxu0
        %v629 = vadd.f32 %v534, %v628
        %v630 = vpop.f32.mrf.mxu0
        %v631 = vadd.f32 %v538, %v630
        %632 = vdwg.mxu0
        %633 = vmatprep.subr.mxu0 %v464
        %634 = vmatpush1.msra.mxu0 %v463
        %635 = vmatprep.subr.mxu0 %v460
        %636 = vmatpush1.msra.mxu0 %v459
        %637 = vmatprep.subr.mxu0 %v456
        %638 = vmatpush1.msra.mxu0 %v455
        %639 = vmatprep.subr.mxu0 %v452
        %640 = vmatpush1.msra.mxu0 %v451
        %641 = vmatprep.subr.mxu0 %v448
        %642 = vmatpush1.msra.mxu0 %v447
        %643 = vmatprep.subr.mxu0 %v444
        %644 = vmatpush1.msra.mxu0 %v443
        %645 = vmatprep.subr.mxu0 %v440
        %646 = vmatpush1.msra.mxu0 %v439
        %647 = vmatprep.subr.mxu0 %v436
        %648 = vmatpush1.msra.mxu0 %v435
        %649 = vmatprep.subr.mxu0 %v432
        %650 = vmatpush1.msra.mxu0 %v431
        %651 = vmatprep.subr.mxu0 %v428
        %652 = vmatpush1.msra.mxu0 %v427
        %653 = vmatprep.subr.mxu0 %v424
        %654 = vmatpush1.msra.mxu0 %v423
        %655 = vmatprep.subr.mxu0 %v420
        %656 = vmatpush1.msra.mxu0 %v419
        %657 = vmatprep.subr.mxu0 %v416
        %658 = vmatpush1.msra.mxu0 %v415
        %659 = vmatprep.subr.mxu0 %v412
        %660 = vmatpush1.msra.mxu0 %v411
        %661 = vmatprep.subr.mxu0 %v408
        %662 = vmatpush1.msra.mxu0 %v407
        %663 = vmatprep.subr.mxu0 %v404
        %664 = vmatpush1.msra.mxu0 %v403
        %665 = vmatprep.subr.mxu0 %v528
        %666 = vmatpush2.msra.mxu0 %v527
        %667 = vmatprep.subr.mxu0 %v524
        %668 = vmatpush2.msra.mxu0 %v523
        %669 = vmatprep.subr.mxu0 %v520
        %670 = vmatpush2.msra.mxu0 %v519
        %671 = vmatprep.subr.mxu0 %v516
        %672 = vmatpush2.msra.mxu0 %v515
        %673 = vmatprep.subr.mxu0 %v512
        %674 = vmatpush2.msra.mxu0 %v511
        %675 = vmatprep.subr.mxu0 %v508
        %676 = vmatpush2.msra.mxu0 %v507
        %677 = vmatprep.subr.mxu0 %v504
        %678 = vmatpush2.msra.mxu0 %v503
        %679 = vmatprep.subr.mxu0 %v500
        %680 = vmatpush2.msra.mxu0 %v499
        %681 = vmatprep.subr.mxu0 %v496
        %682 = vmatpush2.msra.mxu0 %v495
        %683 = vmatprep.subr.mxu0 %v492
        %684 = vmatpush2.msra.mxu0 %v491
        %685 = vmatprep.subr.mxu0 %v488
        %686 = vmatpush2.msra.mxu0 %v487
        %687 = vmatprep.subr.mxu0 %v484
        %688 = vmatpush2.msra.mxu0 %v483
        %689 = vmatprep.subr.mxu0 %v480
        %690 = vmatpush2.msra.mxu0 %v479
        %691 = vmatprep.subr.mxu0 %v476
        %692 = vmatpush2.msra.mxu0 %v475
        %693 = vmatprep.subr.mxu0 %v472
        %694 = vmatpush2.msra.mxu0 %v471
        %695 = vmatprep.subr.mxu0 %v468
        %696 = vmatpush2.msra.mxu0 %v467
        %697 = vmatprep.mubr.f32.mxu0 %v559
        %698 = vmatmul.mubr.f32.gmra.mxu0 %v558
        %v699 = vpop.f32.mrf.mxu0
        %v700 = vadd.f32 %v542, %v699
        %v701 = vpop.f32.mrf.mxu0
        %v702 = vadd.f32 %v546, %v701
        %703 = vdwg.mxu0
        %v708 = vcombine.low %v629, %v631
        %v709 = vcombine.low %v700, %v702
        %v711 = vunpack.c.l.s4 1983009808
        %v712 = vunpack.c.0.s8 %v711
        %v713 = vlaneseq
        %v714 = vshrl.u32 %v713, 7
        %v715 = vsub.s32 %v712, %v714
        %v716 = vrot.slane %v708, %v715
        %v718 = vunpack.c.l.s4 1983009808
        %v719 = vunpack.c.0.s8 %v718
        %v720 = vlaneseq
        %v721 = vshrl.u32 %v720, 7
        %v722 = vsub.s32 %v719, %v721
        %v723 = vrot.slane %v709, %v722
        %v724 = vcombine.low %v716, %v723
        %726 = vst [vmem:[%s328] sm:$0xff] %v724
        %s727 = sand.u32 %s98, 1
        %s728 = scalar_lea.sflag [#allocation4], %s727
        %s729 = sand.u32 %s98, 1
        %s730 = smul.addr %s729, 8
        %s731 = scalar_lea.vmem [#allocation3], %s730
        // Predicated region
        $region56: #{opnn_forward.3} parent=50 // pred_check
          %p732 = pneg %p108
        $region57: #{opnn_forward.3} parent=50 // pred_check_branch
          %734 = sbr.rel (%p732) target = $region59
        $region58: #{opnn_forward.3} parent=50 // pred_region
          %s735 = smul.u32 4, %s17
          %s737 = ssub.s32 128, 128
          %738 = vsyncadd %s728, %s737
          %s739 = smul.addr %s735, 32
          %s740 = scalar_lea.hbm %s3, %s739
          %s742 = sshll.u32 %s731, 4
          %s743 = int_to_ptr.vmem [resolvable:$true] %s742
          %745 = dma.vmem_to_hbm [thread:$0]  %s743, 128, %s740, %s728
        $region59: #{opnn_forward.3} parent=50 // pred_fallthru
          _
      $region51: #{opnn_forward.3} parent=5 // pred_fallthru
        _
      %p746 = scmp.le.s32.totalorder 2, %s12
      // Predicated region
      $region60: #{opnn_forward.3} parent=5 // pred_check
        %p747 = pneg %p746
      $region61: #{opnn_forward.3} parent=5 // pred_check_branch
        %749 = sbr.rel (%p747) target = $region63
      $region62: #{opnn_forward.3} parent=5 // pred_region
        %s750 = ssub.s32 %s12, 2
        // Predicated region
        $region64: #{opnn_forward.3} parent=62 // pred_check
          %p751 = pneg %p114
        $region65: #{opnn_forward.3} parent=62 // pred_check_branch
          %753 = sbr.rel (%p751) target = $region67
        $region66: #{opnn_forward.3} parent=62 // pred_region
          %s754 = sand.u32 %s99, 1
          %s755 = scalar_lea.sflag [#allocation4], %s754
          %s756 = sand.u32 %s99, 1
          %s757 = smul.addr %s756, 8
          %s758 = scalar_lea.vmem [#allocation3], %s757
          %759 = dma.done %s755, 128
        $region67: #{opnn_forward.3} parent=62 // pred_fallthru
          _
      $region63: #{opnn_forward.3} parent=5 // pred_fallthru
        _
    $region6: #{opnn_forward.3} parent=1 // loop_footer
      %s16 = sadd.s32 1, %s12
    $region7: #{opnn_forward.3} parent=1 // loop_footer_branch
      %11 = sbr.rel target = $region3
    $region8: #{opnn_forward.3} parent=1 // loop_exit
      _
    %760 = vsyncpa [#allocation4], 1
    %s761 = scalar_lea.sflag [#allocation4], 1
    %762 = vsyncpa %s761, 1

// kernel: opnn_forward.2
$region0: #{opnn_forward.2}
  #allocation0 [shape = 'u32[]', space=smem, size = 0x4, offset = 0x4, fixed_abs, tag = 'smem constant byte address 0x4 - core index']
  #allocation1 [shape = 'u32[144,128]{1,0:T(1,128)}', space=vmem, size = 0x12000, scoped, tag = 'internal scratch']
  #allocation2 [shape = 'f32[2,128]{1,0:T(2,128)}', space=vmem, size = 0x400, scoped, tag = 'scratch operand']
  %s0 = inlined_call_operand.vmem [shape: f32[2,18,196], index: 0, kind: input, shape index: {}]
  %s1 = inlined_call_operand.vmem [shape: f32[8,18], index: 1, kind: input, shape index: {}]
  %s2 = inlined_call_operand.vmem [shape: f32[8,1], index: 2, kind: input, shape index: {}]
  %s3 = inlined_call_operand.vmem [shape: f32[8,196,128], index: 3, kind: input, shape index: {}]
  %s4 = inlined_call_operand.vmem [shape: f32[1,128], index: 4, kind: input, shape index: {}]
  %s5 = inlined_call_operand.vmem [shape: f32[2,2], index: 5, kind: input, shape index: {}]
  %s6 = inlined_call_operand.vmem [shape: f32[2,128], index: 6, kind: input, shape index: {}]
  %s7 = inlined_call_operand.vmem [shape: f32[1,128], index: 7, kind: input, shape index: {}]
  %s8 = inlined_call_operand.vmem [shape: f32[2,512], index: 8, kind: input, shape index: {}]
  %s9 = inlined_call_operand.vmem [shape: bf16[512,128], index: 9, kind: input, shape index: {}]
  %s10 = inlined_call_operand.vmem [shape: f32[1,128], index: 10, kind: input, shape index: {}]
  %s11 = inlined_call_operand.vmem [shape: f32[2,256], index: 11, kind: output, shape index: {}]
  %s12 = sld [smem:[#allocation0]]
  $region85: #{opnn_forward.2} parent=0
    _
  %s14 = ssub.s32 1, %s12
  %s15 = scalar_select 0, %s14, %s12
  loop: start=0, step=1, limit=4
  $region2: #{opnn_forward.2} parent=0 // loop_pre_header
    _
  $region3: #{opnn_forward.2} parent=0 // loop_header
    %s17 = sphi 0, %s21
    %p18 = scmp.ge.s32.totalorder %s17, 4
    %s25 = sphi 0, %s25
    %s27 = sphi 0, %s25
    %s28 = sphi 0, %s27
    %s42 = sphi 0, %s28
    %s46 = sphi 0, %s46
    %s48 = sphi 0, %s46
    %s49 = sphi 0, %s48
    %s63 = sphi 0, %s49
    %s67 = sphi 0, %s67
    %s69 = sphi 0, %s67
    %s70 = sphi 0, %s69
    %s84 = sphi 0, %s70
    %s88 = sphi 0, %s88
    %s90 = sphi 0, %s88
    %s91 = sphi 0, %s90
    %s105 = sphi 0, %s91
    %s109 = sphi 0, %s109
    %s111 = sphi 0, %s109
    %s112 = sphi 0, %s111
    %s126 = sphi 0, %s112
    %s130 = sphi 0, %s130
    %s132 = sphi 0, %s130
    %s133 = sphi 0, %s132
    %s147 = sphi 0, %s133
    %s151 = sphi 0, %s151
    %s153 = sphi 0, %s151
    %s154 = sphi 0, %s153
    %s168 = sphi 0, %s154
    %s172 = sphi 0, %s172
    %s174 = sphi 0, %s172
    %s175 = sphi 0, %s174
    %s189 = sphi 0, %s175
    %s195 = sphi 0, %s197
    %s198 = sphi 0, %s195
    %s199 = sphi 0, %s198
    %s215 = sphi 0, %s199
    %s221 = sphi 0, %s223
    %s224 = sphi 0, %s221
    %s225 = sphi 0, %s224
    %s241 = sphi 0, %s225
    %s245 = sphi 0, %s245
    %s247 = sphi 0, %s245
    %s248 = sphi 0, %s247
    %s262 = sphi 0, %s248
    %s266 = sphi 0, %s266
    %s268 = sphi 0, %s266
    %s269 = sphi 0, %s268
    %s283 = sphi 0, %s269
  $region4: #{opnn_forward.2} parent=0 // loop_header_branch
    %20 = sbr.rel (%p18) target = $region8
  $region5: #{opnn_forward.2} parent=0 // loop_body
    %s22 = ssub.s32 %s17, 1
    %s23 = ssub.s32 %s17, 2
    %s24 = sadd.s32 %s17, 1
    %s26 = sadd.s32 %s25, 1
    %p29 = scmp.eq.s32.totalorder %s17, 1
    %p30 = scmp.ne.s32.totalorder %s25, %s27
    %p31 = scmp.eq.s32.totalorder %s17, 0
    %p32 = por %p30, %p31
    %p33 = scmp.ne.s32.totalorder %s25, %s27
    %p34 = scmp.eq.s32.totalorder %s22, 1
    %p35 = por %p33, %p34
    %p36 = scmp.ne.s32.totalorder %s27, %s28
    %p37 = scmp.eq.s32.totalorder %s22, 0
    %p38 = por %p36, %p37
    %p39 = scmp.ne.s32.totalorder %s27, %s28
    %p40 = scmp.eq.s32.totalorder %s23, 1
    %p41 = por %p39, %p40
    %p43 = scmp.ne.s32.totalorder %s28, %s42
    %p44 = scmp.eq.s32.totalorder %s23, 0
    %p45 = por %p43, %p44
    %s47 = sadd.s32 %s46, 1
    %p50 = scmp.eq.s32.totalorder %s17, 1
    %p51 = scmp.ne.s32.totalorder %s46, %s48
    %p52 = scmp.eq.s32.totalorder %s17, 0
    %p53 = por %p51, %p52
    %p54 = scmp.ne.s32.totalorder %s46, %s48
    %p55 = scmp.eq.s32.totalorder %s22, 1
    %p56 = por %p54, %p55
    %p57 = scmp.ne.s32.totalorder %s48, %s49
    %p58 = scmp.eq.s32.totalorder %s22, 0
    %p59 = por %p57, %p58
    %p60 = scmp.ne.s32.totalorder %s48, %s49
    %p61 = scmp.eq.s32.totalorder %s23, 1
    %p62 = por %p60, %p61
    %p64 = scmp.ne.s32.totalorder %s49, %s63
    %p65 = scmp.eq.s32.totalorder %s23, 0
    %p66 = por %p64, %p65
    %s68 = sadd.s32 %s67, 1
    %p71 = scmp.eq.s32.totalorder %s17, 1
    %p72 = scmp.ne.s32.totalorder %s67, %s69
    %p73 = scmp.eq.s32.totalorder %s17, 0
    %p74 = por %p72, %p73
    %p75 = scmp.ne.s32.totalorder %s67, %s69
    %p76 = scmp.eq.s32.totalorder %s22, 1
    %p77 = por %p75, %p76
    %p78 = scmp.ne.s32.totalorder %s69, %s70
    %p79 = scmp.eq.s32.totalorder %s22, 0
    %p80 = por %p78, %p79
    %p81 = scmp.ne.s32.totalorder %s69, %s70
    %p82 = scmp.eq.s32.totalorder %s23, 1
    %p83 = por %p81, %p82
    %p85 = scmp.ne.s32.totalorder %s70, %s84
    %p86 = scmp.eq.s32.totalorder %s23, 0
    %p87 = por %p85, %p86
    %s89 = sadd.s32 %s88, 1
    %p92 = scmp.eq.s32.totalorder %s17, 1
    %p93 = scmp.ne.s32.totalorder %s88, %s90
    %p94 = scmp.eq.s32.totalorder %s17, 0
    %p95 = por %p93, %p94
    %p96 = scmp.ne.s32.totalorder %s88, %s90
    %p97 = scmp.eq.s32.totalorder %s22, 1
    %p98 = por %p96, %p97
    %p99 = scmp.ne.s32.totalorder %s90, %s91
    %p100 = scmp.eq.s32.totalorder %s22, 0
    %p101 = por %p99, %p100
    %p102 = scmp.ne.s32.totalorder %s90, %s91
    %p103 = scmp.eq.s32.totalorder %s23, 1
    %p104 = por %p102, %p103
    %p106 = scmp.ne.s32.totalorder %s91, %s105
    %p107 = scmp.eq.s32.totalorder %s23, 0
    %p108 = por %p106, %p107
    %s110 = sadd.s32 %s109, 1
    %p113 = scmp.eq.s32.totalorder %s17, 1
    %p114 = scmp.ne.s32.totalorder %s109, %s111
    %p115 = scmp.eq.s32.totalorder %s17, 0
    %p116 = por %p114, %p115
    %p117 = scmp.ne.s32.totalorder %s109, %s111
    %p118 = scmp.eq.s32.totalorder %s22, 1
    %p119 = por %p117, %p118
    %p120 = scmp.ne.s32.totalorder %s111, %s112
    %p121 = scmp.eq.s32.totalorder %s22, 0
    %p122 = por %p120, %p121
    %p123 = scmp.ne.s32.totalorder %s111, %s112
    %p124 = scmp.eq.s32.totalorder %s23, 1
    %p125 = por %p123, %p124
    %p127 = scmp.ne.s32.totalorder %s112, %s126
    %p128 = scmp.eq.s32.totalorder %s23, 0
    %p129 = por %p127, %p128
    %s131 = sadd.s32 %s130, 1
    %p134 = scmp.eq.s32.totalorder %s17, 1
    %p135 = scmp.ne.s32.totalorder %s130, %s132
    %p136 = scmp.eq.s32.totalorder %s17, 0
    %p137 = por %p135, %p136
    %p138 = scmp.ne.s32.totalorder %s130, %s132
    %p139 = scmp.eq.s32.totalorder %s22, 1
    %p140 = por %p138, %p139
    %p141 = scmp.ne.s32.totalorder %s132, %s133
    %p142 = scmp.eq.s32.totalorder %s22, 0
    %p143 = por %p141, %p142
    %p144 = scmp.ne.s32.totalorder %s132, %s133
    %p145 = scmp.eq.s32.totalorder %s23, 1
    %p146 = por %p144, %p145
    %p148 = scmp.ne.s32.totalorder %s133, %s147
    %p149 = scmp.eq.s32.totalorder %s23, 0
    %p150 = por %p148, %p149
    %s152 = sadd.s32 %s151, 1
    %p155 = scmp.eq.s32.totalorder %s17, 1
    %p156 = scmp.ne.s32.totalorder %s151, %s153
    %p157 = scmp.eq.s32.totalorder %s17, 0
    %p158 = por %p156, %p157
    %p159 = scmp.ne.s32.totalorder %s151, %s153
    %p160 = scmp.eq.s32.totalorder %s22, 1
    %p161 = por %p159, %p160
    %p162 = scmp.ne.s32.totalorder %s153, %s154
    %p163 = scmp.eq.s32.totalorder %s22, 0
    %p164 = por %p162, %p163
    %p165 = scmp.ne.s32.totalorder %s153, %s154
    %p166 = scmp.eq.s32.totalorder %s23, 1
    %p167 = por %p165, %p166
    %p169 = scmp.ne.s32.totalorder %s154, %s168
    %p170 = scmp.eq.s32.totalorder %s23, 0
    %p171 = por %p169, %p170
    %s173 = sadd.s32 %s172, 1
    %p176 = scmp.eq.s32.totalorder %s17, 1
    %p177 = scmp.ne.s32.totalorder %s172, %s174
    %p178 = scmp.eq.s32.totalorder %s17, 0
    %p179 = por %p177, %p178
    %p180 = scmp.ne.s32.totalorder %s172, %s174
    %p181 = scmp.eq.s32.totalorder %s22, 1
    %p182 = por %p180, %p181
    %p183 = scmp.ne.s32.totalorder %s174, %s175
    %p184 = scmp.eq.s32.totalorder %s22, 0
    %p185 = por %p183, %p184
    %p186 = scmp.ne.s32.totalorder %s174, %s175
    %p187 = scmp.eq.s32.totalorder %s23, 1
    %p188 = por %p186, %p187
    %p190 = scmp.ne.s32.totalorder %s175, %s189
    %p191 = scmp.eq.s32.totalorder %s23, 0
    %p192 = por %p190, %p191
    %s193 = ssub.s32 %s17, %s24
    %p194 = scmp.eq.s32.totalorder %s193, 0
    %s196 = sadd.s32 %s195, 1
    %s197 = scalar_select %p194, %s195, %s196
    %p200 = pneg %p194
    %p201 = scmp.eq.s32.totalorder %s17, 1
    %p202 = por %p200, %p201
    %p203 = scmp.ne.s32.totalorder %s195, %s198
    %p204 = scmp.eq.s32.totalorder %s17, 0
    %p205 = por %p203, %p204
    %p206 = scmp.ne.s32.totalorder %s195, %s198
    %p207 = scmp.eq.s32.totalorder %s22, 1
    %p208 = por %p206, %p207
    %p209 = scmp.ne.s32.totalorder %s198, %s199
    %p210 = scmp.eq.s32.totalorder %s22, 0
    %p211 = por %p209, %p210
    %p212 = scmp.ne.s32.totalorder %s198, %s199
    %p213 = scmp.eq.s32.totalorder %s23, 1
    %p214 = por %p212, %p213
    %p216 = scmp.ne.s32.totalorder %s199, %s215
    %p217 = scmp.eq.s32.totalorder %s23, 0
    %p218 = por %p216, %p217
    %s219 = ssub.s32 %s17, %s24
    %p220 = scmp.eq.s32.totalorder %s219, 0
    %s222 = sadd.s32 %s221, 1
    %s223 = scalar_select %p220, %s221, %s222
    %p226 = pneg %p220
    %p227 = scmp.eq.s32.totalorder %s17, 1
    %p228 = por %p226, %p227
    %p229 = scmp.ne.s32.totalorder %s221, %s224
    %p230 = scmp.eq.s32.totalorder %s17, 0
    %p231 = por %p229, %p230
    %p232 = scmp.ne.s32.totalorder %s221, %s224
    %p233 = scmp.eq.s32.totalorder %s22, 1
    %p234 = por %p232, %p233
    %p235 = scmp.ne.s32.totalorder %s224, %s225
    %p236 = scmp.eq.s32.totalorder %s22, 0
    %p237 = por %p235, %p236
    %p238 = scmp.ne.s32.totalorder %s224, %s225
    %p239 = scmp.eq.s32.totalorder %s23, 1
    %p240 = por %p238, %p239
    %p242 = scmp.ne.s32.totalorder %s225, %s241
    %p243 = scmp.eq.s32.totalorder %s23, 0
    %p244 = por %p242, %p243
    %s246 = sadd.s32 %s245, 1
    %p249 = scmp.eq.s32.totalorder %s17, 1
    %p250 = scmp.ne.s32.totalorder %s245, %s247
    %p251 = scmp.eq.s32.totalorder %s17, 0
    %p252 = por %p250, %p251
    %p253 = scmp.ne.s32.totalorder %s245, %s247
    %p254 = scmp.eq.s32.totalorder %s22, 1
    %p255 = por %p253, %p254
    %p256 = scmp.ne.s32.totalorder %s247, %s248
    %p257 = scmp.eq.s32.totalorder %s22, 0
    %p258 = por %p256, %p257
    %p259 = scmp.ne.s32.totalorder %s247, %s248
    %p260 = scmp.eq.s32.totalorder %s23, 1
    %p261 = por %p259, %p260
    %p263 = scmp.ne.s32.totalorder %s248, %s262
    %p264 = scmp.eq.s32.totalorder %s23, 0
    %p265 = por %p263, %p264
    %s267 = sadd.s32 %s266, 1
    %p270 = scmp.eq.s32.totalorder %s17, 1
    %p271 = scmp.ne.s32.totalorder %s266, %s268
    %p272 = scmp.eq.s32.totalorder %s17, 0
    %p273 = por %p271, %p272
    %p274 = scmp.ne.s32.totalorder %s266, %s268
    %p275 = scmp.eq.s32.totalorder %s22, 1
    %p276 = por %p274, %p275
    %p277 = scmp.ne.s32.totalorder %s268, %s269
    %p278 = scmp.eq.s32.totalorder %s22, 0
    %p279 = por %p277, %p278
    %p280 = scmp.ne.s32.totalorder %s268, %s269
    %p281 = scmp.eq.s32.totalorder %s23, 1
    %p282 = por %p280, %p281
    %p284 = scmp.ne.s32.totalorder %s269, %s283
    %p285 = scmp.eq.s32.totalorder %s23, 0
    %p286 = por %p284, %p285
    %p287 = scmp.le.s32.totalorder 1, %s17
    %p288 = scmp.lt.s32.totalorder %s17, 3
    %p289 = pnand %p287, %p288
    %p290 = pneg %p289
    // Predicated region
    $region9: #{opnn_forward.2} parent=5 // pred_check
      _
    $region10: #{opnn_forward.2} parent=5 // pred_check_branch
      %292 = sbr.rel (%p289) target = $region12
    $region11: #{opnn_forward.2} parent=5 // pred_region
      %s293 = ssub.s32 %s17, 1
      // Predicated region
      $region13: #{opnn_forward.2} parent=11 // pred_check
        %p294 = pneg %p38
      $region14: #{opnn_forward.2} parent=11 // pred_check_branch
        %296 = sbr.rel (%p294) target = $region16
      $region15: #{opnn_forward.2} parent=11 // pred_region
        _
      $region16: #{opnn_forward.2} parent=11 // pred_fallthru
        _
      // Predicated region
      $region17: #{opnn_forward.2} parent=11 // pred_check
        %p297 = pneg %p59
      $region18: #{opnn_forward.2} parent=11 // pred_check_branch
        %299 = sbr.rel (%p297) target = $region20
      $region19: #{opnn_forward.2} parent=11 // pred_region
        _
      $region20: #{opnn_forward.2} parent=11 // pred_fallthru
        _
      // Predicated region
      $region21: #{opnn_forward.2} parent=11 // pred_check
        %p300 = pneg %p80
      $region22: #{opnn_forward.2} parent=11 // pred_check_branch
        %302 = sbr.rel (%p300) target = $region24
      $region23: #{opnn_forward.2} parent=11 // pred_region
        _
      $region24: #{opnn_forward.2} parent=11 // pred_fallthru
        _
      // Predicated region
      $region25: #{opnn_forward.2} parent=11 // pred_check
        %p303 = pneg %p101
      $region26: #{opnn_forward.2} parent=11 // pred_check_branch
        %305 = sbr.rel (%p303) target = $region28
      $region27: #{opnn_forward.2} parent=11 // pred_region
        _
      $region28: #{opnn_forward.2} parent=11 // pred_fallthru
        _
      // Predicated region
      $region29: #{opnn_forward.2} parent=11 // pred_check
        %p306 = pneg %p122
      $region30: #{opnn_forward.2} parent=11 // pred_check_branch
        %308 = sbr.rel (%p306) target = $region32
      $region31: #{opnn_forward.2} parent=11 // pred_region
        _
      $region32: #{opnn_forward.2} parent=11 // pred_fallthru
        _
      // Predicated region
      $region33: #{opnn_forward.2} parent=11 // pred_check
        %p309 = pneg %p143
      $region34: #{opnn_forward.2} parent=11 // pred_check_branch
        %311 = sbr.rel (%p309) target = $region36
      $region35: #{opnn_forward.2} parent=11 // pred_region
        _
      $region36: #{opnn_forward.2} parent=11 // pred_fallthru
        _
      // Predicated region
      $region37: #{opnn_forward.2} parent=11 // pred_check
        %p312 = pneg %p164
      $region38: #{opnn_forward.2} parent=11 // pred_check_branch
        %314 = sbr.rel (%p312) target = $region40
      $region39: #{opnn_forward.2} parent=11 // pred_region
        _
      $region40: #{opnn_forward.2} parent=11 // pred_fallthru
        _
      // Predicated region
      $region41: #{opnn_forward.2} parent=11 // pred_check
        %p315 = pneg %p185
      $region42: #{opnn_forward.2} parent=11 // pred_check_branch
        %317 = sbr.rel (%p315) target = $region44
      $region43: #{opnn_forward.2} parent=11 // pred_region
        _
      $region44: #{opnn_forward.2} parent=11 // pred_fallthru
        _
      // Predicated region
      $region45: #{opnn_forward.2} parent=11 // pred_check
        %p318 = pneg %p258
      $region46: #{opnn_forward.2} parent=11 // pred_check_branch
        %320 = sbr.rel (%p318) target = $region48
      $region47: #{opnn_forward.2} parent=11 // pred_region
        _
      $region48: #{opnn_forward.2} parent=11 // pred_fallthru
        _
    $region12: #{opnn_forward.2} parent=5 // pred_fallthru
      _
    %p321 = scmp.lt.s32.totalorder %s17, 2
    // Predicated region
    $region49: #{opnn_forward.2} parent=5 // pred_check
      %p322 = pneg %p321
    $region50: #{opnn_forward.2} parent=5 // pred_check_branch
      %324 = sbr.rel (%p322) target = $region52
    $region51: #{opnn_forward.2} parent=5 // pred_region
      // Predicated region
      $region53: #{opnn_forward.2} parent=51 // pred_check
        %p325 = pneg %p205
      $region54: #{opnn_forward.2} parent=51 // pred_check_branch
        %327 = sbr.rel (%p325) target = $region56
      $region55: #{opnn_forward.2} parent=51 // pred_region
        %s328 = smul.u32 2, %s17
        %p329 = scmp.lt.s32.totalorder %s328, 3
        %s330 = scalar_select %p329, %s328, 3
        %s331 = smul.addr %s330, 2
        %s332 = scalar_lea.vmem %s8, %s331
        %s333 = smul.u32 2, %s17
      $region56: #{opnn_forward.2} parent=51 // pred_fallthru
        _
      // Predicated region
      $region57: #{opnn_forward.2} parent=51 // pred_check
        %p334 = pneg %p231
      $region58: #{opnn_forward.2} parent=51 // pred_check_branch
        %336 = sbr.rel (%p334) target = $region60
      $region59: #{opnn_forward.2} parent=51 // pred_region
        %s337 = smul.u32 32, %s17
        %p338 = scmp.lt.s32.totalorder %s337, 63
        %s339 = scalar_select %p338, %s337, 63
        %s340 = smul.addr %s339, 4
        %s341 = scalar_lea.vmem %s9, %s340
        %s342 = smul.u32 32, %s17
      $region60: #{opnn_forward.2} parent=51 // pred_fallthru
        _
    $region52: #{opnn_forward.2} parent=5 // pred_fallthru
      _
    %p343 = scmp.le.s32.totalorder 1, %s17
    %p344 = scmp.lt.s32.totalorder %s17, 3
    %p345 = pnand %p343, %p344
    %p346 = pneg %p345
    // Predicated region
    $region61: #{opnn_forward.2} parent=5 // pred_check
      _
    $region62: #{opnn_forward.2} parent=5 // pred_check_branch
      %348 = sbr.rel (%p345) target = $region64
    $region63: #{opnn_forward.2} parent=5 // pred_region
      %s349 = ssub.s32 %s17, 1
      %p350 = pneg %p38
      %p351 = pneg %p35
      %p352 = pneg %p59
      %p353 = pneg %p56
      %p354 = pneg %p80
      %p355 = pneg %p77
      %p356 = pneg %p101
      %p357 = pneg %p98
      %p358 = pneg %p122
      %p359 = pneg %p119
      %p360 = pneg %p143
      %p361 = pneg %p140
      %p362 = pneg %p164
      %p363 = pneg %p161
      %p364 = pneg %p185
      %p365 = pneg %p182
      %s366 = smul.u32 2, %s22
      %p367 = scmp.lt.s32.totalorder %s366, 3
      %s368 = scalar_select %p367, %s366, 3
      %s369 = smul.addr %s368, 2
      %s370 = scalar_lea.vmem %s8, %s369
      %p371 = pneg %p211
      %p372 = pneg %p208
      %s373 = smul.u32 32, %s22
      %p374 = scmp.lt.s32.totalorder %s373, 63
      %s375 = scalar_select %p374, %s373, 63
      %s376 = smul.addr %s375, 4
      %s377 = scalar_lea.vmem %s9, %s376
      %p378 = pneg %p237
      %p379 = pneg %p234
      %p380 = pneg %p258
      %p381 = pneg %p255
      %p382 = pneg %p279
      %p383 = pneg %p276
      %s384 = smul.u32 2, %s22
      %p385 = scmp.lt.s32.totalorder %s384, 3
      %s386 = scalar_select %p385, %s384, 3
      %s387 = smul.addr %s386, 2
      %s388 = scalar_lea.vmem %s8, %s387
      %s389 = smul.u32 2, %s22
      %s390 = smul.u32 32, %s22
      %p391 = scmp.lt.s32.totalorder %s390, 63
      %s392 = scalar_select %p391, %s390, 63
      %s393 = smul.addr %s392, 4
      %s394 = scalar_lea.vmem %s9, %s393
      %s395 = smul.u32 32, %s22
      %p396 = scmp.eq.s32.totalorder %s22, 0
      // Predicated region
      $region65: #{opnn_forward.2} parent=63 // pred_check
        %p397 = pneg %p396
      $region66: #{opnn_forward.2} parent=63 // pred_check_branch
        %399 = sbr.rel (%p397) target = $region68
      $region67: #{opnn_forward.2} parent=63 // pred_region
        %400 = vst [vmem:[#allocation2] sm:$0x3] 0.0
        %v401 = vld [vmem:[%s5] sm:$0x3]
        %v402 = vld [vmem:[%s6] sm:$0x3]
        %v403 = vld [vmem:[%s7] sm:$0x1]
        %v405 = vlaneseq
        %v406 = vshrl.u32 %v405, 7
        %v407 = vsub.s32 0, %v406
        %v408 = vrot.slane %v403, %v407
        %vm410 = vcmask 15360
        %v412 = vsel %vm410, %v401, 0
        %vm414 = vcmask 1041408
        %v416 = vsel %vm414, %v402, 0
        %418 = vmatprep.subr.mxu0 0.0
        %419 = vmatpush1.msra.mxu0 0.0
        %420 = vmatprep.subr.mxu0 0.0
        %421 = vmatpush1.msra.mxu0 0.0
        %422 = vmatprep.subr.mxu0 0.0
        %423 = vmatpush1.msra.mxu0 0.0
        %424 = vmatprep.subr.mxu0 0.0
        %425 = vmatpush1.msra.mxu0 0.0
        %426 = vmatprep.subr.mxu0 0.0
        %427 = vmatpush1.msra.mxu0 0.0
        %428 = vmatprep.subr.mxu0 0.0
        %429 = vmatpush1.msra.mxu0 0.0
        %430 = vmatprep.subr.mxu0 0.0
        %431 = vmatpush1.msra.mxu0 0.0
        %432 = vmatprep.subr.mxu0 0.0
        %433 = vmatpush1.msra.mxu0 0.0
        %434 = vmatprep.subr.mxu0 0.0
        %435 = vmatpush1.msra.mxu0 0.0
        %436 = vmatprep.subr.mxu0 0.0
        %437 = vmatpush1.msra.mxu0 0.0
        %438 = vmatprep.subr.mxu0 0.0
        %439 = vmatpush1.msra.mxu0 0.0
        %440 = vmatprep.subr.mxu0 0.0
        %441 = vmatpush1.msra.mxu0 0.0
        %442 = vmatprep.subr.mxu0 0.0
        %443 = vmatpush1.msra.mxu0 0.0
        %444 = vmatprep.subr.mxu0 0.0
        %445 = vmatpush1.msra.mxu0 0.0
        %446 = vmatprep.subr.mxu0 0.0
        %447 = vmatpush1.msra.mxu0 0.0
        %448 = vmatprep.subr.mxu0 0.0
        %449 = vmatpush1.msra.mxu0 %v416
        %450 = vmatprep.subr.mxu0 0.0
        %451 = vmatpush2.msra.mxu0 0.0
        %452 = vmatprep.subr.mxu0 0.0
        %453 = vmatpush2.msra.mxu0 0.0
        %454 = vmatprep.subr.mxu0 0.0
        %455 = vmatpush2.msra.mxu0 0.0
        %456 = vmatprep.subr.mxu0 0.0
        %457 = vmatpush2.msra.mxu0 0.0
        %458 = vmatprep.subr.mxu0 0.0
        %459 = vmatpush2.msra.mxu0 0.0
        %460 = vmatprep.subr.mxu0 0.0
        %461 = vmatpush2.msra.mxu0 0.0
        %462 = vmatprep.subr.mxu0 0.0
        %463 = vmatpush2.msra.mxu0 0.0
        %464 = vmatprep.subr.mxu0 0.0
        %465 = vmatpush2.msra.mxu0 0.0
        %466 = vmatprep.subr.mxu0 0.0
        %467 = vmatpush2.msra.mxu0 0.0
        %468 = vmatprep.subr.mxu0 0.0
        %469 = vmatpush2.msra.mxu0 0.0
        %470 = vmatprep.subr.mxu0 0.0
        %471 = vmatpush2.msra.mxu0 0.0
        %472 = vmatprep.subr.mxu0 0.0
        %473 = vmatpush2.msra.mxu0 0.0
        %474 = vmatprep.subr.mxu0 0.0
        %475 = vmatpush2.msra.mxu0 0.0
        %476 = vmatprep.subr.mxu0 0.0
        %477 = vmatpush2.msra.mxu0 0.0
        %478 = vmatprep.subr.mxu0 0.0
        %479 = vmatpush2.msra.mxu0 0.0
        %480 = vmatprep.subr.mxu0 0.0
        %481 = vmatpush2.msra.mxu0 0.0
        %482 = vmatprep.mubr.f32.mxu0 0.0
        %483 = vmatmul.mubr.f32.gmra.mxu0 %v412
        %v484 = vpop.f32.mrf.mxu0
        %v485 = vadd.f32 %v408, %v484
        %v486 = vpop.f32.mrf.mxu0
        %487 = vdwg.mxu0
        %v488 = vld [vmem:[%s1] sm:$0xff]
        %v489 = vld [vmem:[%s0] sm:$0xff]
        %v490 = vld [vmem:[%s0 + $0x8] sm:$0xff]
        %v491 = vld [vmem:[%s0 + $0x10] sm:$0xff]
        %v492 = vld [vmem:[%s0 + $0x18] sm:$0xff]
        %v493 = vld [vmem:[%s0 + $0x20] sm:$0x3]
        %v494 = vld [vmem:[%s0 + $0x28] sm:$0x3]
        %v495 = vld [vmem:[%s2] sm:$0xff]
        %497 = vset.pattern.permute.xlu0 0
        %498 = vperm.xlu0 %497, %v495
        %v499 = vpop.permute.xlu0 %498
        %vm501 = vcmask 146432
        %v503 = vsel %vm501, %v488, 0
        %v506 = vsel %vm414, %v493, 0
        %v509 = vsel %vm414, %v494, 0
        %511 = vmatprep.subr.mxu0 0.0
        %512 = vmatpush1.msra.mxu0 0.0
        %513 = vmatprep.subr.mxu0 0.0
        %514 = vmatpush1.msra.mxu0 0.0
        %515 = vmatprep.subr.mxu0 0.0
        %516 = vmatpush1.msra.mxu0 0.0
        %517 = vmatprep.subr.mxu0 0.0
        %518 = vmatpush1.msra.mxu0 0.0
        %519 = vmatprep.subr.mxu0 0.0
        %520 = vmatpush1.msra.mxu0 0.0
        %521 = vmatprep.subr.mxu0 0.0
        %522 = vmatpush1.msra.mxu0 0.0
        %523 = vmatprep.subr.mxu0 0.0
        %524 = vmatpush1.msra.mxu0 0.0
        %525 = vmatprep.subr.mxu0 0.0
        %526 = vmatpush1.msra.mxu0 0.0
        %527 = vmatprep.subr.mxu0 0.0
        %528 = vmatpush1.msra.mxu0 0.0
        %529 = vmatprep.subr.mxu0 0.0
        %530 = vmatpush1.msra.mxu0 0.0
        %531 = vmatprep.subr.mxu0 0.0
        %532 = vmatpush1.msra.mxu0 0.0
        %533 = vmatprep.subr.mxu0 0.0
        %534 = vmatpush1.msra.mxu0 0.0
        %535 = vmatprep.subr.mxu0 0.0
        %536 = vmatpush1.msra.mxu0 0.0
        %537 = vmatprep.subr.mxu0 %v509
        %538 = vmatpush1.msra.mxu0 %v506
        %539 = vmatprep.subr.mxu0 %v492
        %540 = vmatpush1.msra.mxu0 %v491
        %541 = vmatprep.subr.mxu0 %v490
        %542 = vmatpush1.msra.mxu0 %v489
        %543 = vmatprep.subr.mxu0 0.0
        %544 = vmatpush2.msra.mxu0 0.0
        %545 = vmatprep.subr.mxu0 0.0
        %546 = vmatpush2.msra.mxu0 0.0
        %547 = vmatprep.subr.mxu0 0.0
        %548 = vmatpush2.msra.mxu0 0.0
        %549 = vmatprep.subr.mxu0 0.0
        %550 = vmatpush2.msra.mxu0 0.0
        %551 = vmatprep.subr.mxu0 0.0
        %552 = vmatpush2.msra.mxu0 0.0
        %553 = vmatprep.subr.mxu0 0.0
        %554 = vmatpush2.msra.mxu0 0.0
        %555 = vmatprep.subr.mxu0 0.0
        %556 = vmatpush2.msra.mxu0 0.0
        %557 = vmatprep.subr.mxu0 0.0
        %558 = vmatpush2.msra.mxu0 0.0
        %559 = vmatprep.subr.mxu0 0.0
        %560 = vmatpush2.msra.mxu0 0.0
        %561 = vmatprep.subr.mxu0 0.0
        %562 = vmatpush2.msra.mxu0 0.0
        %563 = vmatprep.subr.mxu0 0.0
        %564 = vmatpush2.msra.mxu0 0.0
        %565 = vmatprep.subr.mxu0 0.0
        %566 = vmatpush2.msra.mxu0 0.0
        %567 = vmatprep.subr.mxu0 0.0
        %568 = vmatpush2.msra.mxu0 0.0
        %569 = vmatprep.subr.mxu0 0.0
        %570 = vmatpush2.msra.mxu0 0.0
        %571 = vmatprep.subr.mxu0 0.0
        %572 = vmatpush2.msra.mxu0 0.0
        %573 = vmatprep.subr.mxu0 0.0
        %574 = vmatpush2.msra.mxu0 0.0
        %575 = vmatprep.mubr.f32.mxu0 0.0
        %576 = vmatmul.mubr.f32.gmra.mxu0 %v503
        %v577 = vpop.f32.mrf.mxu0
        %v578 = vadd.f32 %v499, %v577
        %v579 = vpop.f32.mrf.mxu0
        %v580 = vadd.f32 %v499, %v579
        %581 = vdwg.mxu0
        %v582 = vmax.f32 %v578, 0.0
        %v583 = vmax.f32 %v580, 0.0
        %v584 = vld [vmem:[%s4] sm:$0x1]
        %v585 = vld [vmem:[%s3] sm:$0xff]
        %v586 = vld [vmem:[%s3 + $0x8] sm:$0xff]
        %v587 = vld [vmem:[%s3 + $0x10] sm:$0xff]
        %v588 = vld [vmem:[%s3 + $0x18] sm:$0xff]
        %v589 = vld [vmem:[%s3 + $0x20] sm:$0xff]
        %v590 = vld [vmem:[%s3 + $0x28] sm:$0xff]
        %v591 = vld [vmem:[%s3 + $0x30] sm:$0xff]
        %v592 = vld [vmem:[%s3 + $0x38] sm:$0xff]
        %v593 = vld [vmem:[%s3 + $0x40] sm:$0xff]
        %v594 = vld [vmem:[%s3 + $0x48] sm:$0xff]
        %v595 = vld [vmem:[%s3 + $0x50] sm:$0xff]
        %v596 = vld [vmem:[%s3 + $0x58] sm:$0xff]
        %v597 = vld [vmem:[%s3 + $0x60] sm:$0xff]
        %v598 = vld [vmem:[%s3 + $0x68] sm:$0xff]
        %v599 = vld [vmem:[%s3 + $0x70] sm:$0xff]
        %v600 = vld [vmem:[%s3 + $0x78] sm:$0xff]
        %v601 = vld [vmem:[%s3 + $0x80] sm:$0xff]
        %v602 = vld [vmem:[%s3 + $0x88] sm:$0xff]
        %v603 = vld [vmem:[%s3 + $0x90] sm:$0xff]
        %v604 = vld [vmem:[%s3 + $0x98] sm:$0xff]
        %v605 = vld [vmem:[%s3 + $0xa0] sm:$0xff]
        %v606 = vld [vmem:[%s3 + $0xa8] sm:$0xff]
        %v607 = vld [vmem:[%s3 + $0xb0] sm:$0xff]
        %v608 = vld [vmem:[%s3 + $0xb8] sm:$0xff]
        %v609 = vld [vmem:[%s3 + $0xc0] sm:$0xf]
        %vm610 = vcmask 556032
        %v612 = vsel %vm610, %v583, 0
        %vm614 = vcmask 1043456
        %v616 = vsel %vm614, %v609, 0
        %618 = vmatprep.subr.mxu0 0.0
        %619 = vmatpush1.msra.mxu0 %v600
        %620 = vmatprep.subr.mxu0 0.0
        %621 = vmatpush1.msra.mxu0 %v599
        %622 = vmatprep.subr.mxu0 0.0
        %623 = vmatpush1.msra.mxu0 %v598
        %624 = vmatprep.subr.mxu0 0.0
        %625 = vmatpush1.msra.mxu0 %v597
        %626 = vmatprep.subr.mxu0 0.0
        %627 = vmatpush1.msra.mxu0 %v596
        %628 = vmatprep.subr.mxu0 0.0
        %629 = vmatpush1.msra.mxu0 %v595
        %630 = vmatprep.subr.mxu0 0.0
        %631 = vmatpush1.msra.mxu0 %v594
        %632 = vmatprep.subr.mxu0 0.0
        %633 = vmatpush1.msra.mxu0 %v593
        %634 = vmatprep.subr.mxu0 0.0
        %635 = vmatpush1.msra.mxu0 %v592
        %636 = vmatprep.subr.mxu0 0.0
        %637 = vmatpush1.msra.mxu0 %v591
        %638 = vmatprep.subr.mxu0 0.0
        %639 = vmatpush1.msra.mxu0 %v590
        %640 = vmatprep.subr.mxu0 0.0
        %641 = vmatpush1.msra.mxu0 %v589
        %642 = vmatprep.subr.mxu0 0.0
        %643 = vmatpush1.msra.mxu0 %v588
        %644 = vmatprep.subr.mxu0 0.0
        %645 = vmatpush1.msra.mxu0 %v587
        %646 = vmatprep.subr.mxu0 0.0
        %647 = vmatpush1.msra.mxu0 %v586
        %648 = vmatprep.subr.mxu0 0.0
        %649 = vmatpush1.msra.mxu0 %v585
        %650 = vmatprep.subr.mxu0 0.0
        %651 = vmatpush2.msra.mxu0 0.0
        %652 = vmatprep.subr.mxu0 0.0
        %653 = vmatpush2.msra.mxu0 0.0
        %654 = vmatprep.subr.mxu0 0.0
        %655 = vmatpush2.msra.mxu0 0.0
        %656 = vmatprep.subr.mxu0 0.0
        %657 = vmatpush2.msra.mxu0 0.0
        %658 = vmatprep.subr.mxu0 0.0
        %659 = vmatpush2.msra.mxu0 0.0
        %660 = vmatprep.subr.mxu0 0.0
        %661 = vmatpush2.msra.mxu0 0.0
        %662 = vmatprep.subr.mxu0 0.0
        %663 = vmatpush2.msra.mxu0 0.0
        %664 = vmatprep.subr.mxu0 0.0
        %665 = vmatpush2.msra.mxu0 %v616
        %666 = vmatprep.subr.mxu0 0.0
        %667 = vmatpush2.msra.mxu0 %v608
        %668 = vmatprep.subr.mxu0 0.0
        %669 = vmatpush2.msra.mxu0 %v607
        %670 = vmatprep.subr.mxu0 0.0
        %671 = vmatpush2.msra.mxu0 %v606
        %672 = vmatprep.subr.mxu0 0.0
        %673 = vmatpush2.msra.mxu0 %v605
        %674 = vmatprep.subr.mxu0 0.0
        %675 = vmatpush2.msra.mxu0 %v604
        %676 = vmatprep.subr.mxu0 0.0
        %677 = vmatpush2.msra.mxu0 %v603
        %678 = vmatprep.subr.mxu0 0.0
        %679 = vmatpush2.msra.mxu0 %v602
        %680 = vmatprep.subr.mxu0 0.0
        %681 = vmatpush2.msra.mxu0 %v601
        %682 = vmatprep.mubr.f32.mxu0 %v612
        %683 = vmatmul.mubr.f32.gmra.mxu0 %v582
        %v684 = vpop.f32.mrf.mxu0
        %v685 = vadd.f32 0.0, %v684
        %v686 = vpop.f32.mrf.mxu0
        %687 = vdwg.mxu0
        %v688 = vadd.f32 %v584, %v685
        %s689 = scalar_lea.vmem %s3, 200
        %v690 = vld [vmem:[%s689] sm:$0xff]
        %v691 = vld [vmem:[%s689 + $0x8] sm:$0xff]
        %v692 = vld [vmem:[%s689 + $0x10] sm:$0xff]
        %v693 = vld [vmem:[%s689 + $0x18] sm:$0xff]
        %v694 = vld [vmem:[%s689 + $0x20] sm:$0xff]
        %v695 = vld [vmem:[%s689 + $0x28] sm:$0xff]
        %v696 = vld [vmem:[%s689 + $0x30] sm:$0xff]
        %v697 = vld [vmem:[%s689 + $0x38] sm:$0xff]
        %v698 = vld [vmem:[%s689 + $0x40] sm:$0xff]
        %v699 = vld [vmem:[%s689 + $0x48] sm:$0xff]
        %v700 = vld [vmem:[%s689 + $0x50] sm:$0xff]
        %v701 = vld [vmem:[%s689 + $0x58] sm:$0xff]
        %v702 = vld [vmem:[%s689 + $0x60] sm:$0xff]
        %v703 = vld [vmem:[%s689 + $0x68] sm:$0xff]
        %v704 = vld [vmem:[%s689 + $0x70] sm:$0xff]
        %v705 = vld [vmem:[%s689 + $0x78] sm:$0xff]
        %v706 = vld [vmem:[%s689 + $0x80] sm:$0xff]
        %v707 = vld [vmem:[%s689 + $0x88] sm:$0xff]
        %v708 = vld [vmem:[%s689 + $0x90] sm:$0xff]
        %v709 = vld [vmem:[%s689 + $0x98] sm:$0xff]
        %v710 = vld [vmem:[%s689 + $0xa0] sm:$0xff]
        %v711 = vld [vmem:[%s689 + $0xa8] sm:$0xff]
        %v712 = vld [vmem:[%s689 + $0xb0] sm:$0xff]
        %v713 = vld [vmem:[%s689 + $0xb8] sm:$0xff]
        %v714 = vld [vmem:[%s689 + $0xc0] sm:$0xf]
        %v716 = vrot.slane %v582, 1
        %v717 = vrot.slane %v583, 1
        %v719 = vsel %vm610, %v717, 0
        %v722 = vsel %vm614, %v714, 0
        %724 = vmatprep.subr.mxu0 0.0
        %725 = vmatpush1.msra.mxu0 %v705
        %726 = vmatprep.subr.mxu0 0.0
        %727 = vmatpush1.msra.mxu0 %v704
        %728 = vmatprep.subr.mxu0 0.0
        %729 = vmatpush1.msra.mxu0 %v703
        %730 = vmatprep.subr.mxu0 0.0
        %731 = vmatpush1.msra.mxu0 %v702
        %732 = vmatprep.subr.mxu0 0.0
        %733 = vmatpush1.msra.mxu0 %v701
        %734 = vmatprep.subr.mxu0 0.0
        %735 = vmatpush1.msra.mxu0 %v700
        %736 = vmatprep.subr.mxu0 0.0
        %737 = vmatpush1.msra.mxu0 %v699
        %738 = vmatprep.subr.mxu0 0.0
        %739 = vmatpush1.msra.mxu0 %v698
        %740 = vmatprep.subr.mxu0 0.0
        %741 = vmatpush1.msra.mxu0 %v697
        %742 = vmatprep.subr.mxu0 0.0
        %743 = vmatpush1.msra.mxu0 %v696
        %744 = vmatprep.subr.mxu0 0.0
        %745 = vmatpush1.msra.mxu0 %v695
        %746 = vmatprep.subr.mxu0 0.0
        %747 = vmatpush1.msra.mxu0 %v694
        %748 = vmatprep.subr.mxu0 0.0
        %749 = vmatpush1.msra.mxu0 %v693
        %750 = vmatprep.subr.mxu0 0.0
        %751 = vmatpush1.msra.mxu0 %v692
        %752 = vmatprep.subr.mxu0 0.0
        %753 = vmatpush1.msra.mxu0 %v691
        %754 = vmatprep.subr.mxu0 0.0
        %755 = vmatpush1.msra.mxu0 %v690
        %756 = vmatprep.subr.mxu0 0.0
        %757 = vmatpush2.msra.mxu0 0.0
        %758 = vmatprep.subr.mxu0 0.0
        %759 = vmatpush2.msra.mxu0 0.0
        %760 = vmatprep.subr.mxu0 0.0
        %761 = vmatpush2.msra.mxu0 0.0
        %762 = vmatprep.subr.mxu0 0.0
        %763 = vmatpush2.msra.mxu0 0.0
        %764 = vmatprep.subr.mxu0 0.0
        %765 = vmatpush2.msra.mxu0 0.0
        %766 = vmatprep.subr.mxu0 0.0
        %767 = vmatpush2.msra.mxu0 0.0
        %768 = vmatprep.subr.mxu0 0.0
        %769 = vmatpush2.msra.mxu0 0.0
        %770 = vmatprep.subr.mxu0 0.0
        %771 = vmatpush2.msra.mxu0 %v722
        %772 = vmatprep.subr.mxu0 0.0
        %773 = vmatpush2.msra.mxu0 %v713
        %774 = vmatprep.subr.mxu0 0.0
        %775 = vmatpush2.msra.mxu0 %v712
        %776 = vmatprep.subr.mxu0 0.0
        %777 = vmatpush2.msra.mxu0 %v711
        %778 = vmatprep.subr.mxu0 0.0
        %779 = vmatpush2.msra.mxu0 %v710
        %780 = vmatprep.subr.mxu0 0.0
        %781 = vmatpush2.msra.mxu0 %v709
        %782 = vmatprep.subr.mxu0 0.0
        %783 = vmatpush2.msra.mxu0 %v708
        %784 = vmatprep.subr.mxu0 0.0
        %785 = vmatpush2.msra.mxu0 %v707
        %786 = vmatprep.subr.mxu0 0.0
        %787 = vmatpush2.msra.mxu0 %v706
        %788 = vmatprep.mubr.f32.mxu0 %v719
        %789 = vmatmul.mubr.f32.gmra.mxu0 %v716
        %v790 = vpop.f32.mrf.mxu0
        %v791 = vadd.f32 0.0, %v790
        %v792 = vpop.f32.mrf.mxu0
        %793 = vdwg.mxu0
        %v794 = vadd.f32 %v688, %v791
        %s795 = scalar_lea.vmem %s3, 400
        %v796 = vld [vmem:[%s795] sm:$0xff]
        %v797 = vld [vmem:[%s795 + $0x8] sm:$0xff]
        %v798 = vld [vmem:[%s795 + $0x10] sm:$0xff]
        %v799 = vld [vmem:[%s795 + $0x18] sm:$0xff]
        %v800 = vld [vmem:[%s795 + $0x20] sm:$0xff]
        %v801 = vld [vmem:[%s795 + $0x28] sm:$0xff]
        %v802 = vld [vmem:[%s795 + $0x30] sm:$0xff]
        %v803 = vld [vmem:[%s795 + $0x38] sm:$0xff]
        %v804 = vld [vmem:[%s795 + $0x40] sm:$0xff]
        %v805 = vld [vmem:[%s795 + $0x48] sm:$0xff]
        %v806 = vld [vmem:[%s795 + $0x50] sm:$0xff]
        %v807 = vld [vmem:[%s795 + $0x58] sm:$0xff]
        %v808 = vld [vmem:[%s795 + $0x60] sm:$0xff]
        %v809 = vld [vmem:[%s795 + $0x68] sm:$0xff]
        %v810 = vld [vmem:[%s795 + $0x70] sm:$0xff]
        %v811 = vld [vmem:[%s795 + $0x78] sm:$0xff]
        %v812 = vld [vmem:[%s795 + $0x80] sm:$0xff]
        %v813 = vld [vmem:[%s795 + $0x88] sm:$0xff]
        %v814 = vld [vmem:[%s795 + $0x90] sm:$0xff]
        %v815 = vld [vmem:[%s795 + $0x98] sm:$0xff]
        %v816 = vld [vmem:[%s795 + $0xa0] sm:$0xff]
        %v817 = vld [vmem:[%s795 + $0xa8] sm:$0xff]
        %v818 = vld [vmem:[%s795 + $0xb0] sm:$0xff]
        %v819 = vld [vmem:[%s795 + $0xb8] sm:$0xff]
        %v820 = vld [vmem:[%s795 + $0xc0] sm:$0xf]
        %v821 = vrot.slane %v582, 2
        %v822 = vrot.slane %v583, 2
        %v824 = vsel %vm610, %v822, 0
        %v827 = vsel %vm614, %v820, 0
        %829 = vmatprep.subr.mxu0 0.0
        %830 = vmatpush1.msra.mxu0 %v811
        %831 = vmatprep.subr.mxu0 0.0
        %832 = vmatpush1.msra.mxu0 %v810
        %833 = vmatprep.subr.mxu0 0.0
        %834 = vmatpush1.msra.mxu0 %v809
        %835 = vmatprep.subr.mxu0 0.0
        %836 = vmatpush1.msra.mxu0 %v808
        %837 = vmatprep.subr.mxu0 0.0
        %838 = vmatpush1.msra.mxu0 %v807
        %839 = vmatprep.subr.mxu0 0.0
        %840 = vmatpush1.msra.mxu0 %v806
        %841 = vmatprep.subr.mxu0 0.0
        %842 = vmatpush1.msra.mxu0 %v805
        %843 = vmatprep.subr.mxu0 0.0
        %844 = vmatpush1.msra.mxu0 %v804
        %845 = vmatprep.subr.mxu0 0.0
        %846 = vmatpush1.msra.mxu0 %v803
        %847 = vmatprep.subr.mxu0 0.0
        %848 = vmatpush1.msra.mxu0 %v802
        %849 = vmatprep.subr.mxu0 0.0
        %850 = vmatpush1.msra.mxu0 %v801
        %851 = vmatprep.subr.mxu0 0.0
        %852 = vmatpush1.msra.mxu0 %v800
        %853 = vmatprep.subr.mxu0 0.0
        %854 = vmatpush1.msra.mxu0 %v799
        %855 = vmatprep.subr.mxu0 0.0
        %856 = vmatpush1.msra.mxu0 %v798
        %857 = vmatprep.subr.mxu0 0.0
        %858 = vmatpush1.msra.mxu0 %v797
        %859 = vmatprep.subr.mxu0 0.0
        %860 = vmatpush1.msra.mxu0 %v796
        %861 = vmatprep.subr.mxu0 0.0
        %862 = vmatpush2.msra.mxu0 0.0
        %863 = vmatprep.subr.mxu0 0.0
        %864 = vmatpush2.msra.mxu0 0.0
        %865 = vmatprep.subr.mxu0 0.0
        %866 = vmatpush2.msra.mxu0 0.0
        %867 = vmatprep.subr.mxu0 0.0
        %868 = vmatpush2.msra.mxu0 0.0
        %869 = vmatprep.subr.mxu0 0.0
        %870 = vmatpush2.msra.mxu0 0.0
        %871 = vmatprep.subr.mxu0 0.0
        %872 = vmatpush2.msra.mxu0 0.0
        %873 = vmatprep.subr.mxu0 0.0
        %874 = vmatpush2.msra.mxu0 0.0
        %875 = vmatprep.subr.mxu0 0.0
        %876 = vmatpush2.msra.mxu0 %v827
        %877 = vmatprep.subr.mxu0 0.0
        %878 = vmatpush2.msra.mxu0 %v819
        %879 = vmatprep.subr.mxu0 0.0
        %880 = vmatpush2.msra.mxu0 %v818
        %881 = vmatprep.subr.mxu0 0.0
        %882 = vmatpush2.msra.mxu0 %v817
        %883 = vmatprep.subr.mxu0 0.0
        %884 = vmatpush2.msra.mxu0 %v816
        %885 = vmatprep.subr.mxu0 0.0
        %886 = vmatpush2.msra.mxu0 %v815
        %887 = vmatprep.subr.mxu0 0.0
        %888 = vmatpush2.msra.mxu0 %v814
        %889 = vmatprep.subr.mxu0 0.0
        %890 = vmatpush2.msra.mxu0 %v813
        %891 = vmatprep.subr.mxu0 0.0
        %892 = vmatpush2.msra.mxu0 %v812
        %893 = vmatprep.mubr.f32.mxu0 %v824
        %894 = vmatmul.mubr.f32.gmra.mxu0 %v821
        %v895 = vpop.f32.mrf.mxu0
        %v896 = vadd.f32 0.0, %v895
        %v897 = vpop.f32.mrf.mxu0
        %898 = vdwg.mxu0
        %v899 = vadd.f32 %v794, %v896
        %s900 = scalar_lea.vmem %s3, 600
        %v901 = vld [vmem:[%s900] sm:$0xff]
        %v902 = vld [vmem:[%s900 + $0x8] sm:$0xff]
        %v903 = vld [vmem:[%s900 + $0x10] sm:$0xff]
        %v904 = vld [vmem:[%s900 + $0x18] sm:$0xff]
        %v905 = vld [vmem:[%s900 + $0x20] sm:$0xff]
        %v906 = vld [vmem:[%s900 + $0x28] sm:$0xff]
        %v907 = vld [vmem:[%s900 + $0x30] sm:$0xff]
        %v908 = vld [vmem:[%s900 + $0x38] sm:$0xff]
        %v909 = vld [vmem:[%s900 + $0x40] sm:$0xff]
        %v910 = vld [vmem:[%s900 + $0x48] sm:$0xff]
        %v911 = vld [vmem:[%s900 + $0x50] sm:$0xff]
        %v912 = vld [vmem:[%s900 + $0x58] sm:$0xff]
        %v913 = vld [vmem:[%s900 + $0x60] sm:$0xff]
        %v914 = vld [vmem:[%s900 + $0x68] sm:$0xff]
        %v915 = vld [vmem:[%s900 + $0x70] sm:$0xff]
        %v916 = vld [vmem:[%s900 + $0x78] sm:$0xff]
        %v917 = vld [vmem:[%s900 + $0x80] sm:$0xff]
        %v918 = vld [vmem:[%s900 + $0x88] sm:$0xff]
        %v919 = vld [vmem:[%s900 + $0x90] sm:$0xff]
        %v920 = vld [vmem:[%s900 + $0x98] sm:$0xff]
        %v921 = vld [vmem:[%s900 + $0xa0] sm:$0xff]
        %v922 = vld [vmem:[%s900 + $0xa8] sm:$0xff]
        %v923 = vld [vmem:[%s900 + $0xb0] sm:$0xff]
        %v924 = vld [vmem:[%s900 + $0xb8] sm:$0xff]
        %v925 = vld [vmem:[%s900 + $0xc0] sm:$0xf]
        %v926 = vrot.slane %v582, 3
        %v927 = vrot.slane %v583, 3
        %v929 = vsel %vm610, %v927, 0
        %v932 = vsel %vm614, %v925, 0
        %934 = vmatprep.subr.mxu0 0.0
        %935 = vmatpush1.msra.mxu0 %v916
        %936 = vmatprep.subr.mxu0 0.0
        %937 = vmatpush1.msra.mxu0 %v915
        %938 = vmatprep.subr.mxu0 0.0
        %939 = vmatpush1.msra.mxu0 %v914
        %940 = vmatprep.subr.mxu0 0.0
        %941 = vmatpush1.msra.mxu0 %v913
        %942 = vmatprep.subr.mxu0 0.0
        %943 = vmatpush1.msra.mxu0 %v912
        %944 = vmatprep.subr.mxu0 0.0
        %945 = vmatpush1.msra.mxu0 %v911
        %946 = vmatprep.subr.mxu0 0.0
        %947 = vmatpush1.msra.mxu0 %v910
        %948 = vmatprep.subr.mxu0 0.0
        %949 = vmatpush1.msra.mxu0 %v909
        %950 = vmatprep.subr.mxu0 0.0
        %951 = vmatpush1.msra.mxu0 %v908
        %952 = vmatprep.subr.mxu0 0.0
        %953 = vmatpush1.msra.mxu0 %v907
        %954 = vmatprep.subr.mxu0 0.0
        %955 = vmatpush1.msra.mxu0 %v906
        %956 = vmatprep.subr.mxu0 0.0
        %957 = vmatpush1.msra.mxu0 %v905
        %958 = vmatprep.subr.mxu0 0.0
        %959 = vmatpush1.msra.mxu0 %v904
        %960 = vmatprep.subr.mxu0 0.0
        %961 = vmatpush1.msra.mxu0 %v903
        %962 = vmatprep.subr.mxu0 0.0
        %963 = vmatpush1.msra.mxu0 %v902
        %964 = vmatprep.subr.mxu0 0.0
        %965 = vmatpush1.msra.mxu0 %v901
        %966 = vmatprep.subr.mxu0 0.0
        %967 = vmatpush2.msra.mxu0 0.0
        %968 = vmatprep.subr.mxu0 0.0
        %969 = vmatpush2.msra.mxu0 0.0
        %970 = vmatprep.subr.mxu0 0.0
        %971 = vmatpush2.msra.mxu0 0.0
        %972 = vmatprep.subr.mxu0 0.0
        %973 = vmatpush2.msra.mxu0 0.0
        %974 = vmatprep.subr.mxu0 0.0
        %975 = vmatpush2.msra.mxu0 0.0
        %976 = vmatprep.subr.mxu0 0.0
        %977 = vmatpush2.msra.mxu0 0.0
        %978 = vmatprep.subr.mxu0 0.0
        %979 = vmatpush2.msra.mxu0 0.0
        %980 = vmatprep.subr.mxu0 0.0
        %981 = vmatpush2.msra.mxu0 %v932
        %982 = vmatprep.subr.mxu0 0.0
        %983 = vmatpush2.msra.mxu0 %v924
        %984 = vmatprep.subr.mxu0 0.0
        %985 = vmatpush2.msra.mxu0 %v923
        %986 = vmatprep.subr.mxu0 0.0
        %987 = vmatpush2.msra.mxu0 %v922
        %988 = vmatprep.subr.mxu0 0.0
        %989 = vmatpush2.msra.mxu0 %v921
        %990 = vmatprep.subr.mxu0 0.0
        %991 = vmatpush2.msra.mxu0 %v920
        %992 = vmatprep.subr.mxu0 0.0
        %993 = vmatpush2.msra.mxu0 %v919
        %994 = vmatprep.subr.mxu0 0.0
        %995 = vmatpush2.msra.mxu0 %v918
        %996 = vmatprep.subr.mxu0 0.0
        %997 = vmatpush2.msra.mxu0 %v917
        %998 = vmatprep.mubr.f32.mxu0 %v929
        %999 = vmatmul.mubr.f32.gmra.mxu0 %v926
        %v1000 = vpop.f32.mrf.mxu0
        %v1001 = vadd.f32 0.0, %v1000
        %v1002 = vpop.f32.mrf.mxu0
        %1003 = vdwg.mxu0
        %v1004 = vadd.f32 %v899, %v1001
        %s1005 = scalar_lea.vmem %s3, 800
        %v1006 = vld [vmem:[%s1005] sm:$0xff]
        %v1007 = vld [vmem:[%s1005 + $0x8] sm:$0xff]
        %v1008 = vld [vmem:[%s1005 + $0x10] sm:$0xff]
        %v1009 = vld [vmem:[%s1005 + $0x18] sm:$0xff]
        %v1010 = vld [vmem:[%s1005 + $0x20] sm:$0xff]
        %v1011 = vld [vmem:[%s1005 + $0x28] sm:$0xff]
        %v1012 = vld [vmem:[%s1005 + $0x30] sm:$0xff]
        %v1013 = vld [vmem:[%s1005 + $0x38] sm:$0xff]
        %v1014 = vld [vmem:[%s1005 + $0x40] sm:$0xff]
        %v1015 = vld [vmem:[%s1005 + $0x48] sm:$0xff]
        %v1016 = vld [vmem:[%s1005 + $0x50] sm:$0xff]
        %v1017 = vld [vmem:[%s1005 + $0x58] sm:$0xff]
        %v1018 = vld [vmem:[%s1005 + $0x60] sm:$0xff]
        %v1019 = vld [vmem:[%s1005 + $0x68] sm:$0xff]
        %v1020 = vld [vmem:[%s1005 + $0x70] sm:$0xff]
        %v1021 = vld [vmem:[%s1005 + $0x78] sm:$0xff]
        %v1022 = vld [vmem:[%s1005 + $0x80] sm:$0xff]
        %v1023 = vld [vmem:[%s1005 + $0x88] sm:$0xff]
        %v1024 = vld [vmem:[%s1005 + $0x90] sm:$0xff]
        %v1025 = vld [vmem:[%s1005 + $0x98] sm:$0xff]
        %v1026 = vld [vmem:[%s1005 + $0xa0] sm:$0xff]
        %v1027 = vld [vmem:[%s1005 + $0xa8] sm:$0xff]
        %v1028 = vld [vmem:[%s1005 + $0xb0] sm:$0xff]
        %v1029 = vld [vmem:[%s1005 + $0xb8] sm:$0xff]
        %v1030 = vld [vmem:[%s1005 + $0xc0] sm:$0xf]
        %v1031 = vrot.slane %v582, 4
        %v1032 = vrot.slane %v583, 4
        %v1034 = vsel %vm610, %v1032, 0
        %v1037 = vsel %vm614, %v1030, 0
        %1039 = vmatprep.subr.mxu0 0.0
        %1040 = vmatpush1.msra.mxu0 %v1021
        %1041 = vmatprep.subr.mxu0 0.0
        %1042 = vmatpush1.msra.mxu0 %v1020
        %1043 = vmatprep.subr.mxu0 0.0
        %1044 = vmatpush1.msra.mxu0 %v1019
        %1045 = vmatprep.subr.mxu0 0.0
        %1046 = vmatpush1.msra.mxu0 %v1018
        %1047 = vmatprep.subr.mxu0 0.0
        %1048 = vmatpush1.msra.mxu0 %v1017
        %1049 = vmatprep.subr.mxu0 0.0
        %1050 = vmatpush1.msra.mxu0 %v1016
        %1051 = vmatprep.subr.mxu0 0.0
        %1052 = vmatpush1.msra.mxu0 %v1015
        %1053 = vmatprep.subr.mxu0 0.0
        %1054 = vmatpush1.msra.mxu0 %v1014
        %1055 = vmatprep.subr.mxu0 0.0
        %1056 = vmatpush1.msra.mxu0 %v1013
        %1057 = vmatprep.subr.mxu0 0.0
        %1058 = vmatpush1.msra.mxu0 %v1012
        %1059 = vmatprep.subr.mxu0 0.0
        %1060 = vmatpush1.msra.mxu0 %v1011
        %1061 = vmatprep.subr.mxu0 0.0
        %1062 = vmatpush1.msra.mxu0 %v1010
        %1063 = vmatprep.subr.mxu0 0.0
        %1064 = vmatpush1.msra.mxu0 %v1009
        %1065 = vmatprep.subr.mxu0 0.0
        %1066 = vmatpush1.msra.mxu0 %v1008
        %1067 = vmatprep.subr.mxu0 0.0
        %1068 = vmatpush1.msra.mxu0 %v1007
        %1069 = vmatprep.subr.mxu0 0.0
        %1070 = vmatpush1.msra.mxu0 %v1006
        %1071 = vmatprep.subr.mxu0 0.0
        %1072 = vmatpush2.msra.mxu0 0.0
        %1073 = vmatprep.subr.mxu0 0.0
        %1074 = vmatpush2.msra.mxu0 0.0
        %1075 = vmatprep.subr.mxu0 0.0
        %1076 = vmatpush2.msra.mxu0 0.0
        %1077 = vmatprep.subr.mxu0 0.0
        %1078 = vmatpush2.msra.mxu0 0.0
        %1079 = vmatprep.subr.mxu0 0.0
        %1080 = vmatpush2.msra.mxu0 0.0
        %1081 = vmatprep.subr.mxu0 0.0
        %1082 = vmatpush2.msra.mxu0 0.0
        %1083 = vmatprep.subr.mxu0 0.0
        %1084 = vmatpush2.msra.mxu0 0.0
        %1085 = vmatprep.subr.mxu0 0.0
        %1086 = vmatpush2.msra.mxu0 %v1037
        %1087 = vmatprep.subr.mxu0 0.0
        %1088 = vmatpush2.msra.mxu0 %v1029
        %1089 = vmatprep.subr.mxu0 0.0
        %1090 = vmatpush2.msra.mxu0 %v1028
        %1091 = vmatprep.subr.mxu0 0.0
        %1092 = vmatpush2.msra.mxu0 %v1027
        %1093 = vmatprep.subr.mxu0 0.0
        %1094 = vmatpush2.msra.mxu0 %v1026
        %1095 = vmatprep.subr.mxu0 0.0
        %1096 = vmatpush2.msra.mxu0 %v1025
        %1097 = vmatprep.subr.mxu0 0.0
        %1098 = vmatpush2.msra.mxu0 %v1024
        %1099 = vmatprep.subr.mxu0 0.0
        %1100 = vmatpush2.msra.mxu0 %v1023
        %1101 = vmatprep.subr.mxu0 0.0
        %1102 = vmatpush2.msra.mxu0 %v1022
        %1103 = vmatprep.mubr.f32.mxu0 %v1034
        %1104 = vmatmul.mubr.f32.gmra.mxu0 %v1031
        %v1105 = vpop.f32.mrf.mxu0
        %v1106 = vadd.f32 0.0, %v1105
        %v1107 = vpop.f32.mrf.mxu0
        %1108 = vdwg.mxu0
        %v1109 = vadd.f32 %v1004, %v1106
        %s1110 = scalar_lea.vmem %s3, 1000
        %v1111 = vld [vmem:[%s1110] sm:$0xff]
        %v1112 = vld [vmem:[%s1110 + $0x8] sm:$0xff]
        %v1113 = vld [vmem:[%s1110 + $0x10] sm:$0xff]
        %v1114 = vld [vmem:[%s1110 + $0x18] sm:$0xff]
        %v1115 = vld [vmem:[%s1110 + $0x20] sm:$0xff]
        %v1116 = vld [vmem:[%s1110 + $0x28] sm:$0xff]
        %v1117 = vld [vmem:[%s1110 + $0x30] sm:$0xff]
        %v1118 = vld [vmem:[%s1110 + $0x38] sm:$0xff]
        %v1119 = vld [vmem:[%s1110 + $0x40] sm:$0xff]
        %v1120 = vld [vmem:[%s1110 + $0x48] sm:$0xff]
        %v1121 = vld [vmem:[%s1110 + $0x50] sm:$0xff]
        %v1122 = vld [vmem:[%s1110 + $0x58] sm:$0xff]
        %v1123 = vld [vmem:[%s1110 + $0x60] sm:$0xff]
        %v1124 = vld [vmem:[%s1110 + $0x68] sm:$0xff]
        %v1125 = vld [vmem:[%s1110 + $0x70] sm:$0xff]
        %v1126 = vld [vmem:[%s1110 + $0x78] sm:$0xff]
        %v1127 = vld [vmem:[%s1110 + $0x80] sm:$0xff]
        %v1128 = vld [vmem:[%s1110 + $0x88] sm:$0xff]
        %v1129 = vld [vmem:[%s1110 + $0x90] sm:$0xff]
        %v1130 = vld [vmem:[%s1110 + $0x98] sm:$0xff]
        %v1131 = vld [vmem:[%s1110 + $0xa0] sm:$0xff]
        %v1132 = vld [vmem:[%s1110 + $0xa8] sm:$0xff]
        %v1133 = vld [vmem:[%s1110 + $0xb0] sm:$0xff]
        %v1134 = vld [vmem:[%s1110 + $0xb8] sm:$0xff]
        %v1135 = vld [vmem:[%s1110 + $0xc0] sm:$0xf]
        %v1136 = vrot.slane %v582, 5
        %v1137 = vrot.slane %v583, 5
        %v1139 = vsel %vm610, %v1137, 0
        %v1142 = vsel %vm614, %v1135, 0
        %1144 = vmatprep.subr.mxu0 0.0
        %1145 = vmatpush1.msra.mxu0 %v1126
        %1146 = vmatprep.subr.mxu0 0.0
        %1147 = vmatpush1.msra.mxu0 %v1125
        %1148 = vmatprep.subr.mxu0 0.0
        %1149 = vmatpush1.msra.mxu0 %v1124
        %1150 = vmatprep.subr.mxu0 0.0
        %1151 = vmatpush1.msra.mxu0 %v1123
        %1152 = vmatprep.subr.mxu0 0.0
        %1153 = vmatpush1.msra.mxu0 %v1122
        %1154 = vmatprep.subr.mxu0 0.0
        %1155 = vmatpush1.msra.mxu0 %v1121
        %1156 = vmatprep.subr.mxu0 0.0
        %1157 = vmatpush1.msra.mxu0 %v1120
        %1158 = vmatprep.subr.mxu0 0.0
        %1159 = vmatpush1.msra.mxu0 %v1119
        %1160 = vmatprep.subr.mxu0 0.0
        %1161 = vmatpush1.msra.mxu0 %v1118
        %1162 = vmatprep.subr.mxu0 0.0
        %1163 = vmatpush1.msra.mxu0 %v1117
        %1164 = vmatprep.subr.mxu0 0.0
        %1165 = vmatpush1.msra.mxu0 %v1116
        %1166 = vmatprep.subr.mxu0 0.0
        %1167 = vmatpush1.msra.mxu0 %v1115
        %1168 = vmatprep.subr.mxu0 0.0
        %1169 = vmatpush1.msra.mxu0 %v1114
        %1170 = vmatprep.subr.mxu0 0.0
        %1171 = vmatpush1.msra.mxu0 %v1113
        %1172 = vmatprep.subr.mxu0 0.0
        %1173 = vmatpush1.msra.mxu0 %v1112
        %1174 = vmatprep.subr.mxu0 0.0
        %1175 = vmatpush1.msra.mxu0 %v1111
        %1176 = vmatprep.subr.mxu0 0.0
        %1177 = vmatpush2.msra.mxu0 0.0
        %1178 = vmatprep.subr.mxu0 0.0
        %1179 = vmatpush2.msra.mxu0 0.0
        %1180 = vmatprep.subr.mxu0 0.0
        %1181 = vmatpush2.msra.mxu0 0.0
        %1182 = vmatprep.subr.mxu0 0.0
        %1183 = vmatpush2.msra.mxu0 0.0
        %1184 = vmatprep.subr.mxu0 0.0
        %1185 = vmatpush2.msra.mxu0 0.0
        %1186 = vmatprep.subr.mxu0 0.0
        %1187 = vmatpush2.msra.mxu0 0.0
        %1188 = vmatprep.subr.mxu0 0.0
        %1189 = vmatpush2.msra.mxu0 0.0
        %1190 = vmatprep.subr.mxu0 0.0
        %1191 = vmatpush2.msra.mxu0 %v1142
        %1192 = vmatprep.subr.mxu0 0.0
        %1193 = vmatpush2.msra.mxu0 %v1134
        %1194 = vmatprep.subr.mxu0 0.0
        %1195 = vmatpush2.msra.mxu0 %v1133
        %1196 = vmatprep.subr.mxu0 0.0
        %1197 = vmatpush2.msra.mxu0 %v1132
        %1198 = vmatprep.subr.mxu0 0.0
        %1199 = vmatpush2.msra.mxu0 %v1131
        %1200 = vmatprep.subr.mxu0 0.0
        %1201 = vmatpush2.msra.mxu0 %v1130
        %1202 = vmatprep.subr.mxu0 0.0
        %1203 = vmatpush2.msra.mxu0 %v1129
        %1204 = vmatprep.subr.mxu0 0.0
        %1205 = vmatpush2.msra.mxu0 %v1128
        %1206 = vmatprep.subr.mxu0 0.0
        %1207 = vmatpush2.msra.mxu0 %v1127
        %1208 = vmatprep.mubr.f32.mxu0 %v1139
        %1209 = vmatmul.mubr.f32.gmra.mxu0 %v1136
        %v1210 = vpop.f32.mrf.mxu0
        %v1211 = vadd.f32 0.0, %v1210
        %v1212 = vpop.f32.mrf.mxu0
        %1213 = vdwg.mxu0
        %v1214 = vadd.f32 %v1109, %v1211
        %s1215 = scalar_lea.vmem %s3, 1200
        %v1216 = vld [vmem:[%s1215] sm:$0xff]
        %v1217 = vld [vmem:[%s1215 + $0x8] sm:$0xff]
        %v1218 = vld [vmem:[%s1215 + $0x10] sm:$0xff]
        %v1219 = vld [vmem:[%s1215 + $0x18] sm:$0xff]
        %v1220 = vld [vmem:[%s1215 + $0x20] sm:$0xff]
        %v1221 = vld [vmem:[%s1215 + $0x28] sm:$0xff]
        %v1222 = vld [vmem:[%s1215 + $0x30] sm:$0xff]
        %v1223 = vld [vmem:[%s1215 + $0x38] sm:$0xff]
        %v1224 = vld [vmem:[%s1215 + $0x40] sm:$0xff]
        %v1225 = vld [vmem:[%s1215 + $0x48] sm:$0xff]
        %v1226 = vld [vmem:[%s1215 + $0x50] sm:$0xff]
        %v1227 = vld [vmem:[%s1215 + $0x58] sm:$0xff]
        %v1228 = vld [vmem:[%s1215 + $0x60] sm:$0xff]
        %v1229 = vld [vmem:[%s1215 + $0x68] sm:$0xff]
        %v1230 = vld [vmem:[%s1215 + $0x70] sm:$0xff]
        %v1231 = vld [vmem:[%s1215 + $0x78] sm:$0xff]
        %v1232 = vld [vmem:[%s1215 + $0x80] sm:$0xff]
        %v1233 = vld [vmem:[%s1215 + $0x88] sm:$0xff]
        %v1234 = vld [vmem:[%s1215 + $0x90] sm:$0xff]
        %v1235 = vld [vmem:[%s1215 + $0x98] sm:$0xff]
        %v1236 = vld [vmem:[%s1215 + $0xa0] sm:$0xff]
        %v1237 = vld [vmem:[%s1215 + $0xa8] sm:$0xff]
        %v1238 = vld [vmem:[%s1215 + $0xb0] sm:$0xff]
        %v1239 = vld [vmem:[%s1215 + $0xb8] sm:$0xff]
        %v1240 = vld [vmem:[%s1215 + $0xc0] sm:$0xf]
        %v1241 = vrot.slane %v582, 6
        %v1242 = vrot.slane %v583, 6
        %v1244 = vsel %vm610, %v1242, 0
        %v1247 = vsel %vm614, %v1240, 0
        %1249 = vmatprep.subr.mxu0 0.0
        %1250 = vmatpush1.msra.mxu0 %v1231
        %1251 = vmatprep.subr.mxu0 0.0
        %1252 = vmatpush1.msra.mxu0 %v1230
        %1253 = vmatprep.subr.mxu0 0.0
        %1254 = vmatpush1.msra.mxu0 %v1229
        %1255 = vmatprep.subr.mxu0 0.0
        %1256 = vmatpush1.msra.mxu0 %v1228
        %1257 = vmatprep.subr.mxu0 0.0
        %1258 = vmatpush1.msra.mxu0 %v1227
        %1259 = vmatprep.subr.mxu0 0.0
        %1260 = vmatpush1.msra.mxu0 %v1226
        %1261 = vmatprep.subr.mxu0 0.0
        %1262 = vmatpush1.msra.mxu0 %v1225
        %1263 = vmatprep.subr.mxu0 0.0
        %1264 = vmatpush1.msra.mxu0 %v1224
        %1265 = vmatprep.subr.mxu0 0.0
        %1266 = vmatpush1.msra.mxu0 %v1223
        %1267 = vmatprep.subr.mxu0 0.0
        %1268 = vmatpush1.msra.mxu0 %v1222
        %1269 = vmatprep.subr.mxu0 0.0
        %1270 = vmatpush1.msra.mxu0 %v1221
        %1271 = vmatprep.subr.mxu0 0.0
        %1272 = vmatpush1.msra.mxu0 %v1220
        %1273 = vmatprep.subr.mxu0 0.0
        %1274 = vmatpush1.msra.mxu0 %v1219
        %1275 = vmatprep.subr.mxu0 0.0
        %1276 = vmatpush1.msra.mxu0 %v1218
        %1277 = vmatprep.subr.mxu0 0.0
        %1278 = vmatpush1.msra.mxu0 %v1217
        %1279 = vmatprep.subr.mxu0 0.0
        %1280 = vmatpush1.msra.mxu0 %v1216
        %1281 = vmatprep.subr.mxu0 0.0
        %1282 = vmatpush2.msra.mxu0 0.0
        %1283 = vmatprep.subr.mxu0 0.0
        %1284 = vmatpush2.msra.mxu0 0.0
        %1285 = vmatprep.subr.mxu0 0.0
        %1286 = vmatpush2.msra.mxu0 0.0
        %1287 = vmatprep.subr.mxu0 0.0
        %1288 = vmatpush2.msra.mxu0 0.0
        %1289 = vmatprep.subr.mxu0 0.0
        %1290 = vmatpush2.msra.mxu0 0.0
        %1291 = vmatprep.subr.mxu0 0.0
        %1292 = vmatpush2.msra.mxu0 0.0
        %1293 = vmatprep.subr.mxu0 0.0
        %1294 = vmatpush2.msra.mxu0 0.0
        %1295 = vmatprep.subr.mxu0 0.0
        %1296 = vmatpush2.msra.mxu0 %v1247
        %1297 = vmatprep.subr.mxu0 0.0
        %1298 = vmatpush2.msra.mxu0 %v1239
        %1299 = vmatprep.subr.mxu0 0.0
        %1300 = vmatpush2.msra.mxu0 %v1238
        %1301 = vmatprep.subr.mxu0 0.0
        %1302 = vmatpush2.msra.mxu0 %v1237
        %1303 = vmatprep.subr.mxu0 0.0
        %1304 = vmatpush2.msra.mxu0 %v1236
        %1305 = vmatprep.subr.mxu0 0.0
        %1306 = vmatpush2.msra.mxu0 %v1235
        %1307 = vmatprep.subr.mxu0 0.0
        %1308 = vmatpush2.msra.mxu0 %v1234
        %1309 = vmatprep.subr.mxu0 0.0
        %1310 = vmatpush2.msra.mxu0 %v1233
        %1311 = vmatprep.subr.mxu0 0.0
        %1312 = vmatpush2.msra.mxu0 %v1232
        %1313 = vmatprep.mubr.f32.mxu0 %v1244
        %1314 = vmatmul.mubr.f32.gmra.mxu0 %v1241
        %v1315 = vpop.f32.mrf.mxu0
        %v1316 = vadd.f32 0.0, %v1315
        %v1317 = vpop.f32.mrf.mxu0
        %1318 = vdwg.mxu0
        %v1319 = vadd.f32 %v1214, %v1316
        %s1320 = scalar_lea.vmem %s3, 1400
        %v1321 = vld [vmem:[%s1320] sm:$0xff]
        %v1322 = vld [vmem:[%s1320 + $0x8] sm:$0xff]
        %v1323 = vld [vmem:[%s1320 + $0x10] sm:$0xff]
        %v1324 = vld [vmem:[%s1320 + $0x18] sm:$0xff]
        %v1325 = vld [vmem:[%s1320 + $0x20] sm:$0xff]
        %v1326 = vld [vmem:[%s1320 + $0x28] sm:$0xff]
        %v1327 = vld [vmem:[%s1320 + $0x30] sm:$0xff]
        %v1328 = vld [vmem:[%s1320 + $0x38] sm:$0xff]
        %v1329 = vld [vmem:[%s1320 + $0x40] sm:$0xff]
        %v1330 = vld [vmem:[%s1320 + $0x48] sm:$0xff]
        %v1331 = vld [vmem:[%s1320 + $0x50] sm:$0xff]
        %v1332 = vld [vmem:[%s1320 + $0x58] sm:$0xff]
        %v1333 = vld [vmem:[%s1320 + $0x60] sm:$0xff]
        %v1334 = vld [vmem:[%s1320 + $0x68] sm:$0xff]
        %v1335 = vld [vmem:[%s1320 + $0x70] sm:$0xff]
        %v1336 = vld [vmem:[%s1320 + $0x78] sm:$0xff]
        %v1337 = vld [vmem:[%s1320 + $0x80] sm:$0xff]
        %v1338 = vld [vmem:[%s1320 + $0x88] sm:$0xff]
        %v1339 = vld [vmem:[%s1320 + $0x90] sm:$0xff]
        %v1340 = vld [vmem:[%s1320 + $0x98] sm:$0xff]
        %v1341 = vld [vmem:[%s1320 + $0xa0] sm:$0xff]
        %v1342 = vld [vmem:[%s1320 + $0xa8] sm:$0xff]
        %v1343 = vld [vmem:[%s1320 + $0xb0] sm:$0xff]
        %v1344 = vld [vmem:[%s1320 + $0xb8] sm:$0xff]
        %v1345 = vld [vmem:[%s1320 + $0xc0] sm:$0xf]
        %v1346 = vrot.slane %v582, 7
        %v1347 = vrot.slane %v583, 7
        %v1349 = vsel %vm610, %v1347, 0
        %v1352 = vsel %vm614, %v1345, 0
        %1354 = vmatprep.subr.mxu0 0.0
        %1355 = vmatpush1.msra.mxu0 %v1336
        %1356 = vmatprep.subr.mxu0 0.0
        %1357 = vmatpush1.msra.mxu0 %v1335
        %1358 = vmatprep.subr.mxu0 0.0
        %1359 = vmatpush1.msra.mxu0 %v1334
        %1360 = vmatprep.subr.mxu0 0.0
        %1361 = vmatpush1.msra.mxu0 %v1333
        %1362 = vmatprep.subr.mxu0 0.0
        %1363 = vmatpush1.msra.mxu0 %v1332
        %1364 = vmatprep.subr.mxu0 0.0
        %1365 = vmatpush1.msra.mxu0 %v1331
        %1366 = vmatprep.subr.mxu0 0.0
        %1367 = vmatpush1.msra.mxu0 %v1330
        %1368 = vmatprep.subr.mxu0 0.0
        %1369 = vmatpush1.msra.mxu0 %v1329
        %1370 = vmatprep.subr.mxu0 0.0
        %1371 = vmatpush1.msra.mxu0 %v1328
        %1372 = vmatprep.subr.mxu0 0.0
        %1373 = vmatpush1.msra.mxu0 %v1327
        %1374 = vmatprep.subr.mxu0 0.0
        %1375 = vmatpush1.msra.mxu0 %v1326
        %1376 = vmatprep.subr.mxu0 0.0
        %1377 = vmatpush1.msra.mxu0 %v1325
        %1378 = vmatprep.subr.mxu0 0.0
        %1379 = vmatpush1.msra.mxu0 %v1324
        %1380 = vmatprep.subr.mxu0 0.0
        %1381 = vmatpush1.msra.mxu0 %v1323
        %1382 = vmatprep.subr.mxu0 0.0
        %1383 = vmatpush1.msra.mxu0 %v1322
        %1384 = vmatprep.subr.mxu0 0.0
        %1385 = vmatpush1.msra.mxu0 %v1321
        %1386 = vmatprep.subr.mxu0 0.0
        %1387 = vmatpush2.msra.mxu0 0.0
        %1388 = vmatprep.subr.mxu0 0.0
        %1389 = vmatpush2.msra.mxu0 0.0
        %1390 = vmatprep.subr.mxu0 0.0
        %1391 = vmatpush2.msra.mxu0 0.0
        %1392 = vmatprep.subr.mxu0 0.0
        %1393 = vmatpush2.msra.mxu0 0.0
        %1394 = vmatprep.subr.mxu0 0.0
        %1395 = vmatpush2.msra.mxu0 0.0
        %1396 = vmatprep.subr.mxu0 0.0
        %1397 = vmatpush2.msra.mxu0 0.0
        %1398 = vmatprep.subr.mxu0 0.0
        %1399 = vmatpush2.msra.mxu0 0.0
        %1400 = vmatprep.subr.mxu0 0.0
        %1401 = vmatpush2.msra.mxu0 %v1352
        %1402 = vmatprep.subr.mxu0 0.0
        %1403 = vmatpush2.msra.mxu0 %v1344
        %1404 = vmatprep.subr.mxu0 0.0
        %1405 = vmatpush2.msra.mxu0 %v1343
        %1406 = vmatprep.subr.mxu0 0.0
        %1407 = vmatpush2.msra.mxu0 %v1342
        %1408 = vmatprep.subr.mxu0 0.0
        %1409 = vmatpush2.msra.mxu0 %v1341
        %1410 = vmatprep.subr.mxu0 0.0
        %1411 = vmatpush2.msra.mxu0 %v1340
        %1412 = vmatprep.subr.mxu0 0.0
        %1413 = vmatpush2.msra.mxu0 %v1339
        %1414 = vmatprep.subr.mxu0 0.0
        %1415 = vmatpush2.msra.mxu0 %v1338
        %1416 = vmatprep.subr.mxu0 0.0
        %1417 = vmatpush2.msra.mxu0 %v1337
        %1418 = vmatprep.mubr.f32.mxu0 %v1349
        %1419 = vmatmul.mubr.f32.gmra.mxu0 %v1346
        %v1420 = vpop.f32.mrf.mxu0
        %v1421 = vadd.f32 0.0, %v1420
        %v1422 = vpop.f32.mrf.mxu0
        %1423 = vdwg.mxu0
        %v1424 = vadd.f32 %v1319, %v1421
        %v1425 = vmul.f32 %v1424, %v485
        %1426 = vst [vmem:[%s11] sm:$0x1] %v1425
        %v1427 = vld [vmem:[%s1] sm:$0xff]
        %s1428 = scalar_lea.vmem %s0, 48
        %v1429 = vld [vmem:[%s1428] sm:$0xff]
        %v1430 = vld [vmem:[%s1428 + $0x8] sm:$0xff]
        %v1431 = vld [vmem:[%s1428 + $0x10] sm:$0xff]
        %v1432 = vld [vmem:[%s1428 + $0x18] sm:$0xff]
        %v1433 = vld [vmem:[%s1428 + $0x20] sm:$0x3]
        %v1434 = vld [vmem:[%s1428 + $0x28] sm:$0x3]
        %v1435 = vld [vmem:[%s2] sm:$0xff]
        %1437 = vset.pattern.permute.xlu0 0
        %1438 = vperm.xlu0 %1437, %v1435
        %v1439 = vpop.permute.xlu0 %1438
        %v1442 = vsel %vm501, %v1427, 0
        %v1445 = vsel %vm414, %v1433, 0
        %v1448 = vsel %vm414, %v1434, 0
        %1450 = vmatprep.subr.mxu0 0.0
        %1451 = vmatpush1.msra.mxu0 0.0
        %1452 = vmatprep.subr.mxu0 0.0
        %1453 = vmatpush1.msra.mxu0 0.0
        %1454 = vmatprep.subr.mxu0 0.0
        %1455 = vmatpush1.msra.mxu0 0.0
        %1456 = vmatprep.subr.mxu0 0.0
        %1457 = vmatpush1.msra.mxu0 0.0
        %1458 = vmatprep.subr.mxu0 0.0
        %1459 = vmatpush1.msra.mxu0 0.0
        %1460 = vmatprep.subr.mxu0 0.0
        %1461 = vmatpush1.msra.mxu0 0.0
        %1462 = vmatprep.subr.mxu0 0.0
        %1463 = vmatpush1.msra.mxu0 0.0
        %1464 = vmatprep.subr.mxu0 0.0
        %1465 = vmatpush1.msra.mxu0 0.0
        %1466 = vmatprep.subr.mxu0 0.0
        %1467 = vmatpush1.msra.mxu0 0.0
        %1468 = vmatprep.subr.mxu0 0.0
        %1469 = vmatpush1.msra.mxu0 0.0
        %1470 = vmatprep.subr.mxu0 0.0
        %1471 = vmatpush1.msra.mxu0 0.0
        %1472 = vmatprep.subr.mxu0 0.0
        %1473 = vmatpush1.msra.mxu0 0.0
        %1474 = vmatprep.subr.mxu0 0.0
        %1475 = vmatpush1.msra.mxu0 0.0
        %1476 = vmatprep.subr.mxu0 %v1448
        %1477 = vmatpush1.msra.mxu0 %v1445
        %1478 = vmatprep.subr.mxu0 %v1432
        %1479 = vmatpush1.msra.mxu0 %v1431
        %1480 = vmatprep.subr.mxu0 %v1430
        %1481 = vmatpush1.msra.mxu0 %v1429
        %1482 = vmatprep.subr.mxu0 0.0
        %1483 = vmatpush2.msra.mxu0 0.0
        %1484 = vmatprep.subr.mxu0 0.0
        %1485 = vmatpush2.msra.mxu0 0.0
        %1486 = vmatprep.subr.mxu0 0.0
        %1487 = vmatpush2.msra.mxu0 0.0
        %1488 = vmatprep.subr.mxu0 0.0
        %1489 = vmatpush2.msra.mxu0 0.0
        %1490 = vmatprep.subr.mxu0 0.0
        %1491 = vmatpush2.msra.mxu0 0.0
        %1492 = vmatprep.subr.mxu0 0.0
        %1493 = vmatpush2.msra.mxu0 0.0
        %1494 = vmatprep.subr.mxu0 0.0
        %1495 = vmatpush2.msra.mxu0 0.0
        %1496 = vmatprep.subr.mxu0 0.0
        %1497 = vmatpush2.msra.mxu0 0.0
        %1498 = vmatprep.subr.mxu0 0.0
        %1499 = vmatpush2.msra.mxu0 0.0
        %1500 = vmatprep.subr.mxu0 0.0
        %1501 = vmatpush2.msra.mxu0 0.0
        %1502 = vmatprep.subr.mxu0 0.0
        %1503 = vmatpush2.msra.mxu0 0.0
        %1504 = vmatprep.subr.mxu0 0.0
        %1505 = vmatpush2.msra.mxu0 0.0
        %1506 = vmatprep.subr.mxu0 0.0
        %1507 = vmatpush2.msra.mxu0 0.0
        %1508 = vmatprep.subr.mxu0 0.0
        %1509 = vmatpush2.msra.mxu0 0.0
        %1510 = vmatprep.subr.mxu0 0.0
        %1511 = vmatpush2.msra.mxu0 0.0
        %1512 = vmatprep.subr.mxu0 0.0
        %1513 = vmatpush2.msra.mxu0 0.0
        %1514 = vmatprep.mubr.f32.mxu0 0.0
        %1515 = vmatmul.mubr.f32.gmra.mxu0 %v1442
        %v1516 = vpop.f32.mrf.mxu0
        %v1517 = vadd.f32 %v1439, %v1516
        %v1518 = vpop.f32.mrf.mxu0
        %v1519 = vadd.f32 %v1439, %v1518
        %1520 = vdwg.mxu0
        %v1521 = vmax.f32 %v1517, 0.0
        %v1522 = vmax.f32 %v1519, 0.0
        %v1523 = vld [vmem:[%s4] sm:$0x1]
        %v1524 = vld [vmem:[%s3] sm:$0xff]
        %v1525 = vld [vmem:[%s3 + $0x8] sm:$0xff]
        %v1526 = vld [vmem:[%s3 + $0x10] sm:$0xff]
        %v1527 = vld [vmem:[%s3 + $0x18] sm:$0xff]
        %v1528 = vld [vmem:[%s3 + $0x20] sm:$0xff]
        %v1529 = vld [vmem:[%s3 + $0x28] sm:$0xff]
        %v1530 = vld [vmem:[%s3 + $0x30] sm:$0xff]
        %v1531 = vld [vmem:[%s3 + $0x38] sm:$0xff]
        %v1532 = vld [vmem:[%s3 + $0x40] sm:$0xff]
        %v1533 = vld [vmem:[%s3 + $0x48] sm:$0xff]
        %v1534 = vld [vmem:[%s3 + $0x50] sm:$0xff]
        %v1535 = vld [vmem:[%s3 + $0x58] sm:$0xff]
        %v1536 = vld [vmem:[%s3 + $0x60] sm:$0xff]
        %v1537 = vld [vmem:[%s3 + $0x68] sm:$0xff]
        %v1538 = vld [vmem:[%s3 + $0x70] sm:$0xff]
        %v1539 = vld [vmem:[%s3 + $0x78] sm:$0xff]
        %v1540 = vld [vmem:[%s3 + $0x80] sm:$0xff]
        %v1541 = vld [vmem:[%s3 + $0x88] sm:$0xff]
        %v1542 = vld [vmem:[%s3 + $0x90] sm:$0xff]
        %v1543 = vld [vmem:[%s3 + $0x98] sm:$0xff]
        %v1544 = vld [vmem:[%s3 + $0xa0] sm:$0xff]
        %v1545 = vld [vmem:[%s3 + $0xa8] sm:$0xff]
        %v1546 = vld [vmem:[%s3 + $0xb0] sm:$0xff]
        %v1547 = vld [vmem:[%s3 + $0xb8] sm:$0xff]
        %v1548 = vld [vmem:[%s3 + $0xc0] sm:$0xf]
        %v1550 = vsel %vm610, %v1522, 0
        %v1553 = vsel %vm614, %v1548, 0
        %1555 = vmatprep.subr.mxu0 0.0
        %1556 = vmatpush1.msra.mxu0 %v1539
        %1557 = vmatprep.subr.mxu0 0.0
        %1558 = vmatpush1.msra.mxu0 %v1538
        %1559 = vmatprep.subr.mxu0 0.0
        %1560 = vmatpush1.msra.mxu0 %v1537
        %1561 = vmatprep.subr.mxu0 0.0
        %1562 = vmatpush1.msra.mxu0 %v1536
        %1563 = vmatprep.subr.mxu0 0.0
        %1564 = vmatpush1.msra.mxu0 %v1535
        %1565 = vmatprep.subr.mxu0 0.0
        %1566 = vmatpush1.msra.mxu0 %v1534
        %1567 = vmatprep.subr.mxu0 0.0
        %1568 = vmatpush1.msra.mxu0 %v1533
        %1569 = vmatprep.subr.mxu0 0.0
        %1570 = vmatpush1.msra.mxu0 %v1532
        %1571 = vmatprep.subr.mxu0 0.0
        %1572 = vmatpush1.msra.mxu0 %v1531
        %1573 = vmatprep.subr.mxu0 0.0
        %1574 = vmatpush1.msra.mxu0 %v1530
        %1575 = vmatprep.subr.mxu0 0.0
        %1576 = vmatpush1.msra.mxu0 %v1529
        %1577 = vmatprep.subr.mxu0 0.0
        %1578 = vmatpush1.msra.mxu0 %v1528
        %1579 = vmatprep.subr.mxu0 0.0
        %1580 = vmatpush1.msra.mxu0 %v1527
        %1581 = vmatprep.subr.mxu0 0.0
        %1582 = vmatpush1.msra.mxu0 %v1526
        %1583 = vmatprep.subr.mxu0 0.0
        %1584 = vmatpush1.msra.mxu0 %v1525
        %1585 = vmatprep.subr.mxu0 0.0
        %1586 = vmatpush1.msra.mxu0 %v1524
        %1587 = vmatprep.subr.mxu0 0.0
        %1588 = vmatpush2.msra.mxu0 0.0
        %1589 = vmatprep.subr.mxu0 0.0
        %1590 = vmatpush2.msra.mxu0 0.0
        %1591 = vmatprep.subr.mxu0 0.0
        %1592 = vmatpush2.msra.mxu0 0.0
        %1593 = vmatprep.subr.mxu0 0.0
        %1594 = vmatpush2.msra.mxu0 0.0
        %1595 = vmatprep.subr.mxu0 0.0
        %1596 = vmatpush2.msra.mxu0 0.0
        %1597 = vmatprep.subr.mxu0 0.0
        %1598 = vmatpush2.msra.mxu0 0.0
        %1599 = vmatprep.subr.mxu0 0.0
        %1600 = vmatpush2.msra.mxu0 0.0
        %1601 = vmatprep.subr.mxu0 0.0
        %1602 = vmatpush2.msra.mxu0 %v1553
        %1603 = vmatprep.subr.mxu0 0.0
        %1604 = vmatpush2.msra.mxu0 %v1547
        %1605 = vmatprep.subr.mxu0 0.0
        %1606 = vmatpush2.msra.mxu0 %v1546
        %1607 = vmatprep.subr.mxu0 0.0
        %1608 = vmatpush2.msra.mxu0 %v1545
        %1609 = vmatprep.subr.mxu0 0.0
        %1610 = vmatpush2.msra.mxu0 %v1544
        %1611 = vmatprep.subr.mxu0 0.0
        %1612 = vmatpush2.msra.mxu0 %v1543
        %1613 = vmatprep.subr.mxu0 0.0
        %1614 = vmatpush2.msra.mxu0 %v1542
        %1615 = vmatprep.subr.mxu0 0.0
        %1616 = vmatpush2.msra.mxu0 %v1541
        %1617 = vmatprep.subr.mxu0 0.0
        %1618 = vmatpush2.msra.mxu0 %v1540
        %1619 = vmatprep.mubr.f32.mxu0 %v1550
        %1620 = vmatmul.mubr.f32.gmra.mxu0 %v1521
        %v1621 = vpop.f32.mrf.mxu0
        %v1622 = vadd.f32 0.0, %v1621
        %v1623 = vpop.f32.mrf.mxu0
        %1624 = vdwg.mxu0
        %v1625 = vadd.f32 %v1523, %v1622
        %v1626 = vld [vmem:[%s689] sm:$0xff]
        %v1627 = vld [vmem:[%s689 + $0x8] sm:$0xff]
        %v1628 = vld [vmem:[%s689 + $0x10] sm:$0xff]
        %v1629 = vld [vmem:[%s689 + $0x18] sm:$0xff]
        %v1630 = vld [vmem:[%s689 + $0x20] sm:$0xff]
        %v1631 = vld [vmem:[%s689 + $0x28] sm:$0xff]
        %v1632 = vld [vmem:[%s689 + $0x30] sm:$0xff]
        %v1633 = vld [vmem:[%s689 + $0x38] sm:$0xff]
        %v1634 = vld [vmem:[%s689 + $0x40] sm:$0xff]
        %v1635 = vld [vmem:[%s689 + $0x48] sm:$0xff]
        %v1636 = vld [vmem:[%s689 + $0x50] sm:$0xff]
        %v1637 = vld [vmem:[%s689 + $0x58] sm:$0xff]
        %v1638 = vld [vmem:[%s689 + $0x60] sm:$0xff]
        %v1639 = vld [vmem:[%s689 + $0x68] sm:$0xff]
        %v1640 = vld [vmem:[%s689 + $0x70] sm:$0xff]
        %v1641 = vld [vmem:[%s689 + $0x78] sm:$0xff]
        %v1642 = vld [vmem:[%s689 + $0x80] sm:$0xff]
        %v1643 = vld [vmem:[%s689 + $0x88] sm:$0xff]
        %v1644 = vld [vmem:[%s689 + $0x90] sm:$0xff]
        %v1645 = vld [vmem:[%s689 + $0x98] sm:$0xff]
        %v1646 = vld [vmem:[%s689 + $0xa0] sm:$0xff]
        %v1647 = vld [vmem:[%s689 + $0xa8] sm:$0xff]
        %v1648 = vld [vmem:[%s689 + $0xb0] sm:$0xff]
        %v1649 = vld [vmem:[%s689 + $0xb8] sm:$0xff]
        %v1650 = vld [vmem:[%s689 + $0xc0] sm:$0xf]
        %v1652 = vrot.slane %v1521, 1
        %v1653 = vrot.slane %v1522, 1
        %v1655 = vsel %vm610, %v1653, 0
        %v1658 = vsel %vm614, %v1650, 0
        %1660 = vmatprep.subr.mxu0 0.0
        %1661 = vmatpush1.msra.mxu0 %v1641
        %1662 = vmatprep.subr.mxu0 0.0
        %1663 = vmatpush1.msra.mxu0 %v1640
        %1664 = vmatprep.subr.mxu0 0.0
        %1665 = vmatpush1.msra.mxu0 %v1639
        %1666 = vmatprep.subr.mxu0 0.0
        %1667 = vmatpush1.msra.mxu0 %v1638
        %1668 = vmatprep.subr.mxu0 0.0
        %1669 = vmatpush1.msra.mxu0 %v1637
        %1670 = vmatprep.subr.mxu0 0.0
        %1671 = vmatpush1.msra.mxu0 %v1636
        %1672 = vmatprep.subr.mxu0 0.0
        %1673 = vmatpush1.msra.mxu0 %v1635
        %1674 = vmatprep.subr.mxu0 0.0
        %1675 = vmatpush1.msra.mxu0 %v1634
        %1676 = vmatprep.subr.mxu0 0.0
        %1677 = vmatpush1.msra.mxu0 %v1633
        %1678 = vmatprep.subr.mxu0 0.0
        %1679 = vmatpush1.msra.mxu0 %v1632
        %1680 = vmatprep.subr.mxu0 0.0
        %1681 = vmatpush1.msra.mxu0 %v1631
        %1682 = vmatprep.subr.mxu0 0.0
        %1683 = vmatpush1.msra.mxu0 %v1630
        %1684 = vmatprep.subr.mxu0 0.0
        %1685 = vmatpush1.msra.mxu0 %v1629
        %1686 = vmatprep.subr.mxu0 0.0
        %1687 = vmatpush1.msra.mxu0 %v1628
        %1688 = vmatprep.subr.mxu0 0.0
        %1689 = vmatpush1.msra.mxu0 %v1627
        %1690 = vmatprep.subr.mxu0 0.0
        %1691 = vmatpush1.msra.mxu0 %v1626
        %1692 = vmatprep.subr.mxu0 0.0
        %1693 = vmatpush2.msra.mxu0 0.0
        %1694 = vmatprep.subr.mxu0 0.0
        %1695 = vmatpush2.msra.mxu0 0.0
        %1696 = vmatprep.subr.mxu0 0.0
        %1697 = vmatpush2.msra.mxu0 0.0
        %1698 = vmatprep.subr.mxu0 0.0
        %1699 = vmatpush2.msra.mxu0 0.0
        %1700 = vmatprep.subr.mxu0 0.0
        %1701 = vmatpush2.msra.mxu0 0.0
        %1702 = vmatprep.subr.mxu0 0.0
        %1703 = vmatpush2.msra.mxu0 0.0
        %1704 = vmatprep.subr.mxu0 0.0
        %1705 = vmatpush2.msra.mxu0 0.0
        %1706 = vmatprep.subr.mxu0 0.0
        %1707 = vmatpush2.msra.mxu0 %v1658
        %1708 = vmatprep.subr.mxu0 0.0
        %1709 = vmatpush2.msra.mxu0 %v1649
        %1710 = vmatprep.subr.mxu0 0.0
        %1711 = vmatpush2.msra.mxu0 %v1648
        %1712 = vmatprep.subr.mxu0 0.0
        %1713 = vmatpush2.msra.mxu0 %v1647
        %1714 = vmatprep.subr.mxu0 0.0
        %1715 = vmatpush2.msra.mxu0 %v1646
        %1716 = vmatprep.subr.mxu0 0.0
        %1717 = vmatpush2.msra.mxu0 %v1645
        %1718 = vmatprep.subr.mxu0 0.0
        %1719 = vmatpush2.msra.mxu0 %v1644
        %1720 = vmatprep.subr.mxu0 0.0
        %1721 = vmatpush2.msra.mxu0 %v1643
        %1722 = vmatprep.subr.mxu0 0.0
        %1723 = vmatpush2.msra.mxu0 %v1642
        %1724 = vmatprep.mubr.f32.mxu0 %v1655
        %1725 = vmatmul.mubr.f32.gmra.mxu0 %v1652
        %v1726 = vpop.f32.mrf.mxu0
        %v1727 = vadd.f32 0.0, %v1726
        %v1728 = vpop.f32.mrf.mxu0
        %1729 = vdwg.mxu0
        %v1730 = vadd.f32 %v1625, %v1727
        %v1731 = vld [vmem:[%s795] sm:$0xff]
        %v1732 = vld [vmem:[%s795 + $0x8] sm:$0xff]
        %v1733 = vld [vmem:[%s795 + $0x10] sm:$0xff]
        %v1734 = vld [vmem:[%s795 + $0x18] sm:$0xff]
        %v1735 = vld [vmem:[%s795 + $0x20] sm:$0xff]
        %v1736 = vld [vmem:[%s795 + $0x28] sm:$0xff]
        %v1737 = vld [vmem:[%s795 + $0x30] sm:$0xff]
        %v1738 = vld [vmem:[%s795 + $0x38] sm:$0xff]
        %v1739 = vld [vmem:[%s795 + $0x40] sm:$0xff]
        %v1740 = vld [vmem:[%s795 + $0x48] sm:$0xff]
        %v1741 = vld [vmem:[%s795 + $0x50] sm:$0xff]
        %v1742 = vld [vmem:[%s795 + $0x58] sm:$0xff]
        %v1743 = vld [vmem:[%s795 + $0x60] sm:$0xff]
        %v1744 = vld [vmem:[%s795 + $0x68] sm:$0xff]
        %v1745 = vld [vmem:[%s795 + $0x70] sm:$0xff]
        %v1746 = vld [vmem:[%s795 + $0x78] sm:$0xff]
        %v1747 = vld [vmem:[%s795 + $0x80] sm:$0xff]
        %v1748 = vld [vmem:[%s795 + $0x88] sm:$0xff]
        %v1749 = vld [vmem:[%s795 + $0x90] sm:$0xff]
        %v1750 = vld [vmem:[%s795 + $0x98] sm:$0xff]
        %v1751 = vld [vmem:[%s795 + $0xa0] sm:$0xff]
        %v1752 = vld [vmem:[%s795 + $0xa8] sm:$0xff]
        %v1753 = vld [vmem:[%s795 + $0xb0] sm:$0xff]
        %v1754 = vld [vmem:[%s795 + $0xb8] sm:$0xff]
        %v1755 = vld [vmem:[%s795 + $0xc0] sm:$0xf]
        %v1756 = vrot.slane %v1521, 2
        %v1757 = vrot.slane %v1522, 2
        %v1759 = vsel %vm610, %v1757, 0
        %v1762 = vsel %vm614, %v1755, 0
        %1764 = vmatprep.subr.mxu0 0.0
        %1765 = vmatpush1.msra.mxu0 %v1746
        %1766 = vmatprep.subr.mxu0 0.0
        %1767 = vmatpush1.msra.mxu0 %v1745
        %1768 = vmatprep.subr.mxu0 0.0
        %1769 = vmatpush1.msra.mxu0 %v1744
        %1770 = vmatprep.subr.mxu0 0.0
        %1771 = vmatpush1.msra.mxu0 %v1743
        %1772 = vmatprep.subr.mxu0 0.0
        %1773 = vmatpush1.msra.mxu0 %v1742
        %1774 = vmatprep.subr.mxu0 0.0
        %1775 = vmatpush1.msra.mxu0 %v1741
        %1776 = vmatprep.subr.mxu0 0.0
        %1777 = vmatpush1.msra.mxu0 %v1740
        %1778 = vmatprep.subr.mxu0 0.0
        %1779 = vmatpush1.msra.mxu0 %v1739
        %1780 = vmatprep.subr.mxu0 0.0
        %1781 = vmatpush1.msra.mxu0 %v1738
        %1782 = vmatprep.subr.mxu0 0.0
        %1783 = vmatpush1.msra.mxu0 %v1737
        %1784 = vmatprep.subr.mxu0 0.0
        %1785 = vmatpush1.msra.mxu0 %v1736
        %1786 = vmatprep.subr.mxu0 0.0
        %1787 = vmatpush1.msra.mxu0 %v1735
        %1788 = vmatprep.subr.mxu0 0.0
        %1789 = vmatpush1.msra.mxu0 %v1734
        %1790 = vmatprep.subr.mxu0 0.0
        %1791 = vmatpush1.msra.mxu0 %v1733
        %1792 = vmatprep.subr.mxu0 0.0
        %1793 = vmatpush1.msra.mxu0 %v1732
        %1794 = vmatprep.subr.mxu0 0.0
        %1795 = vmatpush1.msra.mxu0 %v1731
        %1796 = vmatprep.subr.mxu0 0.0
        %1797 = vmatpush2.msra.mxu0 0.0
        %1798 = vmatprep.subr.mxu0 0.0
        %1799 = vmatpush2.msra.mxu0 0.0
        %1800 = vmatprep.subr.mxu0 0.0
        %1801 = vmatpush2.msra.mxu0 0.0
        %1802 = vmatprep.subr.mxu0 0.0
        %1803 = vmatpush2.msra.mxu0 0.0
        %1804 = vmatprep.subr.mxu0 0.0
        %1805 = vmatpush2.msra.mxu0 0.0
        %1806 = vmatprep.subr.mxu0 0.0
        %1807 = vmatpush2.msra.mxu0 0.0
        %1808 = vmatprep.subr.mxu0 0.0
        %1809 = vmatpush2.msra.mxu0 0.0
        %1810 = vmatprep.subr.mxu0 0.0
        %1811 = vmatpush2.msra.mxu0 %v1762
        %1812 = vmatprep.subr.mxu0 0.0
        %1813 = vmatpush2.msra.mxu0 %v1754
        %1814 = vmatprep.subr.mxu0 0.0
        %1815 = vmatpush2.msra.mxu0 %v1753
        %1816 = vmatprep.subr.mxu0 0.0
        %1817 = vmatpush2.msra.mxu0 %v1752
        %1818 = vmatprep.subr.mxu0 0.0
        %1819 = vmatpush2.msra.mxu0 %v1751
        %1820 = vmatprep.subr.mxu0 0.0
        %1821 = vmatpush2.msra.mxu0 %v1750
        %1822 = vmatprep.subr.mxu0 0.0
        %1823 = vmatpush2.msra.mxu0 %v1749
        %1824 = vmatprep.subr.mxu0 0.0
        %1825 = vmatpush2.msra.mxu0 %v1748
        %1826 = vmatprep.subr.mxu0 0.0
        %1827 = vmatpush2.msra.mxu0 %v1747
        %1828 = vmatprep.mubr.f32.mxu0 %v1759
        %1829 = vmatmul.mubr.f32.gmra.mxu0 %v1756
        %v1830 = vpop.f32.mrf.mxu0
        %v1831 = vadd.f32 0.0, %v1830
        %v1832 = vpop.f32.mrf.mxu0
        %1833 = vdwg.mxu0
        %v1834 = vadd.f32 %v1730, %v1831
        %v1835 = vld [vmem:[%s900] sm:$0xff]
        %v1836 = vld [vmem:[%s900 + $0x8] sm:$0xff]
        %v1837 = vld [vmem:[%s900 + $0x10] sm:$0xff]
        %v1838 = vld [vmem:[%s900 + $0x18] sm:$0xff]
        %v1839 = vld [vmem:[%s900 + $0x20] sm:$0xff]
        %v1840 = vld [vmem:[%s900 + $0x28] sm:$0xff]
        %v1841 = vld [vmem:[%s900 + $0x30] sm:$0xff]
        %v1842 = vld [vmem:[%s900 + $0x38] sm:$0xff]
        %v1843 = vld [vmem:[%s900 + $0x40] sm:$0xff]
        %v1844 = vld [vmem:[%s900 + $0x48] sm:$0xff]
        %v1845 = vld [vmem:[%s900 + $0x50] sm:$0xff]
        %v1846 = vld [vmem:[%s900 + $0x58] sm:$0xff]
        %v1847 = vld [vmem:[%s900 + $0x60] sm:$0xff]
        %v1848 = vld [vmem:[%s900 + $0x68] sm:$0xff]
        %v1849 = vld [vmem:[%s900 + $0x70] sm:$0xff]
        %v1850 = vld [vmem:[%s900 + $0x78] sm:$0xff]
        %v1851 = vld [vmem:[%s900 + $0x80] sm:$0xff]
        %v1852 = vld [vmem:[%s900 + $0x88] sm:$0xff]
        %v1853 = vld [vmem:[%s900 + $0x90] sm:$0xff]
        %v1854 = vld [vmem:[%s900 + $0x98] sm:$0xff]
        %v1855 = vld [vmem:[%s900 + $0xa0] sm:$0xff]
        %v1856 = vld [vmem:[%s900 + $0xa8] sm:$0xff]
        %v1857 = vld [vmem:[%s900 + $0xb0] sm:$0xff]
        %v1858 = vld [vmem:[%s900 + $0xb8] sm:$0xff]
        %v1859 = vld [vmem:[%s900 + $0xc0] sm:$0xf]
        %v1860 = vrot.slane %v1521, 3
        %v1861 = vrot.slane %v1522, 3
        %v1863 = vsel %vm610, %v1861, 0
        %v1866 = vsel %vm614, %v1859, 0
        %1868 = vmatprep.subr.mxu0 0.0
        %1869 = vmatpush1.msra.mxu0 %v1850
        %1870 = vmatprep.subr.mxu0 0.0
        %1871 = vmatpush1.msra.mxu0 %v1849
        %1872 = vmatprep.subr.mxu0 0.0
        %1873 = vmatpush1.msra.mxu0 %v1848
        %1874 = vmatprep.subr.mxu0 0.0
        %1875 = vmatpush1.msra.mxu0 %v1847
        %1876 = vmatprep.subr.mxu0 0.0
        %1877 = vmatpush1.msra.mxu0 %v1846
        %1878 = vmatprep.subr.mxu0 0.0
        %1879 = vmatpush1.msra.mxu0 %v1845
        %1880 = vmatprep.subr.mxu0 0.0
        %1881 = vmatpush1.msra.mxu0 %v1844
        %1882 = vmatprep.subr.mxu0 0.0
        %1883 = vmatpush1.msra.mxu0 %v1843
        %1884 = vmatprep.subr.mxu0 0.0
        %1885 = vmatpush1.msra.mxu0 %v1842
        %1886 = vmatprep.subr.mxu0 0.0
        %1887 = vmatpush1.msra.mxu0 %v1841
        %1888 = vmatprep.subr.mxu0 0.0
        %1889 = vmatpush1.msra.mxu0 %v1840
        %1890 = vmatprep.subr.mxu0 0.0
        %1891 = vmatpush1.msra.mxu0 %v1839
        %1892 = vmatprep.subr.mxu0 0.0
        %1893 = vmatpush1.msra.mxu0 %v1838
        %1894 = vmatprep.subr.mxu0 0.0
        %1895 = vmatpush1.msra.mxu0 %v1837
        %1896 = vmatprep.subr.mxu0 0.0
        %1897 = vmatpush1.msra.mxu0 %v1836
        %1898 = vmatprep.subr.mxu0 0.0
        %1899 = vmatpush1.msra.mxu0 %v1835
        %1900 = vmatprep.subr.mxu0 0.0
        %1901 = vmatpush2.msra.mxu0 0.0
        %1902 = vmatprep.subr.mxu0 0.0
        %1903 = vmatpush2.msra.mxu0 0.0
        %1904 = vmatprep.subr.mxu0 0.0
        %1905 = vmatpush2.msra.mxu0 0.0
        %1906 = vmatprep.subr.mxu0 0.0
        %1907 = vmatpush2.msra.mxu0 0.0
        %1908 = vmatprep.subr.mxu0 0.0
        %1909 = vmatpush2.msra.mxu0 0.0
        %1910 = vmatprep.subr.mxu0 0.0
        %1911 = vmatpush2.msra.mxu0 0.0
        %1912 = vmatprep.subr.mxu0 0.0
        %1913 = vmatpush2.msra.mxu0 0.0
        %1914 = vmatprep.subr.mxu0 0.0
        %1915 = vmatpush2.msra.mxu0 %v1866
        %1916 = vmatprep.subr.mxu0 0.0
        %1917 = vmatpush2.msra.mxu0 %v1858
        %1918 = vmatprep.subr.mxu0 0.0
        %1919 = vmatpush2.msra.mxu0 %v1857
        %1920 = vmatprep.subr.mxu0 0.0
        %1921 = vmatpush2.msra.mxu0 %v1856
        %1922 = vmatprep.subr.mxu0 0.0
        %1923 = vmatpush2.msra.mxu0 %v1855
        %1924 = vmatprep.subr.mxu0 0.0
        %1925 = vmatpush2.msra.mxu0 %v1854
        %1926 = vmatprep.subr.mxu0 0.0
        %1927 = vmatpush2.msra.mxu0 %v1853
        %1928 = vmatprep.subr.mxu0 0.0
        %1929 = vmatpush2.msra.mxu0 %v1852
        %1930 = vmatprep.subr.mxu0 0.0
        %1931 = vmatpush2.msra.mxu0 %v1851
        %1932 = vmatprep.mubr.f32.mxu0 %v1863
        %1933 = vmatmul.mubr.f32.gmra.mxu0 %v1860
        %v1934 = vpop.f32.mrf.mxu0
        %v1935 = vadd.f32 0.0, %v1934
        %v1936 = vpop.f32.mrf.mxu0
        %1937 = vdwg.mxu0
        %v1938 = vadd.f32 %v1834, %v1935
        %v1939 = vld [vmem:[%s1005] sm:$0xff]
        %v1940 = vld [vmem:[%s1005 + $0x8] sm:$0xff]
        %v1941 = vld [vmem:[%s1005 + $0x10] sm:$0xff]
        %v1942 = vld [vmem:[%s1005 + $0x18] sm:$0xff]
        %v1943 = vld [vmem:[%s1005 + $0x20] sm:$0xff]
        %v1944 = vld [vmem:[%s1005 + $0x28] sm:$0xff]
        %v1945 = vld [vmem:[%s1005 + $0x30] sm:$0xff]
        %v1946 = vld [vmem:[%s1005 + $0x38] sm:$0xff]
        %v1947 = vld [vmem:[%s1005 + $0x40] sm:$0xff]
        %v1948 = vld [vmem:[%s1005 + $0x48] sm:$0xff]
        %v1949 = vld [vmem:[%s1005 + $0x50] sm:$0xff]
        %v1950 = vld [vmem:[%s1005 + $0x58] sm:$0xff]
        %v1951 = vld [vmem:[%s1005 + $0x60] sm:$0xff]
        %v1952 = vld [vmem:[%s1005 + $0x68] sm:$0xff]
        %v1953 = vld [vmem:[%s1005 + $0x70] sm:$0xff]
        %v1954 = vld [vmem:[%s1005 + $0x78] sm:$0xff]
        %v1955 = vld [vmem:[%s1005 + $0x80] sm:$0xff]
        %v1956 = vld [vmem:[%s1005 + $0x88] sm:$0xff]
        %v1957 = vld [vmem:[%s1005 + $0x90] sm:$0xff]
        %v1958 = vld [vmem:[%s1005 + $0x98] sm:$0xff]
        %v1959 = vld [vmem:[%s1005 + $0xa0] sm:$0xff]
        %v1960 = vld [vmem:[%s1005 + $0xa8] sm:$0xff]
        %v1961 = vld [vmem:[%s1005 + $0xb0] sm:$0xff]
        %v1962 = vld [vmem:[%s1005 + $0xb8] sm:$0xff]
        %v1963 = vld [vmem:[%s1005 + $0xc0] sm:$0xf]
        %v1964 = vrot.slane %v1521, 4
        %v1965 = vrot.slane %v1522, 4
        %v1967 = vsel %vm610, %v1965, 0
        %v1970 = vsel %vm614, %v1963, 0
        %1972 = vmatprep.subr.mxu0 0.0
        %1973 = vmatpush1.msra.mxu0 %v1954
        %1974 = vmatprep.subr.mxu0 0.0
        %1975 = vmatpush1.msra.mxu0 %v1953
        %1976 = vmatprep.subr.mxu0 0.0
        %1977 = vmatpush1.msra.mxu0 %v1952
        %1978 = vmatprep.subr.mxu0 0.0
        %1979 = vmatpush1.msra.mxu0 %v1951
        %1980 = vmatprep.subr.mxu0 0.0
        %1981 = vmatpush1.msra.mxu0 %v1950
        %1982 = vmatprep.subr.mxu0 0.0
        %1983 = vmatpush1.msra.mxu0 %v1949
        %1984 = vmatprep.subr.mxu0 0.0
        %1985 = vmatpush1.msra.mxu0 %v1948
        %1986 = vmatprep.subr.mxu0 0.0
        %1987 = vmatpush1.msra.mxu0 %v1947
        %1988 = vmatprep.subr.mxu0 0.0
        %1989 = vmatpush1.msra.mxu0 %v1946
        %1990 = vmatprep.subr.mxu0 0.0
        %1991 = vmatpush1.msra.mxu0 %v1945
        %1992 = vmatprep.subr.mxu0 0.0
        %1993 = vmatpush1.msra.mxu0 %v1944
        %1994 = vmatprep.subr.mxu0 0.0
        %1995 = vmatpush1.msra.mxu0 %v1943
        %1996 = vmatprep.subr.mxu0 0.0
        %1997 = vmatpush1.msra.mxu0 %v1942
        %1998 = vmatprep.subr.mxu0 0.0
        %1999 = vmatpush1.msra.mxu0 %v1941
        %2000 = vmatprep.subr.mxu0 0.0
        %2001 = vmatpush1.msra.mxu0 %v1940
        %2002 = vmatprep.subr.mxu0 0.0
        %2003 = vmatpush1.msra.mxu0 %v1939
        %2004 = vmatprep.subr.mxu0 0.0
        %2005 = vmatpush2.msra.mxu0 0.0
        %2006 = vmatprep.subr.mxu0 0.0
        %2007 = vmatpush2.msra.mxu0 0.0
        %2008 = vmatprep.subr.mxu0 0.0
        %2009 = vmatpush2.msra.mxu0 0.0
        %2010 = vmatprep.subr.mxu0 0.0
        %2011 = vmatpush2.msra.mxu0 0.0
        %2012 = vmatprep.subr.mxu0 0.0
        %2013 = vmatpush2.msra.mxu0 0.0
        %2014 = vmatprep.subr.mxu0 0.0
        %2015 = vmatpush2.msra.mxu0 0.0
        %2016 = vmatprep.subr.mxu0 0.0
        %2017 = vmatpush2.msra.mxu0 0.0
        %2018 = vmatprep.subr.mxu0 0.0
        %2019 = vmatpush2.msra.mxu0 %v1970
        %2020 = vmatprep.subr.mxu0 0.0
        %2021 = vmatpush2.msra.mxu0 %v1962
        %2022 = vmatprep.subr.mxu0 0.0
        %2023 = vmatpush2.msra.mxu0 %v1961
        %2024 = vmatprep.subr.mxu0 0.0
        %2025 = vmatpush2.msra.mxu0 %v1960
        %2026 = vmatprep.subr.mxu0 0.0
        %2027 = vmatpush2.msra.mxu0 %v1959
        %2028 = vmatprep.subr.mxu0 0.0
        %2029 = vmatpush2.msra.mxu0 %v1958
        %2030 = vmatprep.subr.mxu0 0.0
        %2031 = vmatpush2.msra.mxu0 %v1957
        %2032 = vmatprep.subr.mxu0 0.0
        %2033 = vmatpush2.msra.mxu0 %v1956
        %2034 = vmatprep.subr.mxu0 0.0
        %2035 = vmatpush2.msra.mxu0 %v1955
        %2036 = vmatprep.mubr.f32.mxu0 %v1967
        %2037 = vmatmul.mubr.f32.gmra.mxu0 %v1964
        %v2038 = vpop.f32.mrf.mxu0
        %v2039 = vadd.f32 0.0, %v2038
        %v2040 = vpop.f32.mrf.mxu0
        %2041 = vdwg.mxu0
        %v2042 = vadd.f32 %v1938, %v2039
        %v2043 = vld [vmem:[%s1110] sm:$0xff]
        %v2044 = vld [vmem:[%s1110 + $0x8] sm:$0xff]
        %v2045 = vld [vmem:[%s1110 + $0x10] sm:$0xff]
        %v2046 = vld [vmem:[%s1110 + $0x18] sm:$0xff]
        %v2047 = vld [vmem:[%s1110 + $0x20] sm:$0xff]
        %v2048 = vld [vmem:[%s1110 + $0x28] sm:$0xff]
        %v2049 = vld [vmem:[%s1110 + $0x30] sm:$0xff]
        %v2050 = vld [vmem:[%s1110 + $0x38] sm:$0xff]
        %v2051 = vld [vmem:[%s1110 + $0x40] sm:$0xff]
        %v2052 = vld [vmem:[%s1110 + $0x48] sm:$0xff]
        %v2053 = vld [vmem:[%s1110 + $0x50] sm:$0xff]
        %v2054 = vld [vmem:[%s1110 + $0x58] sm:$0xff]
        %v2055 = vld [vmem:[%s1110 + $0x60] sm:$0xff]
        %v2056 = vld [vmem:[%s1110 + $0x68] sm:$0xff]
        %v2057 = vld [vmem:[%s1110 + $0x70] sm:$0xff]
        %v2058 = vld [vmem:[%s1110 + $0x78] sm:$0xff]
        %v2059 = vld [vmem:[%s1110 + $0x80] sm:$0xff]
        %v2060 = vld [vmem:[%s1110 + $0x88] sm:$0xff]
        %v2061 = vld [vmem:[%s1110 + $0x90] sm:$0xff]
        %v2062 = vld [vmem:[%s1110 + $0x98] sm:$0xff]
        %v2063 = vld [vmem:[%s1110 + $0xa0] sm:$0xff]
        %v2064 = vld [vmem:[%s1110 + $0xa8] sm:$0xff]
        %v2065 = vld [vmem:[%s1110 + $0xb0] sm:$0xff]
        %v2066 = vld [vmem:[%s1110 + $0xb8] sm:$0xff]
        %v2067 = vld [vmem:[%s1110 + $0xc0] sm:$0xf]
        %v2068 = vrot.slane %v1521, 5
        %v2069 = vrot.slane %v1522, 5
        %v2071 = vsel %vm610, %v2069, 0
        %v2074 = vsel %vm614, %v2067, 0
        %2076 = vmatprep.subr.mxu0 0.0
        %2077 = vmatpush1.msra.mxu0 %v2058
        %2078 = vmatprep.subr.mxu0 0.0
        %2079 = vmatpush1.msra.mxu0 %v2057
        %2080 = vmatprep.subr.mxu0 0.0
        %2081 = vmatpush1.msra.mxu0 %v2056
        %2082 = vmatprep.subr.mxu0 0.0
        %2083 = vmatpush1.msra.mxu0 %v2055
        %2084 = vmatprep.subr.mxu0 0.0
        %2085 = vmatpush1.msra.mxu0 %v2054
        %2086 = vmatprep.subr.mxu0 0.0
        %2087 = vmatpush1.msra.mxu0 %v2053
        %2088 = vmatprep.subr.mxu0 0.0
        %2089 = vmatpush1.msra.mxu0 %v2052
        %2090 = vmatprep.subr.mxu0 0.0
        %2091 = vmatpush1.msra.mxu0 %v2051
        %2092 = vmatprep.subr.mxu0 0.0
        %2093 = vmatpush1.msra.mxu0 %v2050
        %2094 = vmatprep.subr.mxu0 0.0
        %2095 = vmatpush1.msra.mxu0 %v2049
        %2096 = vmatprep.subr.mxu0 0.0
        %2097 = vmatpush1.msra.mxu0 %v2048
        %2098 = vmatprep.subr.mxu0 0.0
        %2099 = vmatpush1.msra.mxu0 %v2047
        %2100 = vmatprep.subr.mxu0 0.0
        %2101 = vmatpush1.msra.mxu0 %v2046
        %2102 = vmatprep.subr.mxu0 0.0
        %2103 = vmatpush1.msra.mxu0 %v2045
        %2104 = vmatprep.subr.mxu0 0.0
        %2105 = vmatpush1.msra.mxu0 %v2044
        %2106 = vmatprep.subr.mxu0 0.0
        %2107 = vmatpush1.msra.mxu0 %v2043
        %2108 = vmatprep.subr.mxu0 0.0
        %2109 = vmatpush2.msra.mxu0 0.0
        %2110 = vmatprep.subr.mxu0 0.0
        %2111 = vmatpush2.msra.mxu0 0.0
        %2112 = vmatprep.subr.mxu0 0.0
        %2113 = vmatpush2.msra.mxu0 0.0
        %2114 = vmatprep.subr.mxu0 0.0
        %2115 = vmatpush2.msra.mxu0 0.0
        %2116 = vmatprep.subr.mxu0 0.0
        %2117 = vmatpush2.msra.mxu0 0.0
        %2118 = vmatprep.subr.mxu0 0.0
        %2119 = vmatpush2.msra.mxu0 0.0
        %2120 = vmatprep.subr.mxu0 0.0
        %2121 = vmatpush2.msra.mxu0 0.0
        %2122 = vmatprep.subr.mxu0 0.0
        %2123 = vmatpush2.msra.mxu0 %v2074
        %2124 = vmatprep.subr.mxu0 0.0
        %2125 = vmatpush2.msra.mxu0 %v2066
        %2126 = vmatprep.subr.mxu0 0.0
        %2127 = vmatpush2.msra.mxu0 %v2065
        %2128 = vmatprep.subr.mxu0 0.0
        %2129 = vmatpush2.msra.mxu0 %v2064
        %2130 = vmatprep.subr.mxu0 0.0
        %2131 = vmatpush2.msra.mxu0 %v2063
        %2132 = vmatprep.subr.mxu0 0.0
        %2133 = vmatpush2.msra.mxu0 %v2062
        %2134 = vmatprep.subr.mxu0 0.0
        %2135 = vmatpush2.msra.mxu0 %v2061
        %2136 = vmatprep.subr.mxu0 0.0
        %2137 = vmatpush2.msra.mxu0 %v2060
        %2138 = vmatprep.subr.mxu0 0.0
        %2139 = vmatpush2.msra.mxu0 %v2059
        %2140 = vmatprep.mubr.f32.mxu0 %v2071
        %2141 = vmatmul.mubr.f32.gmra.mxu0 %v2068
        %v2142 = vpop.f32.mrf.mxu0
        %v2143 = vadd.f32 0.0, %v2142
        %v2144 = vpop.f32.mrf.mxu0
        %2145 = vdwg.mxu0
        %v2146 = vadd.f32 %v2042, %v2143
        %v2147 = vld [vmem:[%s1215] sm:$0xff]
        %v2148 = vld [vmem:[%s1215 + $0x8] sm:$0xff]
        %v2149 = vld [vmem:[%s1215 + $0x10] sm:$0xff]
        %v2150 = vld [vmem:[%s1215 + $0x18] sm:$0xff]
        %v2151 = vld [vmem:[%s1215 + $0x20] sm:$0xff]
        %v2152 = vld [vmem:[%s1215 + $0x28] sm:$0xff]
        %v2153 = vld [vmem:[%s1215 + $0x30] sm:$0xff]
        %v2154 = vld [vmem:[%s1215 + $0x38] sm:$0xff]
        %v2155 = vld [vmem:[%s1215 + $0x40] sm:$0xff]
        %v2156 = vld [vmem:[%s1215 + $0x48] sm:$0xff]
        %v2157 = vld [vmem:[%s1215 + $0x50] sm:$0xff]
        %v2158 = vld [vmem:[%s1215 + $0x58] sm:$0xff]
        %v2159 = vld [vmem:[%s1215 + $0x60] sm:$0xff]
        %v2160 = vld [vmem:[%s1215 + $0x68] sm:$0xff]
        %v2161 = vld [vmem:[%s1215 + $0x70] sm:$0xff]
        %v2162 = vld [vmem:[%s1215 + $0x78] sm:$0xff]
        %v2163 = vld [vmem:[%s1215 + $0x80] sm:$0xff]
        %v2164 = vld [vmem:[%s1215 + $0x88] sm:$0xff]
        %v2165 = vld [vmem:[%s1215 + $0x90] sm:$0xff]
        %v2166 = vld [vmem:[%s1215 + $0x98] sm:$0xff]
        %v2167 = vld [vmem:[%s1215 + $0xa0] sm:$0xff]
        %v2168 = vld [vmem:[%s1215 + $0xa8] sm:$0xff]
        %v2169 = vld [vmem:[%s1215 + $0xb0] sm:$0xff]
        %v2170 = vld [vmem:[%s1215 + $0xb8] sm:$0xff]
        %v2171 = vld [vmem:[%s1215 + $0xc0] sm:$0xf]
        %v2172 = vrot.slane %v1521, 6
        %v2173 = vrot.slane %v1522, 6
        %v2175 = vsel %vm610, %v2173, 0
        %v2178 = vsel %vm614, %v2171, 0
        %2180 = vmatprep.subr.mxu0 0.0
        %2181 = vmatpush1.msra.mxu0 %v2162
        %2182 = vmatprep.subr.mxu0 0.0
        %2183 = vmatpush1.msra.mxu0 %v2161
        %2184 = vmatprep.subr.mxu0 0.0
        %2185 = vmatpush1.msra.mxu0 %v2160
        %2186 = vmatprep.subr.mxu0 0.0
        %2187 = vmatpush1.msra.mxu0 %v2159
        %2188 = vmatprep.subr.mxu0 0.0
        %2189 = vmatpush1.msra.mxu0 %v2158
        %2190 = vmatprep.subr.mxu0 0.0
        %2191 = vmatpush1.msra.mxu0 %v2157
        %2192 = vmatprep.subr.mxu0 0.0
        %2193 = vmatpush1.msra.mxu0 %v2156
        %2194 = vmatprep.subr.mxu0 0.0
        %2195 = vmatpush1.msra.mxu0 %v2155
        %2196 = vmatprep.subr.mxu0 0.0
        %2197 = vmatpush1.msra.mxu0 %v2154
        %2198 = vmatprep.subr.mxu0 0.0
        %2199 = vmatpush1.msra.mxu0 %v2153
        %2200 = vmatprep.subr.mxu0 0.0
        %2201 = vmatpush1.msra.mxu0 %v2152
        %2202 = vmatprep.subr.mxu0 0.0
        %2203 = vmatpush1.msra.mxu0 %v2151
        %2204 = vmatprep.subr.mxu0 0.0
        %2205 = vmatpush1.msra.mxu0 %v2150
        %2206 = vmatprep.subr.mxu0 0.0
        %2207 = vmatpush1.msra.mxu0 %v2149
        %2208 = vmatprep.subr.mxu0 0.0
        %2209 = vmatpush1.msra.mxu0 %v2148
        %2210 = vmatprep.subr.mxu0 0.0
        %2211 = vmatpush1.msra.mxu0 %v2147
        %2212 = vmatprep.subr.mxu0 0.0
        %2213 = vmatpush2.msra.mxu0 0.0
        %2214 = vmatprep.subr.mxu0 0.0
        %2215 = vmatpush2.msra.mxu0 0.0
        %2216 = vmatprep.subr.mxu0 0.0
        %2217 = vmatpush2.msra.mxu0 0.0
        %2218 = vmatprep.subr.mxu0 0.0
        %2219 = vmatpush2.msra.mxu0 0.0
        %2220 = vmatprep.subr.mxu0 0.0
        %2221 = vmatpush2.msra.mxu0 0.0
        %2222 = vmatprep.subr.mxu0 0.0
        %2223 = vmatpush2.msra.mxu0 0.0
        %2224 = vmatprep.subr.mxu0 0.0
        %2225 = vmatpush2.msra.mxu0 0.0
        %2226 = vmatprep.subr.mxu0 0.0
        %2227 = vmatpush2.msra.mxu0 %v2178
        %2228 = vmatprep.subr.mxu0 0.0
        %2229 = vmatpush2.msra.mxu0 %v2170
        %2230 = vmatprep.subr.mxu0 0.0
        %2231 = vmatpush2.msra.mxu0 %v2169
        %2232 = vmatprep.subr.mxu0 0.0
        %2233 = vmatpush2.msra.mxu0 %v2168
        %2234 = vmatprep.subr.mxu0 0.0
        %2235 = vmatpush2.msra.mxu0 %v2167
        %2236 = vmatprep.subr.mxu0 0.0
        %2237 = vmatpush2.msra.mxu0 %v2166
        %2238 = vmatprep.subr.mxu0 0.0
        %2239 = vmatpush2.msra.mxu0 %v2165
        %2240 = vmatprep.subr.mxu0 0.0
        %2241 = vmatpush2.msra.mxu0 %v2164
        %2242 = vmatprep.subr.mxu0 0.0
        %2243 = vmatpush2.msra.mxu0 %v2163
        %2244 = vmatprep.mubr.f32.mxu0 %v2175
        %2245 = vmatmul.mubr.f32.gmra.mxu0 %v2172
        %v2246 = vpop.f32.mrf.mxu0
        %v2247 = vadd.f32 0.0, %v2246
        %v2248 = vpop.f32.mrf.mxu0
        %2249 = vdwg.mxu0
        %v2250 = vadd.f32 %v2146, %v2247
        %v2251 = vld [vmem:[%s1320] sm:$0xff]
        %v2252 = vld [vmem:[%s1320 + $0x8] sm:$0xff]
        %v2253 = vld [vmem:[%s1320 + $0x10] sm:$0xff]
        %v2254 = vld [vmem:[%s1320 + $0x18] sm:$0xff]
        %v2255 = vld [vmem:[%s1320 + $0x20] sm:$0xff]
        %v2256 = vld [vmem:[%s1320 + $0x28] sm:$0xff]
        %v2257 = vld [vmem:[%s1320 + $0x30] sm:$0xff]
        %v2258 = vld [vmem:[%s1320 + $0x38] sm:$0xff]
        %v2259 = vld [vmem:[%s1320 + $0x40] sm:$0xff]
        %v2260 = vld [vmem:[%s1320 + $0x48] sm:$0xff]
        %v2261 = vld [vmem:[%s1320 + $0x50] sm:$0xff]
        %v2262 = vld [vmem:[%s1320 + $0x58] sm:$0xff]
        %v2263 = vld [vmem:[%s1320 + $0x60] sm:$0xff]
        %v2264 = vld [vmem:[%s1320 + $0x68] sm:$0xff]
        %v2265 = vld [vmem:[%s1320 + $0x70] sm:$0xff]
        %v2266 = vld [vmem:[%s1320 + $0x78] sm:$0xff]
        %v2267 = vld [vmem:[%s1320 + $0x80] sm:$0xff]
        %v2268 = vld [vmem:[%s1320 + $0x88] sm:$0xff]
        %v2269 = vld [vmem:[%s1320 + $0x90] sm:$0xff]
        %v2270 = vld [vmem:[%s1320 + $0x98] sm:$0xff]
        %v2271 = vld [vmem:[%s1320 + $0xa0] sm:$0xff]
        %v2272 = vld [vmem:[%s1320 + $0xa8] sm:$0xff]
        %v2273 = vld [vmem:[%s1320 + $0xb0] sm:$0xff]
        %v2274 = vld [vmem:[%s1320 + $0xb8] sm:$0xff]
        %v2275 = vld [vmem:[%s1320 + $0xc0] sm:$0xf]
        %v2276 = vrot.slane %v1521, 7
        %v2277 = vrot.slane %v1522, 7
        %v2279 = vsel %vm610, %v2277, 0
        %v2282 = vsel %vm614, %v2275, 0
        %2284 = vmatprep.subr.mxu0 0.0
        %2285 = vmatpush1.msra.mxu0 %v2266
        %2286 = vmatprep.subr.mxu0 0.0
        %2287 = vmatpush1.msra.mxu0 %v2265
        %2288 = vmatprep.subr.mxu0 0.0
        %2289 = vmatpush1.msra.mxu0 %v2264
        %2290 = vmatprep.subr.mxu0 0.0
        %2291 = vmatpush1.msra.mxu0 %v2263
        %2292 = vmatprep.subr.mxu0 0.0
        %2293 = vmatpush1.msra.mxu0 %v2262
        %2294 = vmatprep.subr.mxu0 0.0
        %2295 = vmatpush1.msra.mxu0 %v2261
        %2296 = vmatprep.subr.mxu0 0.0
        %2297 = vmatpush1.msra.mxu0 %v2260
        %2298 = vmatprep.subr.mxu0 0.0
        %2299 = vmatpush1.msra.mxu0 %v2259
        %2300 = vmatprep.subr.mxu0 0.0
        %2301 = vmatpush1.msra.mxu0 %v2258
        %2302 = vmatprep.subr.mxu0 0.0
        %2303 = vmatpush1.msra.mxu0 %v2257
        %2304 = vmatprep.subr.mxu0 0.0
        %2305 = vmatpush1.msra.mxu0 %v2256
        %2306 = vmatprep.subr.mxu0 0.0
        %2307 = vmatpush1.msra.mxu0 %v2255
        %2308 = vmatprep.subr.mxu0 0.0
        %2309 = vmatpush1.msra.mxu0 %v2254
        %2310 = vmatprep.subr.mxu0 0.0
        %2311 = vmatpush1.msra.mxu0 %v2253
        %2312 = vmatprep.subr.mxu0 0.0
        %2313 = vmatpush1.msra.mxu0 %v2252
        %2314 = vmatprep.subr.mxu0 0.0
        %2315 = vmatpush1.msra.mxu0 %v2251
        %2316 = vmatprep.subr.mxu0 0.0
        %2317 = vmatpush2.msra.mxu0 0.0
        %2318 = vmatprep.subr.mxu0 0.0
        %2319 = vmatpush2.msra.mxu0 0.0
        %2320 = vmatprep.subr.mxu0 0.0
        %2321 = vmatpush2.msra.mxu0 0.0
        %2322 = vmatprep.subr.mxu0 0.0
        %2323 = vmatpush2.msra.mxu0 0.0
        %2324 = vmatprep.subr.mxu0 0.0
        %2325 = vmatpush2.msra.mxu0 0.0
        %2326 = vmatprep.subr.mxu0 0.0
        %2327 = vmatpush2.msra.mxu0 0.0
        %2328 = vmatprep.subr.mxu0 0.0
        %2329 = vmatpush2.msra.mxu0 0.0
        %2330 = vmatprep.subr.mxu0 0.0
        %2331 = vmatpush2.msra.mxu0 %v2282
        %2332 = vmatprep.subr.mxu0 0.0
        %2333 = vmatpush2.msra.mxu0 %v2274
        %2334 = vmatprep.subr.mxu0 0.0
        %2335 = vmatpush2.msra.mxu0 %v2273
        %2336 = vmatprep.subr.mxu0 0.0
        %2337 = vmatpush2.msra.mxu0 %v2272
        %2338 = vmatprep.subr.mxu0 0.0
        %2339 = vmatpush2.msra.mxu0 %v2271
        %2340 = vmatprep.subr.mxu0 0.0
        %2341 = vmatpush2.msra.mxu0 %v2270
        %2342 = vmatprep.subr.mxu0 0.0
        %2343 = vmatpush2.msra.mxu0 %v2269
        %2344 = vmatprep.subr.mxu0 0.0
        %2345 = vmatpush2.msra.mxu0 %v2268
        %2346 = vmatprep.subr.mxu0 0.0
        %2347 = vmatpush2.msra.mxu0 %v2267
        %2348 = vmatprep.mubr.f32.mxu0 %v2279
        %2349 = vmatmul.mubr.f32.gmra.mxu0 %v2276
        %v2350 = vpop.f32.mrf.mxu0
        %v2351 = vadd.f32 0.0, %v2350
        %v2352 = vpop.f32.mrf.mxu0
        %2353 = vdwg.mxu0
        %v2354 = vadd.f32 %v2250, %v2351
        %v2357 = vunpack.c.l.s4 1966171168
        %v2358 = vunpack.c.0.s8 %v2357
        %v2359 = vlaneseq
        %v2360 = vshrl.u32 %v2359, 7
        %v2361 = vsub.s32 %v2358, %v2360
        %v2362 = vrot.slane %v485, %v2361
        %v2363 = vcombine.high %v2362, %v2362
        %v2365 = vunpack.c.l.s4 1966171168
        %v2366 = vunpack.c.0.s8 %v2365
        %v2367 = vlaneseq
        %v2368 = vshrl.u32 %v2367, 7
        %v2369 = vsub.s32 %v2366, %v2368
        %v2370 = vrot.slane %v2363, %v2369
        %v2372 = vmul.f32 %v2354, %v2370
        %2373 = vst [vmem:[%s11 + $0x1] sm:$0x1] %v2372
      $region68: #{opnn_forward.2} parent=63 // pred_fallthru
        _
      %v2374 = vld [vmem:[#allocation2] sm:$0x3]
      %v2375 = vld [vmem:[%s388] sm:$0xf]
      %v2376 = vld [vmem:[%s394] sm:$0xf]
      %v2377 = vld [vmem:[%s394 + $0x4] sm:$0xf]
      %v2378 = vld [vmem:[%s394 + $0x8] sm:$0xf]
      %v2379 = vld [vmem:[%s394 + $0xc] sm:$0xf]
      %v2380 = vld [vmem:[%s394 + $0x10] sm:$0xf]
      %v2381 = vld [vmem:[%s394 + $0x14] sm:$0xf]
      %v2382 = vld [vmem:[%s394 + $0x18] sm:$0xf]
      %v2383 = vld [vmem:[%s394 + $0x1c] sm:$0xf]
      %v2384 = vld [vmem:[%s394 + $0x20] sm:$0xf]
      %v2385 = vld [vmem:[%s394 + $0x24] sm:$0xf]
      %v2386 = vld [vmem:[%s394 + $0x28] sm:$0xf]
      %v2387 = vld [vmem:[%s394 + $0x2c] sm:$0xf]
      %v2388 = vld [vmem:[%s394 + $0x30] sm:$0xf]
      %v2389 = vld [vmem:[%s394 + $0x34] sm:$0xf]
      %v2390 = vld [vmem:[%s394 + $0x38] sm:$0xf]
      %v2391 = vld [vmem:[%s394 + $0x3c] sm:$0xf]
      %v2392 = vld [vmem:[%s394 + $0x40] sm:$0xf]
      %v2393 = vld [vmem:[%s394 + $0x44] sm:$0xf]
      %v2394 = vld [vmem:[%s394 + $0x48] sm:$0xf]
      %v2395 = vld [vmem:[%s394 + $0x4c] sm:$0xf]
      %v2396 = vld [vmem:[%s394 + $0x50] sm:$0xf]
      %v2397 = vld [vmem:[%s394 + $0x54] sm:$0xf]
      %v2398 = vld [vmem:[%s394 + $0x58] sm:$0xf]
      %v2399 = vld [vmem:[%s394 + $0x5c] sm:$0xf]
      %v2400 = vld [vmem:[%s394 + $0x60] sm:$0xf]
      %v2401 = vld [vmem:[%s394 + $0x64] sm:$0xf]
      %v2402 = vld [vmem:[%s394 + $0x68] sm:$0xf]
      %v2403 = vld [vmem:[%s394 + $0x6c] sm:$0xf]
      %v2404 = vld [vmem:[%s394 + $0x70] sm:$0xf]
      %v2405 = vld [vmem:[%s394 + $0x74] sm:$0xf]
      %v2406 = vld [vmem:[%s394 + $0x78] sm:$0xf]
      %v2407 = vld [vmem:[%s394 + $0x7c] sm:$0xf]
      %v2408 = vunpack.c.l.bf16 %v2376
      %v2409 = vunpack.c.l.bf16 %v2377
      %v2410 = vunpack.c.l.bf16 %v2378
      %v2411 = vunpack.c.l.bf16 %v2379
      %v2412 = vunpack.c.l.bf16 %v2380
      %v2413 = vunpack.c.l.bf16 %v2381
      %v2414 = vunpack.c.l.bf16 %v2382
      %v2415 = vunpack.c.l.bf16 %v2383
      %v2416 = vunpack.c.l.bf16 %v2384
      %v2417 = vunpack.c.l.bf16 %v2385
      %v2418 = vunpack.c.l.bf16 %v2386
      %v2419 = vunpack.c.l.bf16 %v2387
      %v2420 = vunpack.c.l.bf16 %v2388
      %v2421 = vunpack.c.l.bf16 %v2389
      %v2422 = vunpack.c.l.bf16 %v2390
      %v2423 = vunpack.c.l.bf16 %v2391
      %v2424 = vunpack.c.l.bf16 %v2392
      %v2425 = vunpack.c.l.bf16 %v2393
      %v2426 = vunpack.c.l.bf16 %v2394
      %v2427 = vunpack.c.l.bf16 %v2395
      %v2428 = vunpack.c.l.bf16 %v2396
      %v2429 = vunpack.c.l.bf16 %v2397
      %v2430 = vunpack.c.l.bf16 %v2398
      %v2431 = vunpack.c.l.bf16 %v2399
      %v2432 = vunpack.c.l.bf16 %v2400
      %v2433 = vunpack.c.l.bf16 %v2401
      %v2434 = vunpack.c.l.bf16 %v2402
      %v2435 = vunpack.c.l.bf16 %v2403
      %v2436 = vunpack.c.l.bf16 %v2404
      %v2437 = vunpack.c.l.bf16 %v2405
      %v2438 = vunpack.c.l.bf16 %v2406
      %v2439 = vunpack.c.l.bf16 %v2407
      %v2442 = vunpack.c.l.s4 1983009808
      %v2443 = vunpack.c.0.s8 %v2442
      %v2444 = vlaneseq
      %v2445 = vshrl.u32 %v2444, 7
      %v2446 = vsub.s32 %v2443, %v2445
      %v2447 = vrot.slane %v2375, %v2446
      %v2448 = vcombine.high %v2447, %v2447
      %2451 = vmatprep.subr.mxu0 0.0
      %2452 = vmatpush1.msra.mxu0 %v2423
      %2453 = vmatprep.subr.mxu0 0.0
      %2454 = vmatpush1.msra.mxu0 %v2422
      %2455 = vmatprep.subr.mxu0 0.0
      %2456 = vmatpush1.msra.mxu0 %v2421
      %2457 = vmatprep.subr.mxu0 0.0
      %2458 = vmatpush1.msra.mxu0 %v2420
      %2459 = vmatprep.subr.mxu0 0.0
      %2460 = vmatpush1.msra.mxu0 %v2419
      %2461 = vmatprep.subr.mxu0 0.0
      %2462 = vmatpush1.msra.mxu0 %v2418
      %2463 = vmatprep.subr.mxu0 0.0
      %2464 = vmatpush1.msra.mxu0 %v2417
      %2465 = vmatprep.subr.mxu0 0.0
      %2466 = vmatpush1.msra.mxu0 %v2416
      %2467 = vmatprep.subr.mxu0 0.0
      %2468 = vmatpush1.msra.mxu0 %v2415
      %2469 = vmatprep.subr.mxu0 0.0
      %2470 = vmatpush1.msra.mxu0 %v2414
      %2471 = vmatprep.subr.mxu0 0.0
      %2472 = vmatpush1.msra.mxu0 %v2413
      %2473 = vmatprep.subr.mxu0 0.0
      %2474 = vmatpush1.msra.mxu0 %v2412
      %2475 = vmatprep.subr.mxu0 0.0
      %2476 = vmatpush1.msra.mxu0 %v2411
      %2477 = vmatprep.subr.mxu0 0.0
      %2478 = vmatpush1.msra.mxu0 %v2410
      %2479 = vmatprep.subr.mxu0 0.0
      %2480 = vmatpush1.msra.mxu0 %v2409
      %2481 = vmatprep.subr.mxu0 0.0
      %2482 = vmatpush1.msra.mxu0 %v2408
      %2483 = vmatprep.subr.mxu0 0.0
      %2484 = vmatpush2.msra.mxu0 %v2439
      %2485 = vmatprep.subr.mxu0 0.0
      %2486 = vmatpush2.msra.mxu0 %v2438
      %2487 = vmatprep.subr.mxu0 0.0
      %2488 = vmatpush2.msra.mxu0 %v2437
      %2489 = vmatprep.subr.mxu0 0.0
      %2490 = vmatpush2.msra.mxu0 %v2436
      %2491 = vmatprep.subr.mxu0 0.0
      %2492 = vmatpush2.msra.mxu0 %v2435
      %2493 = vmatprep.subr.mxu0 0.0
      %2494 = vmatpush2.msra.mxu0 %v2434
      %2495 = vmatprep.subr.mxu0 0.0
      %2496 = vmatpush2.msra.mxu0 %v2433
      %2497 = vmatprep.subr.mxu0 0.0
      %2498 = vmatpush2.msra.mxu0 %v2432
      %2499 = vmatprep.subr.mxu0 0.0
      %2500 = vmatpush2.msra.mxu0 %v2431
      %2501 = vmatprep.subr.mxu0 0.0
      %2502 = vmatpush2.msra.mxu0 %v2430
      %2503 = vmatprep.subr.mxu0 0.0
      %2504 = vmatpush2.msra.mxu0 %v2429
      %2505 = vmatprep.subr.mxu0 0.0
      %2506 = vmatpush2.msra.mxu0 %v2428
      %2507 = vmatprep.subr.mxu0 0.0
      %2508 = vmatpush2.msra.mxu0 %v2427
      %2509 = vmatprep.subr.mxu0 0.0
      %2510 = vmatpush2.msra.mxu0 %v2426
      %2511 = vmatprep.subr.mxu0 0.0
      %2512 = vmatpush2.msra.mxu0 %v2425
      %2513 = vmatprep.subr.mxu0 0.0
      %2514 = vmatpush2.msra.mxu0 %v2424
      %2515 = vmatprep.mubr.f32.mxu0 %v2448
      %2516 = vmatmul.mubr.f32.gmra.mxu0 %v2447
      %v2517 = vpop.f32.mrf.mxu0
      %v2518 = vadd.f32 0.0, %v2517
      %v2519 = vpop.f32.mrf.mxu0
      %2520 = vdwg.mxu0
      %v2521 = vadd.f32 %v2374, %v2518
      %2522 = vst [vmem:[#allocation2] sm:$0x3] %v2521
      %p2523 = scmp.eq.s32.totalorder %s22, 1
      // Predicated region
      $region69: #{opnn_forward.2} parent=63 // pred_check
        %p2524 = pneg %p2523
      $region70: #{opnn_forward.2} parent=63 // pred_check_branch
        %2526 = sbr.rel (%p2524) target = $region72
      $region71: #{opnn_forward.2} parent=63 // pred_region
        %v2527 = vld [vmem:[#allocation2] sm:$0x3]
        %v2528 = vld [vmem:[%s10] sm:$0x1]
        %v2530 = vlaneseq
        %v2531 = vshrl.u32 %v2530, 7
        %v2532 = vsub.s32 0, %v2531
        %v2533 = vrot.slane %v2528, %v2532
        %v2535 = vadd.f32 %v2527, %v2533
        %2536 = vst [vmem:[%s11 + $0x2] sm:$0x3] %v2535
      $region72: #{opnn_forward.2} parent=63 // pred_fallthru
        _
      // Predicated region
      $region73: #{opnn_forward.2} parent=63 // pred_check
        %p2537 = pneg %p276
      $region74: #{opnn_forward.2} parent=63 // pred_check_branch
        %2539 = sbr.rel (%p2537) target = $region76
      $region75: #{opnn_forward.2} parent=63 // pred_region
        _
      $region76: #{opnn_forward.2} parent=63 // pred_fallthru
        _
      // Predicated region
      $region77: #{opnn_forward.2} parent=63 // pred_check
        %p2540 = pneg %p276
      $region78: #{opnn_forward.2} parent=63 // pred_check_branch
        %2542 = sbr.rel (%p2540) target = $region80
      $region79: #{opnn_forward.2} parent=63 // pred_region
        _
      $region80: #{opnn_forward.2} parent=63 // pred_fallthru
        _
    $region64: #{opnn_forward.2} parent=5 // pred_fallthru
      _
    %p2543 = scmp.le.s32.totalorder 2, %s17
    // Predicated region
    $region81: #{opnn_forward.2} parent=5 // pred_check
      %p2544 = pneg %p2543
    $region82: #{opnn_forward.2} parent=5 // pred_check_branch
      %2546 = sbr.rel (%p2544) target = $region84
    $region83: #{opnn_forward.2} parent=5 // pred_region
      %s2547 = ssub.s32 %s17, 2
    $region84: #{opnn_forward.2} parent=5 // pred_fallthru
      _
  $region6: #{opnn_forward.2} parent=0 // loop_footer
    %s21 = sadd.s32 1, %s17
  $region7: #{opnn_forward.2} parent=0 // loop_footer_branch
    %16 = sbr.rel target = $region3
  $region8: #{opnn_forward.2} parent=0 // loop_exit
    _

</llo_original>
